<compile_context>
chip_gen: v5e
topology: v5e:2x2
jax: 0.10.0
libtpu: 0.0.40
codegen_flags: <defaults>
</compile_context>

<pallas_src>
import functools
import math

import jax
import jax.numpy as jnp
from jax.experimental import pallas as pl
from jax.experimental.pallas import tpu as pltpu


def _layer_norm(x, w, b, eps=1e-5):
    # Keep element-wise math in f32 (v5e VPU/EUP have no bf16).
    mu = jnp.mean(x, axis=-1, keepdims=True)
    var = jnp.mean(jnp.square(x - mu), axis=-1, keepdims=True)
    return (x - mu) * jax.lax.rsqrt(var + eps) * w + b


def semantic_aligner_kernel(num_heads,
                            text_ref, vis_ref,
                            vec_c_ref, vec_w_ref,
                            w_cw_ref, w_kv_ref, w_o_ref, w_wc_ref,
                            out_ref,
                            attn_s):
    Bb, T, C = text_ref.shape
    _, N, _ = vis_ref.shape
    W = w_o_ref.shape[-1]
    H = num_heads
    Dh = W // H
    bf16 = jnp.bfloat16

    # ---- unpack packed per-channel parameter vectors (2 DMAs instead of 15) ----
    mp_ln1_w, mp_ln1_b = vec_c_ref[0], vec_c_ref[1]
    tp_ln_w, tp_ln_b = vec_c_ref[2], vec_c_ref[3]
    op_lin_b, gamma = vec_c_ref[4], vec_c_ref[5]

    mp_lin_b = vec_w_ref[0]
    mp_ln2_w, mp_ln2_b = vec_w_ref[1], vec_w_ref[2]
    fq_b = vec_w_ref[3]                       # fused (text_proj -> Wq -> *scale) bias
    bk, bv, bo = vec_w_ref[4], vec_w_ref[5], vec_w_ref[6]
    op_ln_w, op_ln_b = vec_w_ref[7], vec_w_ref[8]

    # ---- flatten the batch block: batch-independent matmuls on big slabs ----
    text = text_ref[...].reshape(Bb * T, C)             # (Bb*T, C) f32
    vis = vis_ref[...].reshape(Bb * N, C)               # (Bb*N, C) f32

    # memory_proj: LN(C) -> Linear(C->W) -> LN(W)
    mem = _layer_norm(vis, mp_ln1_w, mp_ln1_b)
    mem = jnp.dot(mem.astype(bf16), w_cw_ref[0],
                  preferred_element_type=jnp.float32) + mp_lin_b
    mem = _layer_norm(mem, mp_ln2_w, mp_ln2_b)          # (Bb*N, W) f32
    mem_b = mem.astype(bf16)

    # text_proj Linear + q-projection + 1/sqrt(Dh) scale fused into ONE matmul
    # (weights folded in the wrapper, math-equivalent).
    xq = _layer_norm(text, tp_ln_w, tp_ln_b)
    q = jnp.dot(xq.astype(bf16), w_cw_ref[1],
                preferred_element_type=jnp.float32) + fq_b           # (Bb*T, W)

    # K and V in a single double-width matmul; split at a 128-lane boundary.
    kv = jnp.dot(mem_b, w_kv_ref[...],
                 preferred_element_type=jnp.float32)                 # (Bb*N, 2W)
    k = kv[:, :W] + bk
    v = kv[:, W:] + bv

    # Split the batch back out (major-dim reshape only, no lane movement).
    q3 = q.astype(bf16).reshape(Bb, T, W)
    k3 = k.astype(bf16).reshape(Bb, N, W)
    v3 = v.astype(bf16).reshape(Bb, N, W)

    # Per-head cross-attention, batched over the Bb batch block with 3-D
    # einsums (single leading batch dim). No explicit k.T, no concatenate:
    # head outputs land in a VMEM scratch at their lane offset.
    # TODO(synk): fold the head loop into one (Bb*H)-batched dot_general once
    # the lane-splitting reshape/transpose it needs is reliably lowered.
    for h in range(H):
        sl = slice(h * Dh, (h + 1) * Dh)
        qh = q3[:, :, sl]                               # (Bb, T, Dh) bf16 (pre-scaled)
        kh = k3[:, :, sl]                               # (Bb, N, Dh) bf16
        vh = v3[:, :, sl]                               # (Bb, N, Dh) bf16
        s = jnp.einsum('btd,bnd->btn', qh, kh,
                       preferred_element_type=jnp.float32)           # (Bb, T, N) f32
        s = s - jnp.max(s, axis=-1, keepdims=True)
        p = jnp.exp(s)
        p = p * pl.reciprocal(jnp.sum(p, axis=-1, keepdims=True), approx=True)
        o = jnp.einsum('btn,bnd->btd', p.astype(bf16), vh,
                       preferred_element_type=jnp.float32)           # (Bb, T, Dh) f32
        attn_s[:, :, sl] = o

    attn = attn_s[...].reshape(Bb * T, W)
    attn = jnp.dot(attn.astype(bf16), w_o_ref[...],
                   preferred_element_type=jnp.float32) + bo          # (Bb*T, W)

    # out_proj: LN(W) -> Linear(W->C)
    y = _layer_norm(attn, op_ln_w, op_ln_b)
    diff = jnp.dot(y.astype(bf16), w_wc_ref[...],
                   preferred_element_type=jnp.float32) + op_lin_b    # (Bb*T, C)

    # gated residual, explicit cast to the output dtype
    out = text + gamma * diff
    out_ref[...] = out.reshape(Bb, T, C).astype(out_ref.dtype)


def semantic_aligner(text, visual, params, num_heads, block_b=None):
    (mp_ln1_w, mp_ln1_b, mp_lin_w, mp_lin_b, mp_ln2_w, mp_ln2_b,
     tp_ln_w, tp_ln_b, tp_lin_w, tp_lin_b,
     wq, bq, wk, bk, wv, bv, wo, bo,
     op_ln_w, op_ln_b, op_lin_w, op_lin_b, gamma) = params

    B, T, C = text.shape
    _, N, _ = visual.shape
    W = wq.shape[0]
    assert W % num_heads == 0
    scale = 1.0 / math.sqrt(W // num_heads)

    if block_b is None:
        # Batch several examples per grid step (amortise per-step overhead and
        # fill the MXU M dimension) while keeping >= 2 steps for v7x's 2 TCs.
        block_b = B if B < 2 else B // 2
        while B % block_b:
            block_b -= 1
    assert B % block_b == 0
    grid = (B // block_b,)

    # Fold text_proj Linear -> Wq -> (1/sqrt(Dh)) into one C->W projection.
    # Done once in f32 in the wrapper; math-equivalent to the PyTorch module.
    fq_w = (tp_lin_w @ wq) * scale                                            # (C, W)
    fq_b = (tp_lin_b @ wq + bq) * scale                                       # (1, W)

    # Pack the small per-channel parameter vectors into two slabs.
    vec_c = jnp.concatenate(
        [mp_ln1_w, mp_ln1_b, tp_ln_w, tp_ln_b, op_lin_b, gamma], axis=0)      # (6, C)
    vec_w = jnp.concatenate(
        [mp_lin_b, mp_ln2_w, mp_ln2_b, fq_b, bk, bv, bo,
         op_ln_w, op_ln_b], axis=0)                                           # (9, W)
    # Weight matrices in bf16 (MXU-native, half the DMA bytes); f32 accumulate.
    w_cw = jnp.stack([mp_lin_w, fq_w]).astype(jnp.bfloat16)                   # (2, C, W)
    w_kv = jnp.concatenate([wk, wv], axis=1).astype(jnp.bfloat16)             # (W, 2W)
    w_o = wo.astype(jnp.bfloat16)                                             # (W, W)
    w_wc = op_lin_w.astype(jnp.bfloat16)                                      # (W, C)

    in_specs = [
        pl.BlockSpec((block_b, T, C), lambda b: (b, 0, 0)),
        pl.BlockSpec((block_b, N, C), lambda b: (b, 0, 0)),
        pl.BlockSpec(vec_c.shape, lambda b: (0, 0)),
        pl.BlockSpec(vec_w.shape, lambda b: (0, 0)),
        pl.BlockSpec(w_cw.shape, lambda b: (0, 0, 0)),
        pl.BlockSpec(w_kv.shape, lambda b: (0, 0)),
        pl.BlockSpec(w_o.shape, lambda b: (0, 0)),
        pl.BlockSpec(w_wc.shape, lambda b: (0, 0)),
    ]
    out_spec = pl.BlockSpec((block_b, T, C), lambda b: (b, 0, 0))

    kernel = functools.partial(semantic_aligner_kernel, num_heads)
    return pl.pallas_call(
        kernel,
        out_shape=jax.ShapeDtypeStruct((B, T, C), text.dtype),
        grid=grid,
        in_specs=in_specs,
        out_specs=out_spec,
        scratch_shapes=[pltpu.VMEM((block_b, T, W), jnp.float32)],
        compiler_params=pltpu.CompilerParams(
            dimension_semantics=("parallel",)),
    )(text, visual, vec_c, vec_w, w_cw, w_kv, w_o, w_wc)


def init_params(key, visual_dim, transformer_width):
    C, W = visual_dim, transformer_width
    keys = jax.random.split(key, 7)

    def nrm(k, shape):   # trunc_normal_(std=0.02) approximated deterministically
        return jax.random.normal(k, shape, jnp.float32) * 0.02

    return [
        jnp.ones((1, C), jnp.float32), jnp.zeros((1, C), jnp.float32),   # memory_proj LN1
        nrm(keys[0], (C, W)),          jnp.zeros((1, W), jnp.float32),   # memory_proj Linear
        jnp.ones((1, W), jnp.float32), jnp.zeros((1, W), jnp.float32),   # memory_proj LN2
        jnp.ones((1, C), jnp.float32), jnp.zeros((1, C), jnp.float32),   # text_proj LN
        nrm(keys[1], (C, W)),          jnp.zeros((1, W), jnp.float32),   # text_proj Linear
        nrm(keys[2], (W, W)),          jnp.zeros((1, W), jnp.float32),   # MHA Wq, bq
        nrm(keys[3], (W, W)),          jnp.zeros((1, W), jnp.float32),   # MHA Wk, bk
        nrm(keys[4], (W, W)),          jnp.zeros((1, W), jnp.float32),   # MHA Wv, bv
        nrm(keys[5], (W, W)),          jnp.zeros((1, W), jnp.float32),   # MHA out proj
        jnp.ones((1, W), jnp.float32), jnp.zeros((1, W), jnp.float32),   # out_proj LN
        nrm(keys[6], (W, C)),          jnp.zeros((1, C), jnp.float32),   # out_proj Linear
        jnp.full((1, C), 1e-4, jnp.float32),                             # gamma
    ]


def reference(text, visual, params, num_heads):
    (mp_ln1_w, mp_ln1_b, mp_lin_w, mp_lin_b, mp_ln2_w, mp_ln2_b,
     tp_ln_w, tp_ln_b, tp_lin_w, tp_lin_b,
     wq, bq, wk, bk, wv, bv, wo, bo,
     op_ln_w, op_ln_b, op_lin_w, op_lin_b, gamma) = params

    def ln(x, w, b, eps=1e-5):
        mu = jnp.mean(x, axis=-1, keepdims=True)
        var = jnp.mean(jnp.square(x - mu), axis=-1, keepdims=True)
        return (x - mu) / jnp.sqrt(var + eps) * w[0] + b[0]

    B, T, C = text.shape
    N = visual.shape[1]
    W = wq.shape[0]
    Dh = W // num_heads

    mem = ln(visual, mp_ln1_w, mp_ln1_b) @ mp_lin_w + mp_lin_b[0]
    mem = ln(mem, mp_ln2_w, mp_ln2_b)
    x = ln(text, tp_ln_w, tp_ln_b) @ tp_lin_w + tp_lin_b[0]

    q = (x @ wq + bq[0]).reshape(B, T, num_heads, Dh)
    k = (mem @ wk + bk[0]).reshape(B, N, num_heads, Dh)
    v = (mem @ wv + bv[0]).reshape(B, N, num_heads, Dh)
    s = jnp.einsum('bthd,bnhd->bhtn', q, k) / math.sqrt(Dh)
    p = jax.nn.softmax(s, axis=-1)
    o = jnp.einsum('bhtn,bnhd->bthd', p, v).reshape(B, T, W)
    o = o @ wo + bo[0]
    diff = ln(o, op_ln_w, op_ln_b) @ op_lin_w + op_lin_b[0]
    return text + gamma[0] * diff


if __name__ == "__main__":
    # Small, self-consistent shapes (module defaults scaled down):
    B, T, N = 4, 16, 32          # batch, text tokens, visual tokens
    visual_dim = 256             # C
    transformer_width = 128      # W (lane-dense: multiple of 128)
    num_heads = 8                # head_dim = 16

    key = jax.random.PRNGKey(0)
    k_text, k_vis, k_par = jax.random.split(key, 3)
    text = jax.random.normal(k_text, (B, T, visual_dim), jnp.float32)
    visual = jax.random.normal(k_vis, (B, N, visual_dim), jnp.float32)
    params = init_params(k_par, visual_dim, transformer_width)

    out = semantic_aligner(text, visual, params, num_heads)
    out = jax.block_until_ready(out)

    ref = reference(text, visual, params, num_heads)
    assert out.shape == (B, T, visual_dim)
    # gamma = 1e-4 gates the (bf16-matmul) branch, so the f32 reference is
    # matched far inside these tolerances.
    assert jnp.allclose(out, ref, atol=1e-4, rtol=1e-4), \
        f"max abs err = {jnp.max(jnp.abs(out - ref))}"

    print("KERNEL_OK")
</pallas_src>

<mosaic_0001>
module attributes {stable_mosaic.version = 11 : i64} {
  func.func @semantic_aligner_kernel(%arg0: i32, %arg1: memref<2x16x256xf32, #tpu.memory_space<vmem>>, %arg2: memref<2x32x256xf32, #tpu.memory_space<vmem>>, %arg3: memref<6x256xf32, #tpu.memory_space<vmem>>, %arg4: memref<9x128xf32, #tpu.memory_space<vmem>>, %arg5: memref<2x256x128xbf16, #tpu.memory_space<vmem>>, %arg6: memref<128x256xbf16, #tpu.memory_space<vmem>>, %arg7: memref<128x128xbf16, #tpu.memory_space<vmem>>, %arg8: memref<128x256xbf16, #tpu.memory_space<vmem>>, %arg9: memref<2x16x256xf32, #tpu.memory_space<vmem>>, %arg10: memref<2x16x128xf32, #tpu.memory_space<vmem>>) attributes {dimension_semantics = [#tpu.dimension_semantics<parallel>], iteration_bounds = array<i64: 2>, scalar_prefetch = 0 : i64, scratch_operands = 1 : i64, tpu.core_type = #tpu.core_type<tc>, window_params = [{transform_indices = @transform_0, window_bounds = array<i64: 2, 16, 256>}, {transform_indices = @transform_1, window_bounds = array<i64: 2, 32, 256>}, {pipeline_mode = #tpu.pipeline_mode<synchronous>, transform_indices = @transform_2, window_bounds = array<i64: 6, 256>}, {pipeline_mode = #tpu.pipeline_mode<synchronous>, transform_indices = @transform_3, window_bounds = array<i64: 9, 128>}, {pipeline_mode = #tpu.pipeline_mode<synchronous>, transform_indices = @transform_4, window_bounds = array<i64: 2, 256, 128>}, {pipeline_mode = #tpu.pipeline_mode<synchronous>, transform_indices = @transform_5, window_bounds = array<i64: 128, 256>}, {pipeline_mode = #tpu.pipeline_mode<synchronous>, transform_indices = @transform_6, window_bounds = array<i64: 128, 128>}, {pipeline_mode = #tpu.pipeline_mode<synchronous>, transform_indices = @transform_7, window_bounds = array<i64: 128, 256>}, {transform_indices = @transform_8, window_bounds = array<i64: 2, 16, 256>}]} {
    %c0 = arith.constant 0 : index
    %c0_0 = arith.constant 0 : index
    %0 = vector.load %arg3[%c0, %c0_0] : memref<6x256xf32, #tpu.memory_space<vmem>>, vector<1x256xf32>
    %1 = vector.shape_cast %0 : vector<1x256xf32> to vector<256xf32>
    %c1 = arith.constant 1 : index
    %c0_1 = arith.constant 0 : index
    %2 = vector.load %arg3[%c1, %c0_1] : memref<6x256xf32, #tpu.memory_space<vmem>>, vector<1x256xf32>
    %3 = vector.shape_cast %2 : vector<1x256xf32> to vector<256xf32>
    %c2 = arith.constant 2 : index
    %c0_2 = arith.constant 0 : index
    %4 = vector.load %arg3[%c2, %c0_2] : memref<6x256xf32, #tpu.memory_space<vmem>>, vector<1x256xf32>
    %5 = vector.shape_cast %4 : vector<1x256xf32> to vector<256xf32>
    %c3 = arith.constant 3 : index
    %c0_3 = arith.constant 0 : index
    %6 = vector.load %arg3[%c3, %c0_3] : memref<6x256xf32, #tpu.memory_space<vmem>>, vector<1x256xf32>
    %7 = vector.shape_cast %6 : vector<1x256xf32> to vector<256xf32>
    %c4 = arith.constant 4 : index
    %c0_4 = arith.constant 0 : index
    %8 = vector.load %arg3[%c4, %c0_4] : memref<6x256xf32, #tpu.memory_space<vmem>>, vector<1x256xf32>
    %9 = vector.shape_cast %8 : vector<1x256xf32> to vector<256xf32>
    %c5 = arith.constant 5 : index
    %c0_5 = arith.constant 0 : index
    %10 = vector.load %arg3[%c5, %c0_5] : memref<6x256xf32, #tpu.memory_space<vmem>>, vector<1x256xf32>
    %11 = vector.shape_cast %10 : vector<1x256xf32> to vector<256xf32>
    %c0_6 = arith.constant 0 : index
    %c0_7 = arith.constant 0 : index
    %12 = vector.load %arg4[%c0_6, %c0_7] : memref<9x128xf32, #tpu.memory_space<vmem>>, vector<1x128xf32>
    %13 = vector.shape_cast %12 : vector<1x128xf32> to vector<128xf32>
    %c1_8 = arith.constant 1 : index
    %c0_9 = arith.constant 0 : index
    %14 = vector.load %arg4[%c1_8, %c0_9] : memref<9x128xf32, #tpu.memory_space<vmem>>, vector<1x128xf32>
    %15 = vector.shape_cast %14 : vector<1x128xf32> to vector<128xf32>
    %c2_10 = arith.constant 2 : index
    %c0_11 = arith.constant 0 : index
    %16 = vector.load %arg4[%c2_10, %c0_11] : memref<9x128xf32, #tpu.memory_space<vmem>>, vector<1x128xf32>
    %17 = vector.shape_cast %16 : vector<1x128xf32> to vector<128xf32>
    %c3_12 = arith.constant 3 : index
    %c0_13 = arith.constant 0 : index
    %18 = vector.load %arg4[%c3_12, %c0_13] : memref<9x128xf32, #tpu.memory_space<vmem>>, vector<1x128xf32>
    %19 = vector.shape_cast %18 : vector<1x128xf32> to vector<128xf32>
    %c4_14 = arith.constant 4 : index
    %c0_15 = arith.constant 0 : index
    %20 = vector.load %arg4[%c4_14, %c0_15] : memref<9x128xf32, #tpu.memory_space<vmem>>, vector<1x128xf32>
    %21 = vector.shape_cast %20 : vector<1x128xf32> to vector<128xf32>
    %c5_16 = arith.constant 5 : index
    %c0_17 = arith.constant 0 : index
    %22 = vector.load %arg4[%c5_16, %c0_17] : memref<9x128xf32, #tpu.memory_space<vmem>>, vector<1x128xf32>
    %23 = vector.shape_cast %22 : vector<1x128xf32> to vector<128xf32>
    %c6 = arith.constant 6 : index
    %c0_18 = arith.constant 0 : index
    %24 = vector.load %arg4[%c6, %c0_18] : memref<9x128xf32, #tpu.memory_space<vmem>>, vector<1x128xf32>
    %25 = vector.shape_cast %24 : vector<1x128xf32> to vector<128xf32>
    %c7 = arith.constant 7 : index
    %c0_19 = arith.constant 0 : index
    %26 = vector.load %arg4[%c7, %c0_19] : memref<9x128xf32, #tpu.memory_space<vmem>>, vector<1x128xf32>
    %27 = vector.shape_cast %26 : vector<1x128xf32> to vector<128xf32>
    %c8 = arith.constant 8 : index
    %c0_20 = arith.constant 0 : index
    %28 = vector.load %arg4[%c8, %c0_20] : memref<9x128xf32, #tpu.memory_space<vmem>>, vector<1x128xf32>
    %29 = vector.shape_cast %28 : vector<1x128xf32> to vector<128xf32>
    %c0_21 = arith.constant 0 : index
    %c0_22 = arith.constant 0 : index
    %c0_23 = arith.constant 0 : index
    %30 = vector.load %arg1[%c0_21, %c0_22, %c0_23] : memref<2x16x256xf32, #tpu.memory_space<vmem>>, vector<2x16x256xf32>
    %31 = vector.shape_cast %30 : vector<2x16x256xf32> to vector<32x256xf32>
    %c0_24 = arith.constant 0 : index
    %c0_25 = arith.constant 0 : index
    %c0_26 = arith.constant 0 : index
    %32 = vector.load %arg2[%c0_24, %c0_25, %c0_26] : memref<2x32x256xf32, #tpu.memory_space<vmem>>, vector<2x32x256xf32>
    %33 = vector.shape_cast %32 : vector<2x32x256xf32> to vector<64x256xf32>
    %cst = arith.constant dense<0.000000e+00> : vector<64xf32>
    %34 = vector.multi_reduction <add>, %33, %cst [1] : vector<64x256xf32> to vector<64xf32>
    %35 = vector.shape_cast %34 : vector<64xf32> to vector<64x1xf32>
    %cst_27 = arith.constant 2.560000e+02 : f32
    %36 = vector.broadcast %cst_27 : f32 to vector<64x1xf32>
    %37 = arith.divf %35, %36 : vector<64x1xf32>
    %38 = vector.broadcast %37 : vector<64x1xf32> to vector<64x256xf32>
    %39 = arith.subf %33, %38 : vector<64x256xf32>
    %40 = arith.mulf %39, %39 : vector<64x256xf32>
    %cst_28 = arith.constant dense<0.000000e+00> : vector<64xf32>
    %41 = vector.multi_reduction <add>, %40, %cst_28 [1] : vector<64x256xf32> to vector<64xf32>
    %42 = vector.shape_cast %41 : vector<64xf32> to vector<64x1xf32>
    %cst_29 = arith.constant 2.560000e+02 : f32
    %43 = vector.broadcast %cst_29 : f32 to vector<64x1xf32>
    %44 = arith.divf %42, %43 : vector<64x1xf32>
    %45 = vector.broadcast %37 : vector<64x1xf32> to vector<64x256xf32>
    %46 = arith.subf %33, %45 : vector<64x256xf32>
    %cst_30 = arith.constant 9.99999974E-6 : f32
    %47 = vector.broadcast %cst_30 : f32 to vector<64x1xf32>
    %48 = arith.addf %44, %47 : vector<64x1xf32>
    %49 = math.rsqrt %48 : vector<64x1xf32>
    %50 = vector.broadcast %49 : vector<64x1xf32> to vector<64x256xf32>
    %51 = arith.mulf %46, %50 : vector<64x256xf32>
    %52 = vector.shape_cast %1 : vector<256xf32> to vector<1x256xf32>
    %53 = vector.broadcast %52 : vector<1x256xf32> to vector<64x256xf32>
    %54 = arith.mulf %51, %53 : vector<64x256xf32>
    %55 = vector.shape_cast %3 : vector<256xf32> to vector<1x256xf32>
    %56 = vector.broadcast %55 : vector<1x256xf32> to vector<64x256xf32>
    %57 = arith.addf %54, %56 : vector<64x256xf32>
    %58 = arith.truncf %57 : vector<64x256xf32> to vector<64x256xbf16>
    %c0_31 = arith.constant 0 : index
    %c0_32 = arith.constant 0 : index
    %c0_33 = arith.constant 0 : index
    %59 = vector.load %arg5[%c0_31, %c0_32, %c0_33] : memref<2x256x128xbf16, #tpu.memory_space<vmem>>, vector<1x256x128xbf16>
    %60 = vector.shape_cast %59 : vector<1x256x128xbf16> to vector<256x128xbf16>
    %cst_34 = arith.constant dense<0.000000e+00> : vector<64x128xf32>
    %61 = tpu.matmul %58, %60, %cst_34 {dimension_numbers = #tpu.dot_dimension_numbers<[1], [0], [0], [1], [0, 0, 1, 1], [], []>} : vector<64x256xbf16>, vector<256x128xbf16>, vector<64x128xf32> -> vector<64x128xf32>
    %62 = vector.shape_cast %13 : vector<128xf32> to vector<1x128xf32>
    %63 = vector.broadcast %62 : vector<1x128xf32> to vector<64x128xf32>
    %64 = arith.addf %61, %63 : vector<64x128xf32>
    %cst_35 = arith.constant dense<0.000000e+00> : vector<64xf32>
    %65 = vector.multi_reduction <add>, %64, %cst_35 [1] : vector<64x128xf32> to vector<64xf32>
    %66 = vector.shape_cast %65 : vector<64xf32> to vector<64x1xf32>
    %cst_36 = arith.constant 1.280000e+02 : f32
    %67 = vector.broadcast %cst_36 : f32 to vector<64x1xf32>
    %68 = arith.divf %66, %67 : vector<64x1xf32>
    %69 = vector.broadcast %68 : vector<64x1xf32> to vector<64x128xf32>
    %70 = arith.subf %64, %69 : vector<64x128xf32>
    %71 = arith.mulf %70, %70 : vector<64x128xf32>
    %cst_37 = arith.constant dense<0.000000e+00> : vector<64xf32>
    %72 = vector.multi_reduction <add>, %71, %cst_37 [1] : vector<64x128xf32> to vector<64xf32>
    %73 = vector.shape_cast %72 : vector<64xf32> to vector<64x1xf32>
    %cst_38 = arith.constant 1.280000e+02 : f32
    %74 = vector.broadcast %cst_38 : f32 to vector<64x1xf32>
    %75 = arith.divf %73, %74 : vector<64x1xf32>
    %76 = vector.broadcast %68 : vector<64x1xf32> to vector<64x128xf32>
    %77 = arith.subf %64, %76 : vector<64x128xf32>
    %cst_39 = arith.constant 9.99999974E-6 : f32
    %78 = vector.broadcast %cst_39 : f32 to vector<64x1xf32>
    %79 = arith.addf %75, %78 : vector<64x1xf32>
    %80 = math.rsqrt %79 : vector<64x1xf32>
    %81 = vector.broadcast %80 : vector<64x1xf32> to vector<64x128xf32>
    %82 = arith.mulf %77, %81 : vector<64x128xf32>
    %83 = vector.shape_cast %15 : vector<128xf32> to vector<1x128xf32>
    %84 = vector.broadcast %83 : vector<1x128xf32> to vector<64x128xf32>
    %85 = arith.mulf %82, %84 : vector<64x128xf32>
    %86 = vector.shape_cast %17 : vector<128xf32> to vector<1x128xf32>
    %87 = vector.broadcast %86 : vector<1x128xf32> to vector<64x128xf32>
    %88 = arith.addf %85, %87 : vector<64x128xf32>
    %89 = arith.truncf %88 : vector<64x128xf32> to vector<64x128xbf16>
    %cst_40 = arith.constant dense<0.000000e+00> : vector<32xf32>
    %90 = vector.multi_reduction <add>, %31, %cst_40 [1] : vector<32x256xf32> to vector<32xf32>
    %91 = vector.shape_cast %90 : vector<32xf32> to vector<32x1xf32>
    %cst_41 = arith.constant 2.560000e+02 : f32
    %92 = vector.broadcast %cst_41 : f32 to vector<32x1xf32>
    %93 = arith.divf %91, %92 : vector<32x1xf32>
    %94 = vector.broadcast %93 : vector<32x1xf32> to vector<32x256xf32>
    %95 = arith.subf %31, %94 : vector<32x256xf32>
    %96 = arith.mulf %95, %95 : vector<32x256xf32>
    %cst_42 = arith.constant dense<0.000000e+00> : vector<32xf32>
    %97 = vector.multi_reduction <add>, %96, %cst_42 [1] : vector<32x256xf32> to vector<32xf32>
    %98 = vector.shape_cast %97 : vector<32xf32> to vector<32x1xf32>
    %cst_43 = arith.constant 2.560000e+02 : f32
    %99 = vector.broadcast %cst_43 : f32 to vector<32x1xf32>
    %100 = arith.divf %98, %99 : vector<32x1xf32>
    %101 = vector.broadcast %93 : vector<32x1xf32> to vector<32x256xf32>
    %102 = arith.subf %31, %101 : vector<32x256xf32>
    %cst_44 = arith.constant 9.99999974E-6 : f32
    %103 = vector.broadcast %cst_44 : f32 to vector<32x1xf32>
    %104 = arith.addf %100, %103 : vector<32x1xf32>
    %105 = math.rsqrt %104 : vector<32x1xf32>
    %106 = vector.broadcast %105 : vector<32x1xf32> to vector<32x256xf32>
    %107 = arith.mulf %102, %106 : vector<32x256xf32>
    %108 = vector.shape_cast %5 : vector<256xf32> to vector<1x256xf32>
    %109 = vector.broadcast %108 : vector<1x256xf32> to vector<32x256xf32>
    %110 = arith.mulf %107, %109 : vector<32x256xf32>
    %111 = vector.shape_cast %7 : vector<256xf32> to vector<1x256xf32>
    %112 = vector.broadcast %111 : vector<1x256xf32> to vector<32x256xf32>
    %113 = arith.addf %110, %112 : vector<32x256xf32>
    %114 = arith.truncf %113 : vector<32x256xf32> to vector<32x256xbf16>
    %c1_45 = arith.constant 1 : index
    %c0_46 = arith.constant 0 : index
    %c0_47 = arith.constant 0 : index
    %115 = vector.load %arg5[%c1_45, %c0_46, %c0_47] : memref<2x256x128xbf16, #tpu.memory_space<vmem>>, vector<1x256x128xbf16>
    %116 = vector.shape_cast %115 : vector<1x256x128xbf16> to vector<256x128xbf16>
    %cst_48 = arith.constant dense<0.000000e+00> : vector<32x128xf32>
    %117 = tpu.matmul %114, %116, %cst_48 {dimension_numbers = #tpu.dot_dimension_numbers<[1], [0], [0], [1], [0, 0, 1, 1], [], []>} : vector<32x256xbf16>, vector<256x128xbf16>, vector<32x128xf32> -> vector<32x128xf32>
    %118 = vector.shape_cast %19 : vector<128xf32> to vector<1x128xf32>
    %119 = vector.broadcast %118 : vector<1x128xf32> to vector<32x128xf32>
    %120 = arith.addf %117, %119 : vector<32x128xf32>
    %c0_49 = arith.constant 0 : index
    %c0_50 = arith.constant 0 : index
    %121 = vector.load %arg6[%c0_49, %c0_50] : memref<128x256xbf16, #tpu.memory_space<vmem>>, vector<128x256xbf16>
    %cst_51 = arith.constant dense<0.000000e+00> : vector<64x256xf32>
    %122 = tpu.matmul %89, %121, %cst_51 {dimension_numbers = #tpu.dot_dimension_numbers<[1], [0], [0], [1], [0, 0, 1, 1], [], []>} : vector<64x128xbf16>, vector<128x256xbf16>, vector<64x256xf32> -> vector<64x256xf32>
    %123 = vector.extract_strided_slice %122 {offsets = [0, 0], sizes = [64, 128], strides = [1, 1]} : vector<64x256xf32> to vector<64x128xf32>
    %124 = vector.shape_cast %21 : vector<128xf32> to vector<1x128xf32>
    %125 = vector.broadcast %124 : vector<1x128xf32> to vector<64x128xf32>
    %126 = arith.addf %123, %125 : vector<64x128xf32>
    %127 = vector.extract_strided_slice %122 {offsets = [0, 128], sizes = [64, 128], strides = [1, 1]} : vector<64x256xf32> to vector<64x128xf32>
    %128 = vector.shape_cast %23 : vector<128xf32> to vector<1x128xf32>
    %129 = vector.broadcast %128 : vector<1x128xf32> to vector<64x128xf32>
    %130 = arith.addf %127, %129 : vector<64x128xf32>
    %131 = arith.truncf %120 : vector<32x128xf32> to vector<32x128xbf16>
    %132 = vector.shape_cast %131 : vector<32x128xbf16> to vector<2x16x128xbf16>
    %133 = arith.truncf %126 : vector<64x128xf32> to vector<64x128xbf16>
    %134 = vector.shape_cast %133 : vector<64x128xbf16> to vector<2x32x128xbf16>
    %135 = arith.truncf %130 : vector<64x128xf32> to vector<64x128xbf16>
    %136 = vector.shape_cast %135 : vector<64x128xbf16> to vector<2x32x128xbf16>
    %137 = vector.extract_strided_slice %132 {offsets = [0, 0, 0], sizes = [2, 16, 16], strides = [1, 1, 1]} : vector<2x16x128xbf16> to vector<2x16x16xbf16>
    %138 = vector.extract_strided_slice %134 {offsets = [0, 0, 0], sizes = [2, 32, 16], strides = [1, 1, 1]} : vector<2x32x128xbf16> to vector<2x32x16xbf16>
    %139 = vector.extract_strided_slice %136 {offsets = [0, 0, 0], sizes = [2, 32, 16], strides = [1, 1, 1]} : vector<2x32x128xbf16> to vector<2x32x16xbf16>
    "tpu.trace_start"() <{level = 10 : i32, message = "btd,bnd->btn"}> : () -> ()
    %cst_52 = arith.constant dense<0.000000e+00> : vector<2x16x32xf32>
    %140 = tpu.matmul %137, %138, %cst_52 {dimension_numbers = #tpu.dot_dimension_numbers<[2], [2], [1], [1], [0, 0, 0, 1, 1, 1], [0], [0]>} : vector<2x16x16xbf16>, vector<2x32x16xbf16>, vector<2x16x32xf32> -> vector<2x16x32xf32>
    "tpu.trace_stop"() : () -> ()
    %cst_53 = arith.constant dense<0xFF800000> : vector<2x16xf32>
    %141 = vector.multi_reduction <maximumf>, %140, %cst_53 [2] : vector<2x16x32xf32> to vector<2x16xf32>
    %142 = vector.shape_cast %141 : vector<2x16xf32> to vector<2x16x1xf32>
    %143 = vector.broadcast %142 : vector<2x16x1xf32> to vector<2x16x32xf32>
    %144 = arith.subf %140, %143 : vector<2x16x32xf32>
    %145 = math.exp %144 : vector<2x16x32xf32>
    %cst_54 = arith.constant dense<0.000000e+00> : vector<2x16xf32>
    %146 = vector.multi_reduction <add>, %145, %cst_54 [2] : vector<2x16x32xf32> to vector<2x16xf32>
    %147 = vector.shape_cast %146 : vector<2x16xf32> to vector<2x16x1xf32>
    %148 = tpu.reciprocal %147 {approx = true} : vector<2x16x1xf32> -> vector<2x16x1xf32>
    %149 = vector.broadcast %148 : vector<2x16x1xf32> to vector<2x16x32xf32>
    %150 = arith.mulf %145, %149 : vector<2x16x32xf32>
    %151 = arith.truncf %150 : vector<2x16x32xf32> to vector<2x16x32xbf16>
    "tpu.trace_start"() <{level = 10 : i32, message = "btn,bnd->btd"}> : () -> ()
    %cst_55 = arith.constant dense<0.000000e+00> : vector<2x16x16xf32>
    %152 = tpu.matmul %151, %139, %cst_55 {dimension_numbers = #tpu.dot_dimension_numbers<[2], [1], [1], [2], [0, 0, 0, 1, 1, 2], [0], [0]>} : vector<2x16x32xbf16>, vector<2x32x16xbf16>, vector<2x16x16xf32> -> vector<2x16x16xf32>
    "tpu.trace_stop"() : () -> ()
    %c0_56 = arith.constant 0 : index
    %c0_57 = arith.constant 0 : index
    %c0_58 = arith.constant 0 : index
    %153 = vector.load %arg10[%c0_56, %c0_57, %c0_58] : memref<2x16x128xf32, #tpu.memory_space<vmem>>, vector<2x16x16xf32>
    tpu.vector_store %arg10[%c0_56, %c0_57, %c0_58], %152 {strides = array<i32>} : memref<2x16x128xf32, #tpu.memory_space<vmem>>, vector<2x16x16xf32>,
    %154 = vector.extract_strided_slice %132 {offsets = [0, 0, 16], sizes = [2, 16, 16], strides = [1, 1, 1]} : vector<2x16x128xbf16> to vector<2x16x16xbf16>
    %155 = vector.extract_strided_slice %134 {offsets = [0, 0, 16], sizes = [2, 32, 16], strides = [1, 1, 1]} : vector<2x32x128xbf16> to vector<2x32x16xbf16>
    %156 = vector.extract_strided_slice %136 {offsets = [0, 0, 16], sizes = [2, 32, 16], strides = [1, 1, 1]} : vector<2x32x128xbf16> to vector<2x32x16xbf16>
    "tpu.trace_start"() <{level = 10 : i32, message = "btd,bnd->btn"}> : () -> ()
    %cst_59 = arith.constant dense<0.000000e+00> : vector<2x16x32xf32>
    %157 = tpu.matmul %154, %155, %cst_59 {dimension_numbers = #tpu.dot_dimension_numbers<[2], [2], [1], [1], [0, 0, 0, 1, 1, 1], [0], [0]>} : vector<2x16x16xbf16>, vector<2x32x16xbf16>, vector<2x16x32xf32> -> vector<2x16x32xf32>
    "tpu.trace_stop"() : () -> ()
    %cst_60 = arith.constant dense<0xFF800000> : vector<2x16xf32>
    %158 = vector.multi_reduction <maximumf>, %157, %cst_60 [2] : vector<2x16x32xf32> to vector<2x16xf32>
    %159 = vector.shape_cast %158 : vector<2x16xf32> to vector<2x16x1xf32>
    %160 = vector.broadcast %159 : vector<2x16x1xf32> to vector<2x16x32xf32>
    %161 = arith.subf %157, %160 : vector<2x16x32xf32>
    %162 = math.exp %161 : vector<2x16x32xf32>
    %cst_61 = arith.constant dense<0.000000e+00> : vector<2x16xf32>
    %163 = vector.multi_reduction <add>, %162, %cst_61 [2] : vector<2x16x32xf32> to vector<2x16xf32>
    %164 = vector.shape_cast %163 : vector<2x16xf32> to vector<2x16x1xf32>
    %165 = tpu.reciprocal %164 {approx = true} : vector<2x16x1xf32> -> vector<2x16x1xf32>
    %166 = vector.broadcast %165 : vector<2x16x1xf32> to vector<2x16x32xf32>
    %167 = arith.mulf %162, %166 : vector<2x16x32xf32>
    %168 = arith.truncf %167 : vector<2x16x32xf32> to vector<2x16x32xbf16>
    "tpu.trace_start"() <{level = 10 : i32, message = "btn,bnd->btd"}> : () -> ()
    %cst_62 = arith.constant dense<0.000000e+00> : vector<2x16x16xf32>
    %169 = tpu.matmul %168, %156, %cst_62 {dimension_numbers = #tpu.dot_dimension_numbers<[2], [1], [1], [2], [0, 0, 0, 1, 1, 2], [0], [0]>} : vector<2x16x32xbf16>, vector<2x32x16xbf16>, vector<2x16x16xf32> -> vector<2x16x16xf32>
    "tpu.trace_stop"() : () -> ()
    %c0_63 = arith.constant 0 : index
    %c0_64 = arith.constant 0 : index
    %c16 = arith.constant 16 : index
    %170 = vector.load %arg10[%c0_63, %c0_64, %c16] : memref<2x16x128xf32, #tpu.memory_space<vmem>>, vector<2x16x16xf32>
    tpu.vector_store %arg10[%c0_63, %c0_64, %c16], %169 {strides = array<i32>} : memref<2x16x128xf32, #tpu.memory_space<vmem>>, vector<2x16x16xf32>,
    %171 = vector.extract_strided_slice %132 {offsets = [0, 0, 32], sizes = [2, 16, 16], strides = [1, 1, 1]} : vector<2x16x128xbf16> to vector<2x16x16xbf16>
    %172 = vector.extract_strided_slice %134 {offsets = [0, 0, 32], sizes = [2, 32, 16], strides = [1, 1, 1]} : vector<2x32x128xbf16> to vector<2x32x16xbf16>
    %173 = vector.extract_strided_slice %136 {offsets = [0, 0, 32], sizes = [2, 32, 16], strides = [1, 1, 1]} : vector<2x32x128xbf16> to vector<2x32x16xbf16>
    "tpu.trace_start"() <{level = 10 : i32, message = "btd,bnd->btn"}> : () -> ()
    %cst_65 = arith.constant dense<0.000000e+00> : vector<2x16x32xf32>
    %174 = tpu.matmul %171, %172, %cst_65 {dimension_numbers = #tpu.dot_dimension_numbers<[2], [2], [1], [1], [0, 0, 0, 1, 1, 1], [0], [0]>} : vector<2x16x16xbf16>, vector<2x32x16xbf16>, vector<2x16x32xf32> -> vector<2x16x32xf32>
    "tpu.trace_stop"() : () -> ()
    %cst_66 = arith.constant dense<0xFF800000> : vector<2x16xf32>
    %175 = vector.multi_reduction <maximumf>, %174, %cst_66 [2] : vector<2x16x32xf32> to vector<2x16xf32>
    %176 = vector.shape_cast %175 : vector<2x16xf32> to vector<2x16x1xf32>
    %177 = vector.broadcast %176 : vector<2x16x1xf32> to vector<2x16x32xf32>
    %178 = arith.subf %174, %177 : vector<2x16x32xf32>
    %179 = math.exp %178 : vector<2x16x32xf32>
    %cst_67 = arith.constant dense<0.000000e+00> : vector<2x16xf32>
    %180 = vector.multi_reduction <add>, %179, %cst_67 [2] : vector<2x16x32xf32> to vector<2x16xf32>
    %181 = vector.shape_cast %180 : vector<2x16xf32> to vector<2x16x1xf32>
    %182 = tpu.reciprocal %181 {approx = true} : vector<2x16x1xf32> -> vector<2x16x1xf32>
    %183 = vector.broadcast %182 : vector<2x16x1xf32> to vector<2x16x32xf32>
    %184 = arith.mulf %179, %183 : vector<2x16x32xf32>
    %185 = arith.truncf %184 : vector<2x16x32xf32> to vector<2x16x32xbf16>
    "tpu.trace_start"() <{level = 10 : i32, message = "btn,bnd->btd"}> : () -> ()
    %cst_68 = arith.constant dense<0.000000e+00> : vector<2x16x16xf32>
    %186 = tpu.matmul %185, %173, %cst_68 {dimension_numbers = #tpu.dot_dimension_numbers<[2], [1], [1], [2], [0, 0, 0, 1, 1, 2], [0], [0]>} : vector<2x16x32xbf16>, vector<2x32x16xbf16>, vector<2x16x16xf32> -> vector<2x16x16xf32>
    "tpu.trace_stop"() : () -> ()
    %c0_69 = arith.constant 0 : index
    %c0_70 = arith.constant 0 : index
    %c32 = arith.constant 32 : index
    %187 = vector.load %arg10[%c0_69, %c0_70, %c32] : memref<2x16x128xf32, #tpu.memory_space<vmem>>, vector<2x16x16xf32>
    tpu.vector_store %arg10[%c0_69, %c0_70, %c32], %186 {strides = array<i32>} : memref<2x16x128xf32, #tpu.memory_space<vmem>>, vector<2x16x16xf32>,
    %188 = vector.extract_strided_slice %132 {offsets = [0, 0, 48], sizes = [2, 16, 16], strides = [1, 1, 1]} : vector<2x16x128xbf16> to vector<2x16x16xbf16>
    %189 = vector.extract_strided_slice %134 {offsets = [0, 0, 48], sizes = [2, 32, 16], strides = [1, 1, 1]} : vector<2x32x128xbf16> to vector<2x32x16xbf16>
    %190 = vector.extract_strided_slice %136 {offsets = [0, 0, 48], sizes = [2, 32, 16], strides = [1, 1, 1]} : vector<2x32x128xbf16> to vector<2x32x16xbf16>
    "tpu.trace_start"() <{level = 10 : i32, message = "btd,bnd->btn"}> : () -> ()
    %cst_71 = arith.constant dense<0.000000e+00> : vector<2x16x32xf32>
    %191 = tpu.matmul %188, %189, %cst_71 {dimension_numbers = #tpu.dot_dimension_numbers<[2], [2], [1], [1], [0, 0, 0, 1, 1, 1], [0], [0]>} : vector<2x16x16xbf16>, vector<2x32x16xbf16>, vector<2x16x32xf32> -> vector<2x16x32xf32>
    "tpu.trace_stop"() : () -> ()
    %cst_72 = arith.constant dense<0xFF800000> : vector<2x16xf32>
    %192 = vector.multi_reduction <maximumf>, %191, %cst_72 [2] : vector<2x16x32xf32> to vector<2x16xf32>
    %193 = vector.shape_cast %192 : vector<2x16xf32> to vector<2x16x1xf32>
    %194 = vector.broadcast %193 : vector<2x16x1xf32> to vector<2x16x32xf32>
    %195 = arith.subf %191, %194 : vector<2x16x32xf32>
    %196 = math.exp %195 : vector<2x16x32xf32>
    %cst_73 = arith.constant dense<0.000000e+00> : vector<2x16xf32>
    %197 = vector.multi_reduction <add>, %196, %cst_73 [2] : vector<2x16x32xf32> to vector<2x16xf32>
    %198 = vector.shape_cast %197 : vector<2x16xf32> to vector<2x16x1xf32>
    %199 = tpu.reciprocal %198 {approx = true} : vector<2x16x1xf32> -> vector<2x16x1xf32>
    %200 = vector.broadcast %199 : vector<2x16x1xf32> to vector<2x16x32xf32>
    %201 = arith.mulf %196, %200 : vector<2x16x32xf32>
    %202 = arith.truncf %201 : vector<2x16x32xf32> to vector<2x16x32xbf16>
    "tpu.trace_start"() <{level = 10 : i32, message = "btn,bnd->btd"}> : () -> ()
    %cst_74 = arith.constant dense<0.000000e+00> : vector<2x16x16xf32>
    %203 = tpu.matmul %202, %190, %cst_74 {dimension_numbers = #tpu.dot_dimension_numbers<[2], [1], [1], [2], [0, 0, 0, 1, 1, 2], [0], [0]>} : vector<2x16x32xbf16>, vector<2x32x16xbf16>, vector<2x16x16xf32> -> vector<2x16x16xf32>
    "tpu.trace_stop"() : () -> ()
    %c0_75 = arith.constant 0 : index
    %c0_76 = arith.constant 0 : index
    %c48 = arith.constant 48 : index
    %204 = vector.load %arg10[%c0_75, %c0_76, %c48] : memref<2x16x128xf32, #tpu.memory_space<vmem>>, vector<2x16x16xf32>
    tpu.vector_store %arg10[%c0_75, %c0_76, %c48], %203 {strides = array<i32>} : memref<2x16x128xf32, #tpu.memory_space<vmem>>, vector<2x16x16xf32>,
    %205 = vector.extract_strided_slice %132 {offsets = [0, 0, 64], sizes = [2, 16, 16], strides = [1, 1, 1]} : vector<2x16x128xbf16> to vector<2x16x16xbf16>
    %206 = vector.extract_strided_slice %134 {offsets = [0, 0, 64], sizes = [2, 32, 16], strides = [1, 1, 1]} : vector<2x32x128xbf16> to vector<2x32x16xbf16>
    %207 = vector.extract_strided_slice %136 {offsets = [0, 0, 64], sizes = [2, 32, 16], strides = [1, 1, 1]} : vector<2x32x128xbf16> to vector<2x32x16xbf16>
    "tpu.trace_start"() <{level = 10 : i32, message = "btd,bnd->btn"}> : () -> ()
    %cst_77 = arith.constant dense<0.000000e+00> : vector<2x16x32xf32>
    %208 = tpu.matmul %205, %206, %cst_77 {dimension_numbers = #tpu.dot_dimension_numbers<[2], [2], [1], [1], [0, 0, 0, 1, 1, 1], [0], [0]>} : vector<2x16x16xbf16>, vector<2x32x16xbf16>, vector<2x16x32xf32> -> vector<2x16x32xf32>
    "tpu.trace_stop"() : () -> ()
    %cst_78 = arith.constant dense<0xFF800000> : vector<2x16xf32>
    %209 = vector.multi_reduction <maximumf>, %208, %cst_78 [2] : vector<2x16x32xf32> to vector<2x16xf32>
    %210 = vector.shape_cast %209 : vector<2x16xf32> to vector<2x16x1xf32>
    %211 = vector.broadcast %210 : vector<2x16x1xf32> to vector<2x16x32xf32>
    %212 = arith.subf %208, %211 : vector<2x16x32xf32>
    %213 = math.exp %212 : vector<2x16x32xf32>
    %cst_79 = arith.constant dense<0.000000e+00> : vector<2x16xf32>
    %214 = vector.multi_reduction <add>, %213, %cst_79 [2] : vector<2x16x32xf32> to vector<2x16xf32>
    %215 = vector.shape_cast %214 : vector<2x16xf32> to vector<2x16x1xf32>
    %216 = tpu.reciprocal %215 {approx = true} : vector<2x16x1xf32> -> vector<2x16x1xf32>
    %217 = vector.broadcast %216 : vector<2x16x1xf32> to vector<2x16x32xf32>
    %218 = arith.mulf %213, %217 : vector<2x16x32xf32>
    %219 = arith.truncf %218 : vector<2x16x32xf32> to vector<2x16x32xbf16>
    "tpu.trace_start"() <{level = 10 : i32, message = "btn,bnd->btd"}> : () -> ()
    %cst_80 = arith.constant dense<0.000000e+00> : vector<2x16x16xf32>
    %220 = tpu.matmul %219, %207, %cst_80 {dimension_numbers = #tpu.dot_dimension_numbers<[2], [1], [1], [2], [0, 0, 0, 1, 1, 2], [0], [0]>} : vector<2x16x32xbf16>, vector<2x32x16xbf16>, vector<2x16x16xf32> -> vector<2x16x16xf32>
    "tpu.trace_stop"() : () -> ()
    %c0_81 = arith.constant 0 : index
    %c0_82 = arith.constant 0 : index
    %c64 = arith.constant 64 : index
    %221 = vector.load %arg10[%c0_81, %c0_82, %c64] : memref<2x16x128xf32, #tpu.memory_space<vmem>>, vector<2x16x16xf32>
    tpu.vector_store %arg10[%c0_81, %c0_82, %c64], %220 {strides = array<i32>} : memref<2x16x128xf32, #tpu.memory_space<vmem>>, vector<2x16x16xf32>,
    %222 = vector.extract_strided_slice %132 {offsets = [0, 0, 80], sizes = [2, 16, 16], strides = [1, 1, 1]} : vector<2x16x128xbf16> to vector<2x16x16xbf16>
    %223 = vector.extract_strided_slice %134 {offsets = [0, 0, 80], sizes = [2, 32, 16], strides = [1, 1, 1]} : vector<2x32x128xbf16> to vector<2x32x16xbf16>
    %224 = vector.extract_strided_slice %136 {offsets = [0, 0, 80], sizes = [2, 32, 16], strides = [1, 1, 1]} : vector<2x32x128xbf16> to vector<2x32x16xbf16>
    "tpu.trace_start"() <{level = 10 : i32, message = "btd,bnd->btn"}> : () -> ()
    %cst_83 = arith.constant dense<0.000000e+00> : vector<2x16x32xf32>
    %225 = tpu.matmul %222, %223, %cst_83 {dimension_numbers = #tpu.dot_dimension_numbers<[2], [2], [1], [1], [0, 0, 0, 1, 1, 1], [0], [0]>} : vector<2x16x16xbf16>, vector<2x32x16xbf16>, vector<2x16x32xf32> -> vector<2x16x32xf32>
    "tpu.trace_stop"() : () -> ()
    %cst_84 = arith.constant dense<0xFF800000> : vector<2x16xf32>
    %226 = vector.multi_reduction <maximumf>, %225, %cst_84 [2] : vector<2x16x32xf32> to vector<2x16xf32>
    %227 = vector.shape_cast %226 : vector<2x16xf32> to vector<2x16x1xf32>
    %228 = vector.broadcast %227 : vector<2x16x1xf32> to vector<2x16x32xf32>
    %229 = arith.subf %225, %228 : vector<2x16x32xf32>
    %230 = math.exp %229 : vector<2x16x32xf32>
    %cst_85 = arith.constant dense<0.000000e+00> : vector<2x16xf32>
    %231 = vector.multi_reduction <add>, %230, %cst_85 [2] : vector<2x16x32xf32> to vector<2x16xf32>
    %232 = vector.shape_cast %231 : vector<2x16xf32> to vector<2x16x1xf32>
    %233 = tpu.reciprocal %232 {approx = true} : vector<2x16x1xf32> -> vector<2x16x1xf32>
    %234 = vector.broadcast %233 : vector<2x16x1xf32> to vector<2x16x32xf32>
    %235 = arith.mulf %230, %234 : vector<2x16x32xf32>
    %236 = arith.truncf %235 : vector<2x16x32xf32> to vector<2x16x32xbf16>
    "tpu.trace_start"() <{level = 10 : i32, message = "btn,bnd->btd"}> : () -> ()
    %cst_86 = arith.constant dense<0.000000e+00> : vector<2x16x16xf32>
    %237 = tpu.matmul %236, %224, %cst_86 {dimension_numbers = #tpu.dot_dimension_numbers<[2], [1], [1], [2], [0, 0, 0, 1, 1, 2], [0], [0]>} : vector<2x16x32xbf16>, vector<2x32x16xbf16>, vector<2x16x16xf32> -> vector<2x16x16xf32>
    "tpu.trace_stop"() : () -> ()
    %c0_87 = arith.constant 0 : index
    %c0_88 = arith.constant 0 : index
    %c80 = arith.constant 80 : index
    %238 = vector.load %arg10[%c0_87, %c0_88, %c80] : memref<2x16x128xf32, #tpu.memory_space<vmem>>, vector<2x16x16xf32>
    tpu.vector_store %arg10[%c0_87, %c0_88, %c80], %237 {strides = array<i32>} : memref<2x16x128xf32, #tpu.memory_space<vmem>>, vector<2x16x16xf32>,
    %239 = vector.extract_strided_slice %132 {offsets = [0, 0, 96], sizes = [2, 16, 16], strides = [1, 1, 1]} : vector<2x16x128xbf16> to vector<2x16x16xbf16>
    %240 = vector.extract_strided_slice %134 {offsets = [0, 0, 96], sizes = [2, 32, 16], strides = [1, 1, 1]} : vector<2x32x128xbf16> to vector<2x32x16xbf16>
    %241 = vector.extract_strided_slice %136 {offsets = [0, 0, 96], sizes = [2, 32, 16], strides = [1, 1, 1]} : vector<2x32x128xbf16> to vector<2x32x16xbf16>
    "tpu.trace_start"() <{level = 10 : i32, message = "btd,bnd->btn"}> : () -> ()
    %cst_89 = arith.constant dense<0.000000e+00> : vector<2x16x32xf32>
    %242 = tpu.matmul %239, %240, %cst_89 {dimension_numbers = #tpu.dot_dimension_numbers<[2], [2], [1], [1], [0, 0, 0, 1, 1, 1], [0], [0]>} : vector<2x16x16xbf16>, vector<2x32x16xbf16>, vector<2x16x32xf32> -> vector<2x16x32xf32>
    "tpu.trace_stop"() : () -> ()
    %cst_90 = arith.constant dense<0xFF800000> : vector<2x16xf32>
    %243 = vector.multi_reduction <maximumf>, %242, %cst_90 [2] : vector<2x16x32xf32> to vector<2x16xf32>
    %244 = vector.shape_cast %243 : vector<2x16xf32> to vector<2x16x1xf32>
    %245 = vector.broadcast %244 : vector<2x16x1xf32> to vector<2x16x32xf32>
    %246 = arith.subf %242, %245 : vector<2x16x32xf32>
    %247 = math.exp %246 : vector<2x16x32xf32>
    %cst_91 = arith.constant dense<0.000000e+00> : vector<2x16xf32>
    %248 = vector.multi_reduction <add>, %247, %cst_91 [2] : vector<2x16x32xf32> to vector<2x16xf32>
    %249 = vector.shape_cast %248 : vector<2x16xf32> to vector<2x16x1xf32>
    %250 = tpu.reciprocal %249 {approx = true} : vector<2x16x1xf32> -> vector<2x16x1xf32>
    %251 = vector.broadcast %250 : vector<2x16x1xf32> to vector<2x16x32xf32>
    %252 = arith.mulf %247, %251 : vector<2x16x32xf32>
    %253 = arith.truncf %252 : vector<2x16x32xf32> to vector<2x16x32xbf16>
    "tpu.trace_start"() <{level = 10 : i32, message = "btn,bnd->btd"}> : () -> ()
    %cst_92 = arith.constant dense<0.000000e+00> : vector<2x16x16xf32>
    %254 = tpu.matmul %253, %241, %cst_92 {dimension_numbers = #tpu.dot_dimension_numbers<[2], [1], [1], [2], [0, 0, 0, 1, 1, 2], [0], [0]>} : vector<2x16x32xbf16>, vector<2x32x16xbf16>, vector<2x16x16xf32> -> vector<2x16x16xf32>
    "tpu.trace_stop"() : () -> ()
    %c0_93 = arith.constant 0 : index
    %c0_94 = arith.constant 0 : index
    %c96 = arith.constant 96 : index
    %255 = vector.load %arg10[%c0_93, %c0_94, %c96] : memref<2x16x128xf32, #tpu.memory_space<vmem>>, vector<2x16x16xf32>
    tpu.vector_store %arg10[%c0_93, %c0_94, %c96], %254 {strides = array<i32>} : memref<2x16x128xf32, #tpu.memory_space<vmem>>, vector<2x16x16xf32>,
    %256 = vector.extract_strided_slice %132 {offsets = [0, 0, 112], sizes = [2, 16, 16], strides = [1, 1, 1]} : vector<2x16x128xbf16> to vector<2x16x16xbf16>
    %257 = vector.extract_strided_slice %134 {offsets = [0, 0, 112], sizes = [2, 32, 16], strides = [1, 1, 1]} : vector<2x32x128xbf16> to vector<2x32x16xbf16>
    %258 = vector.extract_strided_slice %136 {offsets = [0, 0, 112], sizes = [2, 32, 16], strides = [1, 1, 1]} : vector<2x32x128xbf16> to vector<2x32x16xbf16>
    "tpu.trace_start"() <{level = 10 : i32, message = "btd,bnd->btn"}> : () -> ()
    %cst_95 = arith.constant dense<0.000000e+00> : vector<2x16x32xf32>
    %259 = tpu.matmul %256, %257, %cst_95 {dimension_numbers = #tpu.dot_dimension_numbers<[2], [2], [1], [1], [0, 0, 0, 1, 1, 1], [0], [0]>} : vector<2x16x16xbf16>, vector<2x32x16xbf16>, vector<2x16x32xf32> -> vector<2x16x32xf32>
    "tpu.trace_stop"() : () -> ()
    %cst_96 = arith.constant dense<0xFF800000> : vector<2x16xf32>
    %260 = vector.multi_reduction <maximumf>, %259, %cst_96 [2] : vector<2x16x32xf32> to vector<2x16xf32>
    %261 = vector.shape_cast %260 : vector<2x16xf32> to vector<2x16x1xf32>
    %262 = vector.broadcast %261 : vector<2x16x1xf32> to vector<2x16x32xf32>
    %263 = arith.subf %259, %262 : vector<2x16x32xf32>
    %264 = math.exp %263 : vector<2x16x32xf32>
    %cst_97 = arith.constant dense<0.000000e+00> : vector<2x16xf32>
    %265 = vector.multi_reduction <add>, %264, %cst_97 [2] : vector<2x16x32xf32> to vector<2x16xf32>
    %266 = vector.shape_cast %265 : vector<2x16xf32> to vector<2x16x1xf32>
    %267 = tpu.reciprocal %266 {approx = true} : vector<2x16x1xf32> -> vector<2x16x1xf32>
    %268 = vector.broadcast %267 : vector<2x16x1xf32> to vector<2x16x32xf32>
    %269 = arith.mulf %264, %268 : vector<2x16x32xf32>
    %270 = arith.truncf %269 : vector<2x16x32xf32> to vector<2x16x32xbf16>
    "tpu.trace_start"() <{level = 10 : i32, message = "btn,bnd->btd"}> : () -> ()
    %cst_98 = arith.constant dense<0.000000e+00> : vector<2x16x16xf32>
    %271 = tpu.matmul %270, %258, %cst_98 {dimension_numbers = #tpu.dot_dimension_numbers<[2], [1], [1], [2], [0, 0, 0, 1, 1, 2], [0], [0]>} : vector<2x16x32xbf16>, vector<2x32x16xbf16>, vector<2x16x16xf32> -> vector<2x16x16xf32>
    "tpu.trace_stop"() : () -> ()
    %c0_99 = arith.constant 0 : index
    %c0_100 = arith.constant 0 : index
    %c112 = arith.constant 112 : index
    %272 = vector.load %arg10[%c0_99, %c0_100, %c112] : memref<2x16x128xf32, #tpu.memory_space<vmem>>, vector<2x16x16xf32>
    tpu.vector_store %arg10[%c0_99, %c0_100, %c112], %271 {strides = array<i32>} : memref<2x16x128xf32, #tpu.memory_space<vmem>>, vector<2x16x16xf32>,
    %c0_101 = arith.constant 0 : index
    %c0_102 = arith.constant 0 : index
    %c0_103 = arith.constant 0 : index
    %273 = vector.load %arg10[%c0_101, %c0_102, %c0_103] : memref<2x16x128xf32, #tpu.memory_space<vmem>>, vector<2x16x128xf32>
    %274 = vector.shape_cast %273 : vector<2x16x128xf32> to vector<32x128xf32>
    %275 = arith.truncf %274 : vector<32x128xf32> to vector<32x128xbf16>
    %c0_104 = arith.constant 0 : index
    %c0_105 = arith.constant 0 : index
    %276 = vector.load %arg7[%c0_104, %c0_105] : memref<128x128xbf16, #tpu.memory_space<vmem>>, vector<128x128xbf16>
    %cst_106 = arith.constant dense<0.000000e+00> : vector<32x128xf32>
    %277 = tpu.matmul %275, %276, %cst_106 {dimension_numbers = #tpu.dot_dimension_numbers<[1], [0], [0], [1], [0, 0, 1, 1], [], []>} : vector<32x128xbf16>, vector<128x128xbf16>, vector<32x128xf32> -> vector<32x128xf32>
    %278 = vector.shape_cast %25 : vector<128xf32> to vector<1x128xf32>
    %279 = vector.broadcast %278 : vector<1x128xf32> to vector<32x128xf32>
    %280 = arith.addf %277, %279 : vector<32x128xf32>
    %cst_107 = arith.constant dense<0.000000e+00> : vector<32xf32>
    %281 = vector.multi_reduction <add>, %280, %cst_107 [1] : vector<32x128xf32> to vector<32xf32>
    %282 = vector.shape_cast %281 : vector<32xf32> to vector<32x1xf32>
    %cst_108 = arith.constant 1.280000e+02 : f32
    %283 = vector.broadcast %cst_108 : f32 to vector<32x1xf32>
    %284 = arith.divf %282, %283 : vector<32x1xf32>
    %285 = vector.broadcast %284 : vector<32x1xf32> to vector<32x128xf32>
    %286 = arith.subf %280, %285 : vector<32x128xf32>
    %287 = arith.mulf %286, %286 : vector<32x128xf32>
    %cst_109 = arith.constant dense<0.000000e+00> : vector<32xf32>
    %288 = vector.multi_reduction <add>, %287, %cst_109 [1] : vector<32x128xf32> to vector<32xf32>
    %289 = vector.shape_cast %288 : vector<32xf32> to vector<32x1xf32>
    %cst_110 = arith.constant 1.280000e+02 : f32
    %290 = vector.broadcast %cst_110 : f32 to vector<32x1xf32>
    %291 = arith.divf %289, %290 : vector<32x1xf32>
    %292 = vector.broadcast %284 : vector<32x1xf32> to vector<32x128xf32>
    %293 = arith.subf %280, %292 : vector<32x128xf32>
    %cst_111 = arith.constant 9.99999974E-6 : f32
    %294 = vector.broadcast %cst_111 : f32 to vector<32x1xf32>
    %295 = arith.addf %291, %294 : vector<32x1xf32>
    %296 = math.rsqrt %295 : vector<32x1xf32>
    %297 = vector.broadcast %296 : vector<32x1xf32> to vector<32x128xf32>
    %298 = arith.mulf %293, %297 : vector<32x128xf32>
    %299 = vector.shape_cast %27 : vector<128xf32> to vector<1x128xf32>
    %300 = vector.broadcast %299 : vector<1x128xf32> to vector<32x128xf32>
    %301 = arith.mulf %298, %300 : vector<32x128xf32>
    %302 = vector.shape_cast %29 : vector<128xf32> to vector<1x128xf32>
    %303 = vector.broadcast %302 : vector<1x128xf32> to vector<32x128xf32>
    %304 = arith.addf %301, %303 : vector<32x128xf32>
    %305 = arith.truncf %304 : vector<32x128xf32> to vector<32x128xbf16>
    %c0_112 = arith.constant 0 : index
    %c0_113 = arith.constant 0 : index
    %306 = vector.load %arg8[%c0_112, %c0_113] : memref<128x256xbf16, #tpu.memory_space<vmem>>, vector<128x256xbf16>
    %cst_114 = arith.constant dense<0.000000e+00> : vector<32x256xf32>
    %307 = tpu.matmul %305, %306, %cst_114 {dimension_numbers = #tpu.dot_dimension_numbers<[1], [0], [0], [1], [0, 0, 1, 1], [], []>} : vector<32x128xbf16>, vector<128x256xbf16>, vector<32x256xf32> -> vector<32x256xf32>
    %308 = vector.shape_cast %9 : vector<256xf32> to vector<1x256xf32>
    %309 = vector.broadcast %308 : vector<1x256xf32> to vector<32x256xf32>
    %310 = arith.addf %307, %309 : vector<32x256xf32>
    %311 = vector.shape_cast %11 : vector<256xf32> to vector<1x256xf32>
    %312 = vector.broadcast %311 : vector<1x256xf32> to vector<32x256xf32>
    %313 = arith.mulf %312, %310 : vector<32x256xf32>
    %314 = arith.addf %31, %313 : vector<32x256xf32>
    %315 = vector.shape_cast %314 : vector<32x256xf32> to vector<2x16x256xf32>
    %c0_115 = arith.constant 0 : index
    %c0_116 = arith.constant 0 : index
    %c0_117 = arith.constant 0 : index
    %316 = vector.load %arg9[%c0_115, %c0_116, %c0_117] : memref<2x16x256xf32, #tpu.memory_space<vmem>>, vector<2x16x256xf32>
    tpu.vector_store %arg9[%c0_115, %c0_116, %c0_117], %315 {strides = array<i32>} : memref<2x16x256xf32, #tpu.memory_space<vmem>>, vector<2x16x256xf32>,
    return
  }
  func.func @transform_0(%arg0: i32) -> (i32, i32, i32) {
    %c0_i32 = arith.constant 0 : i32
    %c0_i32_0 = arith.constant 0 : i32
    %c0_i32_1 = arith.constant 0 : i32
    return %arg0, %c0_i32, %c0_i32_0 : i32, i32, i32
  }
  func.func @transform_1(%arg0: i32) -> (i32, i32, i32) {
    %c0_i32 = arith.constant 0 : i32
    %c0_i32_0 = arith.constant 0 : i32
    %c0_i32_1 = arith.constant 0 : i32
    return %arg0, %c0_i32, %c0_i32_0 : i32, i32, i32
  }
  func.func @transform_2(%arg0: i32) -> (i32, i32) {
    %c0_i32 = arith.constant 0 : i32
    %c0_i32_0 = arith.constant 0 : i32
    %c0_i32_1 = arith.constant 0 : i32
    return %c0_i32, %c0_i32_0 : i32, i32
  }
  func.func @transform_3(%arg0: i32) -> (i32, i32) {
    %c0_i32 = arith.constant 0 : i32
    %c0_i32_0 = arith.constant 0 : i32
    %c0_i32_1 = arith.constant 0 : i32
    return %c0_i32, %c0_i32_0 : i32, i32
  }
  func.func @transform_4(%arg0: i32) -> (i32, i32, i32) {
    %c0_i32 = arith.constant 0 : i32
    %c0_i32_0 = arith.constant 0 : i32
    %c0_i32_1 = arith.constant 0 : i32
    %c0_i32_2 = arith.constant 0 : i32
    return %c0_i32, %c0_i32_0, %c0_i32_1 : i32, i32, i32
  }
  func.func @transform_5(%arg0: i32) -> (i32, i32) {
    %c0_i32 = arith.constant 0 : i32
    %c0_i32_0 = arith.constant 0 : i32
    %c0_i32_1 = arith.constant 0 : i32
    return %c0_i32, %c0_i32_0 : i32, i32
  }
  func.func @transform_6(%arg0: i32) -> (i32, i32) {
    %c0_i32 = arith.constant 0 : i32
    %c0_i32_0 = arith.constant 0 : i32
    %c0_i32_1 = arith.constant 0 : i32
    return %c0_i32, %c0_i32_0 : i32, i32
  }
  func.func @transform_7(%arg0: i32) -> (i32, i32) {
    %c0_i32 = arith.constant 0 : i32
    %c0_i32_0 = arith.constant 0 : i32
    %c0_i32_1 = arith.constant 0 : i32
    return %c0_i32, %c0_i32_0 : i32, i32
  }
  func.func @transform_8(%arg0: i32) -> (i32, i32, i32) {
    %c0_i32 = arith.constant 0 : i32
    %c0_i32_0 = arith.constant 0 : i32
    %c0_i32_1 = arith.constant 0 : i32
    return %arg0, %c0_i32, %c0_i32_0 : i32, i32, i32
  }
}

</mosaic_0001>

<llo_original>
// kernel: tpu_custom_call.1
$region0: #{tpu_custom_call.1}
  #allocation0 [shape = 'u32[]', space=smem, size = 0x4, offset = 0x4, fixed_abs, tag = 'smem constant byte address 0x4 - core index']
  #allocation1 [shape = 'u32[72,128]{1,0:T(1,128)}', space=vmem, size = 0x9000, scoped, tag = 'internal scratch']
  #allocation2 [shape = 'f32[2,16,128]{2,1,0:T(8,128)}', space=vmem, size = 0x4000, scoped, tag = 'scratch operand']
  %s0 = inlined_call_operand.hbm [shape: f32[4,16,256], index: 0, kind: input, shape index: {}]
  %s1 = inlined_call_operand.hbm [shape: f32[4,32,256], index: 1, kind: input, shape index: {}]
  %s2 = inlined_call_operand.hbm [shape: f32[6,256], index: 2, kind: input, shape index: {}]
  %s3 = inlined_call_operand.hbm [shape: f32[9,128], index: 3, kind: input, shape index: {}]
  %s4 = inlined_call_operand.hbm [shape: bf16[2,256,128], index: 4, kind: input, shape index: {}]
  %s5 = inlined_call_operand.hbm [shape: bf16[128,256], index: 5, kind: input, shape index: {}]
  %s6 = inlined_call_operand.hbm [shape: bf16[128,128], index: 6, kind: input, shape index: {}]
  %s7 = inlined_call_operand.hbm [shape: bf16[128,256], index: 7, kind: input, shape index: {}]
  %s8 = inlined_call_operand.hbm [shape: f32[4,16,256], index: 8, kind: output, shape index: {}]
  %s9 = sld [smem:[#allocation0]]
  $region97: #{tpu_custom_call.1} parent=0
    _
  %s11 = ssub.s32 1, %s9
  %s12 = scalar_select 0, %s11, %s9
  $region1: #{tpu_custom_call.1} parent=0
    #allocation3 [shape = 'u8[65536]{0}', space=vmem, size = 0x10000, scoped, tag = 'input window, operand 0']
    #allocation4 [shape = 's32[2]{0}', space=sflag, size = 0x8, scoped, tag = 'scoped memory for tpu_custom_call.1']
    #allocation5 [shape = 's32[2]{0}', space=sflag, size = 0x8, scoped, tag = 'scoped memory for tpu_custom_call.1']
    #allocation6 [shape = 'u8[131072]{0}', space=vmem, size = 0x20000, scoped, tag = 'input window, operand 1']
    #allocation7 [shape = 's32[2]{0}', space=sflag, size = 0x8, scoped, tag = 'scoped memory for tpu_custom_call.1']
    #allocation8 [shape = 'u8[8192]{0}', space=vmem, size = 0x2000, scoped, tag = 'input window, operand 2, single buffered']
    #allocation9 [shape = 'u8[8192]{0}', space=vmem, size = 0x2000, scoped, tag = 'input window, operand 3, single buffered']
    #allocation10 [shape = 's32[1]{0}', space=sflag, size = 0x4, scoped, tag = 'scoped memory for tpu_custom_call.1']
    #allocation11 [shape = 'u8[131072]{0}', space=vmem, size = 0x20000, scoped, tag = 'input window, operand 4, single buffered']
    #allocation12 [shape = 'u8[65536]{0}', space=vmem, size = 0x10000, scoped, tag = 'input window, operand 5, single buffered']
    #allocation13 [shape = 's32[1]{0}', space=sflag, size = 0x4, scoped, tag = 'scoped memory for tpu_custom_call.1']
    #allocation14 [shape = 'u8[32768]{0}', space=vmem, size = 0x8000, scoped, tag = 'input window, operand 6, single buffered']
    #allocation15 [shape = 'u8[65536]{0}', space=vmem, size = 0x10000, scoped, tag = 'input window, operand 7, single buffered']
    #allocation16 [shape = 's32[1]{0}', space=sflag, size = 0x4, scoped, tag = 'scoped memory for tpu_custom_call.1']
    #allocation17 [shape = 'u8[65536]{0}', space=vmem, size = 0x10000, scoped, tag = 'output window, operand 0']
    %13 = vsyncpa [#allocation4], 0
    %s14 = scalar_lea.sflag [#allocation4], 1
    %15 = vsyncpa %s14, 0
    %16 = vsyncpa [#allocation7], 0
    %s17 = scalar_lea.sflag [#allocation7], 1
    %18 = vsyncpa %s17, 0
    %19 = vsyncpa [#allocation10], 0
    %20 = vsyncpa [#allocation13], 0
    %21 = vsyncpa [#allocation16], 0
    %22 = vsyncpa [#allocation5], 0
    %s23 = scalar_lea.sflag [#allocation5], 1
    %24 = vsyncpa %s23, 0
    loop: start=0, step=1, limit=4
    $region2: #{tpu_custom_call.1} parent=1 // loop_pre_header
      _
    $region3: #{tpu_custom_call.1} parent=1 // loop_header
      %s26 = sphi 0, %s30
      %p27 = scmp.ge.s32.totalorder %s26, 4
      %s36 = sphi 0, %s38
      %s39 = sphi 0, %s36
      %s40 = sphi 0, %s39
      %s56 = sphi 0, %s40
      %s62 = sphi 0, %s64
      %s65 = sphi 0, %s62
      %s66 = sphi 0, %s65
      %s82 = sphi 0, %s66
      %s86 = sphi 0, %s86
      %s88 = sphi 0, %s86
      %s89 = sphi 0, %s88
      %s103 = sphi 0, %s89
      %s107 = sphi 0, %s107
      %s109 = sphi 0, %s107
      %s110 = sphi 0, %s109
      %s124 = sphi 0, %s110
      %s128 = sphi 0, %s128
      %s130 = sphi 0, %s128
      %s131 = sphi 0, %s130
      %s145 = sphi 0, %s131
      %s149 = sphi 0, %s149
      %s151 = sphi 0, %s149
      %s152 = sphi 0, %s151
      %s166 = sphi 0, %s152
      %s170 = sphi 0, %s170
      %s172 = sphi 0, %s170
      %s173 = sphi 0, %s172
      %s187 = sphi 0, %s173
      %s191 = sphi 0, %s191
      %s193 = sphi 0, %s191
      %s194 = sphi 0, %s193
      %s208 = sphi 0, %s194
      %s214 = sphi 0, %s216
      %s217 = sphi 0, %s214
      %s218 = sphi 0, %s217
      %s234 = sphi 0, %s218
    $region4: #{tpu_custom_call.1} parent=1 // loop_header_branch
      %29 = sbr.rel (%p27) target = $region8
    $region5: #{tpu_custom_call.1} parent=1 // loop_body
      %s31 = ssub.s32 %s26, 1
      %s32 = ssub.s32 %s26, 2
      %s33 = sadd.s32 %s26, 1
      %s34 = ssub.s32 %s26, %s33
      %p35 = scmp.eq.s32.totalorder %s34, 0
      %s37 = sadd.s32 %s36, 1
      %s38 = scalar_select %p35, %s36, %s37
      %p41 = pneg %p35
      %p42 = scmp.eq.s32.totalorder %s26, 1
      %p43 = por %p41, %p42
      %p44 = scmp.ne.s32.totalorder %s36, %s39
      %p45 = scmp.eq.s32.totalorder %s26, 0
      %p46 = por %p44, %p45
      %p47 = scmp.ne.s32.totalorder %s36, %s39
      %p48 = scmp.eq.s32.totalorder %s31, 1
      %p49 = por %p47, %p48
      %p50 = scmp.ne.s32.totalorder %s39, %s40
      %p51 = scmp.eq.s32.totalorder %s31, 0
      %p52 = por %p50, %p51
      %p53 = scmp.ne.s32.totalorder %s39, %s40
      %p54 = scmp.eq.s32.totalorder %s32, 1
      %p55 = por %p53, %p54
      %p57 = scmp.ne.s32.totalorder %s40, %s56
      %p58 = scmp.eq.s32.totalorder %s32, 0
      %p59 = por %p57, %p58
      %s60 = ssub.s32 %s26, %s33
      %p61 = scmp.eq.s32.totalorder %s60, 0
      %s63 = sadd.s32 %s62, 1
      %s64 = scalar_select %p61, %s62, %s63
      %p67 = pneg %p61
      %p68 = scmp.eq.s32.totalorder %s26, 1
      %p69 = por %p67, %p68
      %p70 = scmp.ne.s32.totalorder %s62, %s65
      %p71 = scmp.eq.s32.totalorder %s26, 0
      %p72 = por %p70, %p71
      %p73 = scmp.ne.s32.totalorder %s62, %s65
      %p74 = scmp.eq.s32.totalorder %s31, 1
      %p75 = por %p73, %p74
      %p76 = scmp.ne.s32.totalorder %s65, %s66
      %p77 = scmp.eq.s32.totalorder %s31, 0
      %p78 = por %p76, %p77
      %p79 = scmp.ne.s32.totalorder %s65, %s66
      %p80 = scmp.eq.s32.totalorder %s32, 1
      %p81 = por %p79, %p80
      %p83 = scmp.ne.s32.totalorder %s66, %s82
      %p84 = scmp.eq.s32.totalorder %s32, 0
      %p85 = por %p83, %p84
      %s87 = sadd.s32 %s86, 1
      %p90 = scmp.eq.s32.totalorder %s26, 1
      %p91 = scmp.ne.s32.totalorder %s86, %s88
      %p92 = scmp.eq.s32.totalorder %s26, 0
      %p93 = por %p91, %p92
      %p94 = scmp.ne.s32.totalorder %s86, %s88
      %p95 = scmp.eq.s32.totalorder %s31, 1
      %p96 = por %p94, %p95
      %p97 = scmp.ne.s32.totalorder %s88, %s89
      %p98 = scmp.eq.s32.totalorder %s31, 0
      %p99 = por %p97, %p98
      %p100 = scmp.ne.s32.totalorder %s88, %s89
      %p101 = scmp.eq.s32.totalorder %s32, 1
      %p102 = por %p100, %p101
      %p104 = scmp.ne.s32.totalorder %s89, %s103
      %p105 = scmp.eq.s32.totalorder %s32, 0
      %p106 = por %p104, %p105
      %s108 = sadd.s32 %s107, 1
      %p111 = scmp.eq.s32.totalorder %s26, 1
      %p112 = scmp.ne.s32.totalorder %s107, %s109
      %p113 = scmp.eq.s32.totalorder %s26, 0
      %p114 = por %p112, %p113
      %p115 = scmp.ne.s32.totalorder %s107, %s109
      %p116 = scmp.eq.s32.totalorder %s31, 1
      %p117 = por %p115, %p116
      %p118 = scmp.ne.s32.totalorder %s109, %s110
      %p119 = scmp.eq.s32.totalorder %s31, 0
      %p120 = por %p118, %p119
      %p121 = scmp.ne.s32.totalorder %s109, %s110
      %p122 = scmp.eq.s32.totalorder %s32, 1
      %p123 = por %p121, %p122
      %p125 = scmp.ne.s32.totalorder %s110, %s124
      %p126 = scmp.eq.s32.totalorder %s32, 0
      %p127 = por %p125, %p126
      %s129 = sadd.s32 %s128, 1
      %p132 = scmp.eq.s32.totalorder %s26, 1
      %p133 = scmp.ne.s32.totalorder %s128, %s130
      %p134 = scmp.eq.s32.totalorder %s26, 0
      %p135 = por %p133, %p134
      %p136 = scmp.ne.s32.totalorder %s128, %s130
      %p137 = scmp.eq.s32.totalorder %s31, 1
      %p138 = por %p136, %p137
      %p139 = scmp.ne.s32.totalorder %s130, %s131
      %p140 = scmp.eq.s32.totalorder %s31, 0
      %p141 = por %p139, %p140
      %p142 = scmp.ne.s32.totalorder %s130, %s131
      %p143 = scmp.eq.s32.totalorder %s32, 1
      %p144 = por %p142, %p143
      %p146 = scmp.ne.s32.totalorder %s131, %s145
      %p147 = scmp.eq.s32.totalorder %s32, 0
      %p148 = por %p146, %p147
      %s150 = sadd.s32 %s149, 1
      %p153 = scmp.eq.s32.totalorder %s26, 1
      %p154 = scmp.ne.s32.totalorder %s149, %s151
      %p155 = scmp.eq.s32.totalorder %s26, 0
      %p156 = por %p154, %p155
      %p157 = scmp.ne.s32.totalorder %s149, %s151
      %p158 = scmp.eq.s32.totalorder %s31, 1
      %p159 = por %p157, %p158
      %p160 = scmp.ne.s32.totalorder %s151, %s152
      %p161 = scmp.eq.s32.totalorder %s31, 0
      %p162 = por %p160, %p161
      %p163 = scmp.ne.s32.totalorder %s151, %s152
      %p164 = scmp.eq.s32.totalorder %s32, 1
      %p165 = por %p163, %p164
      %p167 = scmp.ne.s32.totalorder %s152, %s166
      %p168 = scmp.eq.s32.totalorder %s32, 0
      %p169 = por %p167, %p168
      %s171 = sadd.s32 %s170, 1
      %p174 = scmp.eq.s32.totalorder %s26, 1
      %p175 = scmp.ne.s32.totalorder %s170, %s172
      %p176 = scmp.eq.s32.totalorder %s26, 0
      %p177 = por %p175, %p176
      %p178 = scmp.ne.s32.totalorder %s170, %s172
      %p179 = scmp.eq.s32.totalorder %s31, 1
      %p180 = por %p178, %p179
      %p181 = scmp.ne.s32.totalorder %s172, %s173
      %p182 = scmp.eq.s32.totalorder %s31, 0
      %p183 = por %p181, %p182
      %p184 = scmp.ne.s32.totalorder %s172, %s173
      %p185 = scmp.eq.s32.totalorder %s32, 1
      %p186 = por %p184, %p185
      %p188 = scmp.ne.s32.totalorder %s173, %s187
      %p189 = scmp.eq.s32.totalorder %s32, 0
      %p190 = por %p188, %p189
      %s192 = sadd.s32 %s191, 1
      %p195 = scmp.eq.s32.totalorder %s26, 1
      %p196 = scmp.ne.s32.totalorder %s191, %s193
      %p197 = scmp.eq.s32.totalorder %s26, 0
      %p198 = por %p196, %p197
      %p199 = scmp.ne.s32.totalorder %s191, %s193
      %p200 = scmp.eq.s32.totalorder %s31, 1
      %p201 = por %p199, %p200
      %p202 = scmp.ne.s32.totalorder %s193, %s194
      %p203 = scmp.eq.s32.totalorder %s31, 0
      %p204 = por %p202, %p203
      %p205 = scmp.ne.s32.totalorder %s193, %s194
      %p206 = scmp.eq.s32.totalorder %s32, 1
      %p207 = por %p205, %p206
      %p209 = scmp.ne.s32.totalorder %s194, %s208
      %p210 = scmp.eq.s32.totalorder %s32, 0
      %p211 = por %p209, %p210
      %s212 = ssub.s32 %s26, %s33
      %p213 = scmp.eq.s32.totalorder %s212, 0
      %s215 = sadd.s32 %s214, 1
      %s216 = scalar_select %p213, %s214, %s215
      %p219 = pneg %p213
      %p220 = scmp.eq.s32.totalorder %s26, 1
      %p221 = por %p219, %p220
      %p222 = scmp.ne.s32.totalorder %s214, %s217
      %p223 = scmp.eq.s32.totalorder %s26, 0
      %p224 = por %p222, %p223
      %p225 = scmp.ne.s32.totalorder %s214, %s217
      %p226 = scmp.eq.s32.totalorder %s31, 1
      %p227 = por %p225, %p226
      %p228 = scmp.ne.s32.totalorder %s217, %s218
      %p229 = scmp.eq.s32.totalorder %s31, 0
      %p230 = por %p228, %p229
      %p231 = scmp.ne.s32.totalorder %s217, %s218
      %p232 = scmp.eq.s32.totalorder %s32, 1
      %p233 = por %p231, %p232
      %p235 = scmp.ne.s32.totalorder %s218, %s234
      %p236 = scmp.eq.s32.totalorder %s32, 0
      %p237 = por %p235, %p236
      %p238 = scmp.le.s32.totalorder 1, %s26
      %p239 = scmp.lt.s32.totalorder %s26, 3
      %p240 = pnand %p238, %p239
      %p241 = pneg %p240
      // Predicated region
      $region9: #{tpu_custom_call.1} parent=5 // pred_check
        _
      $region10: #{tpu_custom_call.1} parent=5 // pred_check_branch
        %243 = sbr.rel (%p240) target = $region12
      $region11: #{tpu_custom_call.1} parent=5 // pred_region
        %s244 = ssub.s32 %s26, 1
        // Predicated region
        $region13: #{tpu_custom_call.1} parent=11 // pred_check
          %p245 = pneg %p99
        $region14: #{tpu_custom_call.1} parent=11 // pred_check_branch
          %247 = sbr.rel (%p245) target = $region16
        $region15: #{tpu_custom_call.1} parent=11 // pred_region
          %249 = vsyncadd [#allocation7], 0
          %s251 = sshll.u32 %s2, 4
          %s252 = int_to_ptr.hbm [resolvable:$true] %s251
          %s253 = sshll.u32 [#allocation8], 4
          %s254 = int_to_ptr.vmem [resolvable:$true] %s253
          %256 = dma.hbm_to_vmem [thread:$0]  %s252, 256, %s254, [#allocation7]
        $region16: #{tpu_custom_call.1} parent=11 // pred_fallthru
          _
        // Predicated region
        $region17: #{tpu_custom_call.1} parent=11 // pred_check
          %p257 = pneg %p120
        $region18: #{tpu_custom_call.1} parent=11 // pred_check_branch
          %259 = sbr.rel (%p257) target = $region20
        $region19: #{tpu_custom_call.1} parent=11 // pred_region
          %261 = vsyncadd [#allocation10], 0
          %s262 = sshll.u32 %s3, 4
          %s263 = int_to_ptr.hbm [resolvable:$true] %s262
          %s264 = sshll.u32 [#allocation9], 4
          %s265 = int_to_ptr.vmem [resolvable:$true] %s264
          %270 = dma.hbm_to_vmem [thread:$0]  %s263, 256, %s265, [#allocation10], 128, 128, 8
        $region20: #{tpu_custom_call.1} parent=11 // pred_fallthru
          _
        // Predicated region
        $region21: #{tpu_custom_call.1} parent=11 // pred_check
          %p271 = pneg %p141
        $region22: #{tpu_custom_call.1} parent=11 // pred_check_branch
          %273 = sbr.rel (%p271) target = $region24
        $region23: #{tpu_custom_call.1} parent=11 // pred_region
          %275 = vsyncadd [#allocation10], 0
          %s276 = sshll.u32 %s4, 4
          %s277 = int_to_ptr.hbm [resolvable:$true] %s276
          %s278 = sshll.u32 [#allocation11], 4
          %s279 = int_to_ptr.vmem [resolvable:$true] %s278
          %284 = dma.hbm_to_vmem [thread:$0]  %s277, 4096, %s279, [#allocation10], 64, 64, 4
        $region24: #{tpu_custom_call.1} parent=11 // pred_fallthru
          _
        // Predicated region
        $region25: #{tpu_custom_call.1} parent=11 // pred_check
          %p285 = pneg %p162
        $region26: #{tpu_custom_call.1} parent=11 // pred_check_branch
          %287 = sbr.rel (%p285) target = $region28
        $region27: #{tpu_custom_call.1} parent=11 // pred_region
          %289 = vsyncadd [#allocation13], 0
          %s290 = sshll.u32 %s5, 4
          %s291 = int_to_ptr.hbm [resolvable:$true] %s290
          %s292 = sshll.u32 [#allocation12], 4
          %s293 = int_to_ptr.vmem [resolvable:$true] %s292
          %298 = dma.hbm_to_vmem [thread:$0]  %s291, 2048, %s293, [#allocation13], 128, 128, 8
        $region28: #{tpu_custom_call.1} parent=11 // pred_fallthru
          _
        // Predicated region
        $region29: #{tpu_custom_call.1} parent=11 // pred_check
          %p299 = pneg %p183
        $region30: #{tpu_custom_call.1} parent=11 // pred_check_branch
          %301 = sbr.rel (%p299) target = $region32
        $region31: #{tpu_custom_call.1} parent=11 // pred_region
          %303 = vsyncadd [#allocation13], 0
          %s304 = sshll.u32 %s6, 4
          %s305 = int_to_ptr.hbm [resolvable:$true] %s304
          %s306 = sshll.u32 [#allocation14], 4
          %s307 = int_to_ptr.vmem [resolvable:$true] %s306
          %312 = dma.hbm_to_vmem [thread:$0]  %s305, 1024, %s307, [#allocation13], 64, 64, 4
        $region32: #{tpu_custom_call.1} parent=11 // pred_fallthru
          _
        // Predicated region
        $region33: #{tpu_custom_call.1} parent=11 // pred_check
          %p313 = pneg %p204
        $region34: #{tpu_custom_call.1} parent=11 // pred_check_branch
          %315 = sbr.rel (%p313) target = $region36
        $region35: #{tpu_custom_call.1} parent=11 // pred_region
          %317 = vsyncadd [#allocation16], 0
          %s318 = sshll.u32 %s7, 4
          %s319 = int_to_ptr.hbm [resolvable:$true] %s318
          %s320 = sshll.u32 [#allocation15], 4
          %s321 = int_to_ptr.vmem [resolvable:$true] %s320
          %326 = dma.hbm_to_vmem [thread:$0]  %s319, 2048, %s321, [#allocation16], 128, 128, 8
        $region36: #{tpu_custom_call.1} parent=11 // pred_fallthru
          _
      $region12: #{tpu_custom_call.1} parent=5 // pred_fallthru
        _
      %p327 = scmp.lt.s32.totalorder %s26, 2
      // Predicated region
      $region37: #{tpu_custom_call.1} parent=5 // pred_check
        %p328 = pneg %p327
      $region38: #{tpu_custom_call.1} parent=5 // pred_check_branch
        %330 = sbr.rel (%p328) target = $region40
      $region39: #{tpu_custom_call.1} parent=5 // pred_region
        // Predicated region
        $region41: #{tpu_custom_call.1} parent=39 // pred_check
          %p331 = pneg %p46
        $region42: #{tpu_custom_call.1} parent=39 // pred_check_branch
          %333 = sbr.rel (%p331) target = $region44
        $region43: #{tpu_custom_call.1} parent=39 // pred_region
          %s334 = sand.u32 %s36, 1
          %s335 = scalar_lea.sflag [#allocation4], %s334
          %s336 = sand.u32 %s36, 1
          %s337 = smul.addr %s336, 64
          %s338 = scalar_lea.vmem [#allocation3], %s337
          %s339 = smul.u32 2, %s26
          %341 = vsyncadd %s335, 0
          %s342 = smul.addr %s339, 4
          %s343 = smul.addr %s342, 8
          %s344 = scalar_lea.hbm %s0, %s343
          %s345 = sshll.u32 %s344, 4
          %s346 = int_to_ptr.hbm [resolvable:$true] %s345
          %s347 = sshll.u32 %s338, 4
          %s348 = int_to_ptr.vmem [resolvable:$true] %s347
          %353 = dma.hbm_to_vmem [thread:$0]  %s346, 1024, %s348, %s335, 256, 256, 16
        $region44: #{tpu_custom_call.1} parent=39 // pred_fallthru
          _
        // Predicated region
        $region45: #{tpu_custom_call.1} parent=39 // pred_check
          %p354 = pneg %p72
        $region46: #{tpu_custom_call.1} parent=39 // pred_check_branch
          %356 = sbr.rel (%p354) target = $region48
        $region47: #{tpu_custom_call.1} parent=39 // pred_region
          %s357 = sand.u32 %s26, 1
          %s358 = scalar_lea.sflag [#allocation7], %s357
          %s359 = sand.u32 %s62, 1
          %s360 = smul.addr %s359, 128
          %s361 = scalar_lea.vmem [#allocation6], %s360
          %s362 = smul.u32 2, %s26
          %364 = vsyncadd %s358, 0
          %s365 = smul.addr %s362, 8
          %s366 = smul.addr %s365, 8
          %s367 = scalar_lea.hbm %s1, %s366
          %s368 = sshll.u32 %s367, 4
          %s369 = int_to_ptr.hbm [resolvable:$true] %s368
          %s370 = sshll.u32 %s361, 4
          %s371 = int_to_ptr.vmem [resolvable:$true] %s370
          %376 = dma.hbm_to_vmem [thread:$0]  %s369, 2048, %s371, %s358, 256, 256, 16
        $region48: #{tpu_custom_call.1} parent=39 // pred_fallthru
          _
      $region40: #{tpu_custom_call.1} parent=5 // pred_fallthru
        _
      %p377 = scmp.le.s32.totalorder 1, %s26
      %p378 = scmp.lt.s32.totalorder %s26, 3
      %p379 = pnand %p377, %p378
      %p380 = pneg %p379
      // Predicated region
      $region49: #{tpu_custom_call.1} parent=5 // pred_check
        _
      $region50: #{tpu_custom_call.1} parent=5 // pred_check_branch
        %382 = sbr.rel (%p379) target = $region52
      $region51: #{tpu_custom_call.1} parent=5 // pred_region
        %s383 = ssub.s32 %s26, 1
        %s384 = sand.u32 %s39, 1
        %s385 = scalar_lea.sflag [#allocation4], %s384
        %s386 = sand.u32 %s39, 1
        %s387 = smul.addr %s386, 64
        %s388 = scalar_lea.vmem [#allocation3], %s387
        // Predicated region
        $region53: #{tpu_custom_call.1} parent=51 // pred_check
          %p389 = pneg %p52
        $region54: #{tpu_custom_call.1} parent=51 // pred_check_branch
          %391 = sbr.rel (%p389) target = $region56
        $region55: #{tpu_custom_call.1} parent=51 // pred_region
          %393 = dma.done %s385, 1024
        $region56: #{tpu_custom_call.1} parent=51 // pred_fallthru
          _
        %s394 = sand.u32 %s31, 1
        %s395 = scalar_lea.sflag [#allocation7], %s394
        %s396 = sand.u32 %s65, 1
        %s397 = smul.addr %s396, 128
        %s398 = scalar_lea.vmem [#allocation6], %s397
        // Predicated region
        $region57: #{tpu_custom_call.1} parent=51 // pred_check
          %p399 = pneg %p78
        $region58: #{tpu_custom_call.1} parent=51 // pred_check_branch
          %401 = sbr.rel (%p399) target = $region60
        $region59: #{tpu_custom_call.1} parent=51 // pred_region
          %403 = dma.done %s395, 2048
        $region60: #{tpu_custom_call.1} parent=51 // pred_fallthru
          _
        // Predicated region
        $region61: #{tpu_custom_call.1} parent=51 // pred_check
          %p404 = pneg %p99
        $region62: #{tpu_custom_call.1} parent=51 // pred_check_branch
          %406 = sbr.rel (%p404) target = $region64
        $region63: #{tpu_custom_call.1} parent=51 // pred_region
          %408 = dma.done [#allocation7], 256
        $region64: #{tpu_custom_call.1} parent=51 // pred_fallthru
          _
        // Predicated region
        $region65: #{tpu_custom_call.1} parent=51 // pred_check
          %p409 = pneg %p120
        $region66: #{tpu_custom_call.1} parent=51 // pred_check_branch
          %411 = sbr.rel (%p409) target = $region68
        $region67: #{tpu_custom_call.1} parent=51 // pred_region
          %413 = dma.done [#allocation10], 256
        $region68: #{tpu_custom_call.1} parent=51 // pred_fallthru
          _
        // Predicated region
        $region69: #{tpu_custom_call.1} parent=51 // pred_check
          %p414 = pneg %p141
        $region70: #{tpu_custom_call.1} parent=51 // pred_check_branch
          %416 = sbr.rel (%p414) target = $region72
        $region71: #{tpu_custom_call.1} parent=51 // pred_region
          %418 = dma.done [#allocation10], 4096
        $region72: #{tpu_custom_call.1} parent=51 // pred_fallthru
          _
        // Predicated region
        $region73: #{tpu_custom_call.1} parent=51 // pred_check
          %p419 = pneg %p162
        $region74: #{tpu_custom_call.1} parent=51 // pred_check_branch
          %421 = sbr.rel (%p419) target = $region76
        $region75: #{tpu_custom_call.1} parent=51 // pred_region
          %423 = dma.done [#allocation13], 2048
        $region76: #{tpu_custom_call.1} parent=51 // pred_fallthru
          _
        // Predicated region
        $region77: #{tpu_custom_call.1} parent=51 // pred_check
          %p424 = pneg %p183
        $region78: #{tpu_custom_call.1} parent=51 // pred_check_branch
          %426 = sbr.rel (%p424) target = $region80
        $region79: #{tpu_custom_call.1} parent=51 // pred_region
          %428 = dma.done [#allocation13], 1024
        $region80: #{tpu_custom_call.1} parent=51 // pred_fallthru
          _
        // Predicated region
        $region81: #{tpu_custom_call.1} parent=51 // pred_check
          %p429 = pneg %p204
        $region82: #{tpu_custom_call.1} parent=51 // pred_check_branch
          %431 = sbr.rel (%p429) target = $region84
        $region83: #{tpu_custom_call.1} parent=51 // pred_region
          %433 = dma.done [#allocation16], 2048
        $region84: #{tpu_custom_call.1} parent=51 // pred_fallthru
          _
        %s434 = sand.u32 %s39, 1
        %s435 = scalar_lea.sflag [#allocation4], %s434
        %s436 = sand.u32 %s39, 1
        %s437 = smul.addr %s436, 64
        %s438 = scalar_lea.vmem [#allocation3], %s437
        %p439 = pneg %p52
        %p440 = pneg %p49
        %s441 = sand.u32 %s31, 1
        %s442 = scalar_lea.sflag [#allocation7], %s441
        %s443 = sand.u32 %s65, 1
        %s444 = smul.addr %s443, 128
        %s445 = scalar_lea.vmem [#allocation6], %s444
        %p446 = pneg %p78
        %p447 = pneg %p75
        %p448 = pneg %p99
        %p449 = pneg %p96
        %p450 = pneg %p120
        %p451 = pneg %p117
        %p452 = pneg %p141
        %p453 = pneg %p138
        %p454 = pneg %p162
        %p455 = pneg %p159
        %p456 = pneg %p183
        %p457 = pneg %p180
        %p458 = pneg %p204
        %p459 = pneg %p201
        %p460 = pneg %p230
        %p461 = pneg %p227
        %s462 = sand.u32 %s217, 1
        %s463 = scalar_lea.sflag [#allocation5], %s462
        %s464 = sand.u32 %s217, 1
        %s465 = smul.addr %s464, 64
        %s466 = scalar_lea.vmem [#allocation17], %s465
        %s467 = smul.u32 2, %s31
        %s468 = smul.u32 2, %s31
        %s469 = smul.u32 2, %s31
        %v471 = vld [vmem:[#allocation8] ss:$8 sm:$0x3]
        %s472 = scalar_lea.vmem [#allocation8], 1
        %v473 = vld [vmem:[%s472] ss:$8 sm:$0x3]
        %s474 = scalar_lea.vmem [#allocation8], 2
        %v475 = vld [vmem:[%s474] ss:$8 sm:$0x3]
        %s476 = scalar_lea.vmem [#allocation8], 3
        %v477 = vld [vmem:[%s476] ss:$8 sm:$0x3]
        %s478 = scalar_lea.vmem [#allocation8], 4
        %v479 = vld [vmem:[%s478] ss:$8 sm:$0x3]
        %s480 = scalar_lea.vmem [#allocation8], 5
        %v481 = vld [vmem:[%s480] ss:$8 sm:$0x3]
        %v482 = vld [vmem:[#allocation9] sm:$0x1]
        %v483 = vld [vmem:[#allocation9 + $0x1] sm:$0x1]
        %v484 = vld [vmem:[#allocation9 + $0x2] sm:$0x1]
        %v485 = vld [vmem:[#allocation9 + $0x3] sm:$0x1]
        %v486 = vld [vmem:[#allocation9 + $0x4] sm:$0x1]
        %v487 = vld [vmem:[#allocation9 + $0x5] sm:$0x1]
        %v488 = vld [vmem:[#allocation9 + $0x6] sm:$0x1]
        %v489 = vld [vmem:[#allocation9 + $0x7] sm:$0x1]
        %v490 = vld [vmem:[#allocation9 + $0x8] sm:$0x1]
        %v491 = vld [vmem:[%s388] sm:$0xff]
        %v492 = vld [vmem:[%s388 + $0x8] sm:$0xff]
        %v493 = vld [vmem:[%s388 + $0x10] sm:$0xff]
        %v494 = vld [vmem:[%s388 + $0x18] sm:$0xff]
        %v495 = vld [vmem:[%s388 + $0x20] sm:$0xff]
        %v496 = vld [vmem:[%s388 + $0x28] sm:$0xff]
        %v497 = vld [vmem:[%s388 + $0x30] sm:$0xff]
        %v498 = vld [vmem:[%s388 + $0x38] sm:$0xff]
        %v499 = vld [vmem:[%s398] sm:$0xff]
        %v500 = vld [vmem:[%s398 + $0x8] sm:$0xff]
        %v501 = vld [vmem:[%s398 + $0x10] sm:$0xff]
        %v502 = vld [vmem:[%s398 + $0x18] sm:$0xff]
        %v503 = vld [vmem:[%s398 + $0x20] sm:$0xff]
        %v504 = vld [vmem:[%s398 + $0x28] sm:$0xff]
        %v505 = vld [vmem:[%s398 + $0x30] sm:$0xff]
        %v506 = vld [vmem:[%s398 + $0x38] sm:$0xff]
        %v507 = vld [vmem:[%s398 + $0x40] sm:$0xff]
        %v508 = vld [vmem:[%s398 + $0x48] sm:$0xff]
        %v509 = vld [vmem:[%s398 + $0x50] sm:$0xff]
        %v510 = vld [vmem:[%s398 + $0x58] sm:$0xff]
        %v511 = vld [vmem:[%s398 + $0x60] sm:$0xff]
        %v512 = vld [vmem:[%s398 + $0x68] sm:$0xff]
        %v513 = vld [vmem:[%s398 + $0x70] sm:$0xff]
        %v514 = vld [vmem:[%s398 + $0x78] sm:$0xff]
        %v515 = vadd.f32 %v499, %v500
        %516 = vadd.xlane.f32.xlu0 %v515
        %v517 = vpop.xlane.xlu0 %516
        %v518 = vadd.f32 %v501, %v502
        %519 = vadd.xlane.f32.xlu0 %v518
        %v520 = vpop.xlane.xlu0 %519
        %v521 = vadd.f32 %v503, %v504
        %522 = vadd.xlane.f32.xlu0 %v521
        %v523 = vpop.xlane.xlu0 %522
        %v524 = vadd.f32 %v505, %v506
        %525 = vadd.xlane.f32.xlu0 %v524
        %v526 = vpop.xlane.xlu0 %525
        %v527 = vadd.f32 %v507, %v508
        %528 = vadd.xlane.f32.xlu0 %v527
        %v529 = vpop.xlane.xlu0 %528
        %v530 = vadd.f32 %v509, %v510
        %531 = vadd.xlane.f32.xlu0 %v530
        %v532 = vpop.xlane.xlu0 %531
        %v533 = vadd.f32 %v511, %v512
        %534 = vadd.xlane.f32.xlu0 %v533
        %v535 = vpop.xlane.xlu0 %534
        %v536 = vadd.f32 %v513, %v514
        %537 = vadd.xlane.f32.xlu0 %v536
        %v538 = vpop.xlane.xlu0 %537
        %v539 = vrcp.pop 256.0
        %v540 = vmul.f32 256.0, %v539
        %v541 = vsub.f32 1.0, %v540
        %v542 = vmul.f32 %v539, %v541
        %v543 = vadd.f32 %v539, %v542
        %vm544 = vweird.f32 %v539
        %v545 = vsel %vm544, %v539, %v543
        %v546 = vmul.f32 %v517, %v545
        %v547 = vmul.f32 %v520, %v545
        %v548 = vmul.f32 %v523, %v545
        %v549 = vmul.f32 %v526, %v545
        %v550 = vmul.f32 %v529, %v545
        %v551 = vmul.f32 %v532, %v545
        %v552 = vmul.f32 %v535, %v545
        %v553 = vmul.f32 %v538, %v545
        %v554 = vsub.f32 %v499, %v546
        %v555 = vsub.f32 %v500, %v546
        %v556 = vsub.f32 %v501, %v547
        %v557 = vsub.f32 %v502, %v547
        %v558 = vsub.f32 %v503, %v548
        %v559 = vsub.f32 %v504, %v548
        %v560 = vsub.f32 %v505, %v549
        %v561 = vsub.f32 %v506, %v549
        %v562 = vsub.f32 %v507, %v550
        %v563 = vsub.f32 %v508, %v550
        %v564 = vsub.f32 %v509, %v551
        %v565 = vsub.f32 %v510, %v551
        %v566 = vsub.f32 %v511, %v552
        %v567 = vsub.f32 %v512, %v552
        %v568 = vsub.f32 %v513, %v553
        %v569 = vsub.f32 %v514, %v553
        %v570 = vmul.f32 %v554, %v554
        %v571 = vmul.f32 %v555, %v555
        %v572 = vmul.f32 %v556, %v556
        %v573 = vmul.f32 %v557, %v557
        %v574 = vmul.f32 %v558, %v558
        %v575 = vmul.f32 %v559, %v559
        %v576 = vmul.f32 %v560, %v560
        %v577 = vmul.f32 %v561, %v561
        %v578 = vmul.f32 %v562, %v562
        %v579 = vmul.f32 %v563, %v563
        %v580 = vmul.f32 %v564, %v564
        %v581 = vmul.f32 %v565, %v565
        %v582 = vmul.f32 %v566, %v566
        %v583 = vmul.f32 %v567, %v567
        %v584 = vmul.f32 %v568, %v568
        %v585 = vmul.f32 %v569, %v569
        %v586 = vadd.f32 %v570, %v571
        %587 = vadd.xlane.f32.xlu0 %v586
        %v588 = vpop.xlane.xlu0 %587
        %v589 = vadd.f32 %v572, %v573
        %590 = vadd.xlane.f32.xlu0 %v589
        %v591 = vpop.xlane.xlu0 %590
        %v592 = vadd.f32 %v574, %v575
        %593 = vadd.xlane.f32.xlu0 %v592
        %v594 = vpop.xlane.xlu0 %593
        %v595 = vadd.f32 %v576, %v577
        %596 = vadd.xlane.f32.xlu0 %v595
        %v597 = vpop.xlane.xlu0 %596
        %v598 = vadd.f32 %v578, %v579
        %599 = vadd.xlane.f32.xlu0 %v598
        %v600 = vpop.xlane.xlu0 %599
        %v601 = vadd.f32 %v580, %v581
        %602 = vadd.xlane.f32.xlu0 %v601
        %v603 = vpop.xlane.xlu0 %602
        %v604 = vadd.f32 %v582, %v583
        %605 = vadd.xlane.f32.xlu0 %v604
        %v606 = vpop.xlane.xlu0 %605
        %v607 = vadd.f32 %v584, %v585
        %608 = vadd.xlane.f32.xlu0 %v607
        %v609 = vpop.xlane.xlu0 %608
        %v610 = vmul.f32 %v588, %v545
        %v611 = vmul.f32 %v591, %v545
        %v612 = vmul.f32 %v594, %v545
        %v613 = vmul.f32 %v597, %v545
        %v614 = vmul.f32 %v600, %v545
        %v615 = vmul.f32 %v603, %v545
        %v616 = vmul.f32 %v606, %v545
        %v617 = vmul.f32 %v609, %v545
        %v618 = vadd.f32 %v610, 1e-05
        %v619 = vadd.f32 %v611, 1e-05
        %v620 = vadd.f32 %v612, 1e-05
        %v621 = vadd.f32 %v613, 1e-05
        %v622 = vadd.f32 %v614, 1e-05
        %v623 = vadd.f32 %v615, 1e-05
        %v624 = vadd.f32 %v616, 1e-05
        %v625 = vadd.f32 %v617, 1e-05
        %v626 = vrsqrt.pop %v618
        %v627 = vmul.f32 %v626, %v618
        %v628 = vmul.f32 %v627, %v626
        %v629 = vmul.f32 0.5, %v628
        %v630 = vsub.f32 1.5, %v629
        %v631 = vmul.f32 %v626, %v630
        %vm632 = vweird.f32 %v618
        %vm633 = vweird.f32 %v626
        %vm634 = vmor %vm632, %vm633
        %v635 = vsel %vm634, %v626, %v631
        %v636 = vrsqrt.pop %v619
        %v637 = vmul.f32 %v636, %v619
        %v638 = vmul.f32 %v637, %v636
        %v639 = vmul.f32 0.5, %v638
        %v640 = vsub.f32 1.5, %v639
        %v641 = vmul.f32 %v636, %v640
        %vm642 = vweird.f32 %v619
        %vm643 = vweird.f32 %v636
        %vm644 = vmor %vm642, %vm643
        %v645 = vsel %vm644, %v636, %v641
        %v646 = vrsqrt.pop %v620
        %v647 = vmul.f32 %v646, %v620
        %v648 = vmul.f32 %v647, %v646
        %v649 = vmul.f32 0.5, %v648
        %v650 = vsub.f32 1.5, %v649
        %v651 = vmul.f32 %v646, %v650
        %vm652 = vweird.f32 %v620
        %vm653 = vweird.f32 %v646
        %vm654 = vmor %vm652, %vm653
        %v655 = vsel %vm654, %v646, %v651
        %v656 = vrsqrt.pop %v621
        %v657 = vmul.f32 %v656, %v621
        %v658 = vmul.f32 %v657, %v656
        %v659 = vmul.f32 0.5, %v658
        %v660 = vsub.f32 1.5, %v659
        %v661 = vmul.f32 %v656, %v660
        %vm662 = vweird.f32 %v621
        %vm663 = vweird.f32 %v656
        %vm664 = vmor %vm662, %vm663
        %v665 = vsel %vm664, %v656, %v661
        %v666 = vrsqrt.pop %v622
        %v667 = vmul.f32 %v666, %v622
        %v668 = vmul.f32 %v667, %v666
        %v669 = vmul.f32 0.5, %v668
        %v670 = vsub.f32 1.5, %v669
        %v671 = vmul.f32 %v666, %v670
        %vm672 = vweird.f32 %v622
        %vm673 = vweird.f32 %v666
        %vm674 = vmor %vm672, %vm673
        %v675 = vsel %vm674, %v666, %v671
        %v676 = vrsqrt.pop %v623
        %v677 = vmul.f32 %v676, %v623
        %v678 = vmul.f32 %v677, %v676
        %v679 = vmul.f32 0.5, %v678
        %v680 = vsub.f32 1.5, %v679
        %v681 = vmul.f32 %v676, %v680
        %vm682 = vweird.f32 %v623
        %vm683 = vweird.f32 %v676
        %vm684 = vmor %vm682, %vm683
        %v685 = vsel %vm684, %v676, %v681
        %v686 = vrsqrt.pop %v624
        %v687 = vmul.f32 %v686, %v624
        %v688 = vmul.f32 %v687, %v686
        %v689 = vmul.f32 0.5, %v688
        %v690 = vsub.f32 1.5, %v689
        %v691 = vmul.f32 %v686, %v690
        %vm692 = vweird.f32 %v624
        %vm693 = vweird.f32 %v686
        %vm694 = vmor %vm692, %vm693
        %v695 = vsel %vm694, %v686, %v691
        %v696 = vrsqrt.pop %v625
        %v697 = vmul.f32 %v696, %v625
        %v698 = vmul.f32 %v697, %v696
        %v699 = vmul.f32 0.5, %v698
        %v700 = vsub.f32 1.5, %v699
        %v701 = vmul.f32 %v696, %v700
        %vm702 = vweird.f32 %v625
        %vm703 = vweird.f32 %v696
        %vm704 = vmor %vm702, %vm703
        %v705 = vsel %vm704, %v696, %v701
        %v706 = vmul.f32 %v554, %v635
        %v707 = vmul.f32 %v555, %v635
        %v708 = vmul.f32 %v556, %v645
        %v709 = vmul.f32 %v557, %v645
        %v710 = vmul.f32 %v558, %v655
        %v711 = vmul.f32 %v559, %v655
        %v712 = vmul.f32 %v560, %v665
        %v713 = vmul.f32 %v561, %v665
        %v714 = vmul.f32 %v562, %v675
        %v715 = vmul.f32 %v563, %v675
        %v716 = vmul.f32 %v564, %v685
        %v717 = vmul.f32 %v565, %v685
        %v718 = vmul.f32 %v566, %v695
        %v719 = vmul.f32 %v567, %v695
        %v720 = vmul.f32 %v568, %v705
        %v721 = vmul.f32 %v569, %v705
        %v723 = vperm.slane %v471, 0
        %v724 = vperm.slane %v471, 1
        %v727 = vmul.f32 %v706, %v723
        %v728 = vmul.f32 %v707, %v724
        %v729 = vmul.f32 %v708, %v723
        %v730 = vmul.f32 %v709, %v724
        %v731 = vmul.f32 %v710, %v723
        %v732 = vmul.f32 %v711, %v724
        %v733 = vmul.f32 %v712, %v723
        %v734 = vmul.f32 %v713, %v724
        %v735 = vmul.f32 %v714, %v723
        %v736 = vmul.f32 %v715, %v724
        %v737 = vmul.f32 %v716, %v723
        %v738 = vmul.f32 %v717, %v724
        %v739 = vmul.f32 %v718, %v723
        %v740 = vmul.f32 %v719, %v724
        %v741 = vmul.f32 %v720, %v723
        %v742 = vmul.f32 %v721, %v724
        %v744 = vperm.slane %v473, 0
        %v745 = vperm.slane %v473, 1
        %v748 = vadd.f32 %v727, %v744
        %v749 = vadd.f32 %v728, %v745
        %v750 = vadd.f32 %v729, %v744
        %v751 = vadd.f32 %v730, %v745
        %v752 = vadd.f32 %v731, %v744
        %v753 = vadd.f32 %v732, %v745
        %v754 = vadd.f32 %v733, %v744
        %v755 = vadd.f32 %v734, %v745
        %v756 = vadd.f32 %v735, %v744
        %v757 = vadd.f32 %v736, %v745
        %v758 = vadd.f32 %v737, %v744
        %v759 = vadd.f32 %v738, %v745
        %v760 = vadd.f32 %v739, %v744
        %v761 = vadd.f32 %v740, %v745
        %v762 = vadd.f32 %v741, %v744
        %v763 = vadd.f32 %v742, %v745
        %v764 = vpack.c.bf16 %v750, %v748
        %v765 = vpack.c.bf16 %v751, %v749
        %v766 = vpack.c.bf16 %v754, %v752
        %v767 = vpack.c.bf16 %v755, %v753
        %v768 = vpack.c.bf16 %v758, %v756
        %v769 = vpack.c.bf16 %v759, %v757
        %v770 = vpack.c.bf16 %v762, %v760
        %v771 = vpack.c.bf16 %v763, %v761
        %v772 = vld [vmem:[#allocation11] sm:$0xf]
        %v773 = vld [vmem:[#allocation11 + $0x4] sm:$0xf]
        %v774 = vld [vmem:[#allocation11 + $0x8] sm:$0xf]
        %v775 = vld [vmem:[#allocation11 + $0xc] sm:$0xf]
        %v776 = vld [vmem:[#allocation11 + $0x10] sm:$0xf]
        %v777 = vld [vmem:[#allocation11 + $0x14] sm:$0xf]
        %v778 = vld [vmem:[#allocation11 + $0x18] sm:$0xf]
        %v779 = vld [vmem:[#allocation11 + $0x1c] sm:$0xf]
        %v780 = vld [vmem:[#allocation11 + $0x20] sm:$0xf]
        %v781 = vld [vmem:[#allocation11 + $0x24] sm:$0xf]
        %v782 = vld [vmem:[#allocation11 + $0x28] sm:$0xf]
        %v783 = vld [vmem:[#allocation11 + $0x2c] sm:$0xf]
        %v784 = vld [vmem:[#allocation11 + $0x30] sm:$0xf]
        %v785 = vld [vmem:[#allocation11 + $0x34] sm:$0xf]
        %v786 = vld [vmem:[#allocation11 + $0x38] sm:$0xf]
        %v787 = vld [vmem:[#allocation11 + $0x3c] sm:$0xf]
        %v788 = vld [vmem:[#allocation11 + $0x40] sm:$0xf]
        %v789 = vld [vmem:[#allocation11 + $0x44] sm:$0xf]
        %v790 = vld [vmem:[#allocation11 + $0x48] sm:$0xf]
        %v791 = vld [vmem:[#allocation11 + $0x4c] sm:$0xf]
        %v792 = vld [vmem:[#allocation11 + $0x50] sm:$0xf]
        %v793 = vld [vmem:[#allocation11 + $0x54] sm:$0xf]
        %v794 = vld [vmem:[#allocation11 + $0x58] sm:$0xf]
        %v795 = vld [vmem:[#allocation11 + $0x5c] sm:$0xf]
        %v796 = vld [vmem:[#allocation11 + $0x60] sm:$0xf]
        %v797 = vld [vmem:[#allocation11 + $0x64] sm:$0xf]
        %v798 = vld [vmem:[#allocation11 + $0x68] sm:$0xf]
        %v799 = vld [vmem:[#allocation11 + $0x6c] sm:$0xf]
        %v800 = vld [vmem:[#allocation11 + $0x70] sm:$0xf]
        %v801 = vld [vmem:[#allocation11 + $0x74] sm:$0xf]
        %v802 = vld [vmem:[#allocation11 + $0x78] sm:$0xf]
        %v803 = vld [vmem:[#allocation11 + $0x7c] sm:$0xf]
        %v804 = vperm.slane %v482, 0
        %v837 = vunpack.c.l.b16 %v772
        %v838 = vunpack.c.l.b16 %v773
        %v839 = vunpack.c.l.b16 %v774
        %v840 = vunpack.c.l.b16 %v775
        %v841 = vunpack.c.l.b16 %v776
        %v842 = vunpack.c.l.b16 %v777
        %v843 = vunpack.c.l.b16 %v778
        %v844 = vunpack.c.l.b16 %v779
        %v845 = vunpack.c.l.b16 %v780
        %v846 = vunpack.c.l.b16 %v781
        %v847 = vunpack.c.l.b16 %v782
        %v848 = vunpack.c.l.b16 %v783
        %v849 = vunpack.c.l.b16 %v784
        %v850 = vunpack.c.l.b16 %v785
        %v851 = vunpack.c.l.b16 %v786
        %v852 = vunpack.c.l.b16 %v787
        %v853 = vunpack.c.l.b16 %v788
        %v854 = vunpack.c.l.b16 %v789
        %v855 = vunpack.c.l.b16 %v790
        %v856 = vunpack.c.l.b16 %v791
        %v857 = vunpack.c.l.b16 %v792
        %v858 = vunpack.c.l.b16 %v793
        %v859 = vunpack.c.l.b16 %v794
        %v860 = vunpack.c.l.b16 %v795
        %v861 = vunpack.c.l.b16 %v796
        %v862 = vunpack.c.l.b16 %v797
        %v863 = vunpack.c.l.b16 %v798
        %v864 = vunpack.c.l.b16 %v799
        %v865 = vunpack.c.l.b16 %v800
        %v866 = vunpack.c.l.b16 %v801
        %v867 = vunpack.c.l.b16 %v802
        %v868 = vunpack.c.l.b16 %v803
        %v869 = vpack.c.b16 %v838, %v837
        %v870 = vpack.c.b16 %v840, %v839
        %v871 = vpack.c.b16 %v842, %v841
        %v872 = vpack.c.b16 %v844, %v843
        %v873 = vpack.c.b16 %v846, %v845
        %v874 = vpack.c.b16 %v848, %v847
        %v875 = vpack.c.b16 %v850, %v849
        %v876 = vpack.c.b16 %v852, %v851
        %v877 = vpack.c.b16 %v854, %v853
        %v878 = vpack.c.b16 %v856, %v855
        %v879 = vpack.c.b16 %v858, %v857
        %v880 = vpack.c.b16 %v860, %v859
        %v881 = vpack.c.b16 %v862, %v861
        %v882 = vpack.c.b16 %v864, %v863
        %v883 = vpack.c.b16 %v866, %v865
        %v884 = vpack.c.b16 %v868, %v867
        %901 = vmatpush.bf16.msra.mxu0 %v876
        %902 = vmatpush.bf16.msra.mxu0 %v875
        %903 = vmatpush.bf16.msra.mxu0 %v874
        %904 = vmatpush.bf16.msra.mxu0 %v873
        %905 = vmatpush.bf16.msra.mxu0 %v872
        %906 = vmatpush.bf16.msra.mxu0 %v871
        %907 = vmatpush.bf16.msra.mxu0 %v870
        %908 = vmatpush.bf16.msra.mxu0 %v869
        %909 = vmatmul.bf16.gmra.mxu0 %v764
        %v910 = vpop.f32.mrf.mxu0
        %v911 = vadd.f32 %v804, %v910
        %v912 = vpop.f32.mrf.mxu0
        %v913 = vadd.f32 %v804, %v912
        %914 = vmatmul.bf16.gmra.mxu0 %v766
        %v915 = vpop.f32.mrf.mxu0
        %v916 = vadd.f32 %v804, %v915
        %v917 = vpop.f32.mrf.mxu0
        %v918 = vadd.f32 %v804, %v917
        %919 = vmatmul.bf16.gmra.mxu0 %v768
        %v920 = vpop.f32.mrf.mxu0
        %v921 = vadd.f32 %v804, %v920
        %v922 = vpop.f32.mrf.mxu0
        %v923 = vadd.f32 %v804, %v922
        %924 = vmatmul.bf16.gmra.mxu0 %v770
        %v925 = vpop.f32.mrf.mxu0
        %v926 = vadd.f32 %v804, %v925
        %v927 = vpop.f32.mrf.mxu0
        %v928 = vadd.f32 %v804, %v927
        %929 = vdwg.mxu0
        %930 = vmatpush.bf16.msra.mxu0 %v884
        %931 = vmatpush.bf16.msra.mxu0 %v883
        %932 = vmatpush.bf16.msra.mxu0 %v882
        %933 = vmatpush.bf16.msra.mxu0 %v881
        %934 = vmatpush.bf16.msra.mxu0 %v880
        %935 = vmatpush.bf16.msra.mxu0 %v879
        %936 = vmatpush.bf16.msra.mxu0 %v878
        %937 = vmatpush.bf16.msra.mxu0 %v877
        %938 = vmatmul.bf16.gmra.mxu0 %v765
        %v939 = vpop.f32.mrf.mxu0
        %v940 = vadd.f32 %v911, %v939
        %v941 = vpop.f32.mrf.mxu0
        %v942 = vadd.f32 %v913, %v941
        %943 = vmatmul.bf16.gmra.mxu0 %v767
        %v944 = vpop.f32.mrf.mxu0
        %v945 = vadd.f32 %v916, %v944
        %v946 = vpop.f32.mrf.mxu0
        %v947 = vadd.f32 %v918, %v946
        %948 = vmatmul.bf16.gmra.mxu0 %v769
        %v949 = vpop.f32.mrf.mxu0
        %v950 = vadd.f32 %v921, %v949
        %v951 = vpop.f32.mrf.mxu0
        %v952 = vadd.f32 %v923, %v951
        %953 = vmatmul.bf16.gmra.mxu0 %v771
        %v954 = vpop.f32.mrf.mxu0
        %v955 = vadd.f32 %v926, %v954
        %v956 = vpop.f32.mrf.mxu0
        %v957 = vadd.f32 %v928, %v956
        %958 = vdwg.mxu0
        %959 = vadd.xlane.f32.xlu0 %v940
        %v960 = vpop.xlane.xlu0 %959
        %961 = vadd.xlane.f32.xlu0 %v942
        %v962 = vpop.xlane.xlu0 %961
        %963 = vadd.xlane.f32.xlu0 %v945
        %v964 = vpop.xlane.xlu0 %963
        %965 = vadd.xlane.f32.xlu0 %v947
        %v966 = vpop.xlane.xlu0 %965
        %967 = vadd.xlane.f32.xlu0 %v950
        %v968 = vpop.xlane.xlu0 %967
        %969 = vadd.xlane.f32.xlu0 %v952
        %v970 = vpop.xlane.xlu0 %969
        %971 = vadd.xlane.f32.xlu0 %v955
        %v972 = vpop.xlane.xlu0 %971
        %973 = vadd.xlane.f32.xlu0 %v957
        %v974 = vpop.xlane.xlu0 %973
        %v975 = vrcp.pop 128.0
        %v976 = vmul.f32 128.0, %v975
        %v977 = vsub.f32 1.0, %v976
        %v978 = vmul.f32 %v975, %v977
        %v979 = vadd.f32 %v975, %v978
        %vm980 = vweird.f32 %v975
        %v981 = vsel %vm980, %v975, %v979
        %v982 = vmul.f32 %v960, %v981
        %v983 = vmul.f32 %v962, %v981
        %v984 = vmul.f32 %v964, %v981
        %v985 = vmul.f32 %v966, %v981
        %v986 = vmul.f32 %v968, %v981
        %v987 = vmul.f32 %v970, %v981
        %v988 = vmul.f32 %v972, %v981
        %v989 = vmul.f32 %v974, %v981
        %v990 = vsub.f32 %v940, %v982
        %v991 = vsub.f32 %v942, %v983
        %v992 = vsub.f32 %v945, %v984
        %v993 = vsub.f32 %v947, %v985
        %v994 = vsub.f32 %v950, %v986
        %v995 = vsub.f32 %v952, %v987
        %v996 = vsub.f32 %v955, %v988
        %v997 = vsub.f32 %v957, %v989
        %v998 = vmul.f32 %v990, %v990
        %v999 = vmul.f32 %v991, %v991
        %v1000 = vmul.f32 %v992, %v992
        %v1001 = vmul.f32 %v993, %v993
        %v1002 = vmul.f32 %v994, %v994
        %v1003 = vmul.f32 %v995, %v995
        %v1004 = vmul.f32 %v996, %v996
        %v1005 = vmul.f32 %v997, %v997
        %1006 = vadd.xlane.f32.xlu0 %v998
        %v1007 = vpop.xlane.xlu0 %1006
        %1008 = vadd.xlane.f32.xlu0 %v999
        %v1009 = vpop.xlane.xlu0 %1008
        %1010 = vadd.xlane.f32.xlu0 %v1000
        %v1011 = vpop.xlane.xlu0 %1010
        %1012 = vadd.xlane.f32.xlu0 %v1001
        %v1013 = vpop.xlane.xlu0 %1012
        %1014 = vadd.xlane.f32.xlu0 %v1002
        %v1015 = vpop.xlane.xlu0 %1014
        %1016 = vadd.xlane.f32.xlu0 %v1003
        %v1017 = vpop.xlane.xlu0 %1016
        %1018 = vadd.xlane.f32.xlu0 %v1004
        %v1019 = vpop.xlane.xlu0 %1018
        %1020 = vadd.xlane.f32.xlu0 %v1005
        %v1021 = vpop.xlane.xlu0 %1020
        %v1022 = vmul.f32 %v1007, %v981
        %v1023 = vmul.f32 %v1009, %v981
        %v1024 = vmul.f32 %v1011, %v981
        %v1025 = vmul.f32 %v1013, %v981
        %v1026 = vmul.f32 %v1015, %v981
        %v1027 = vmul.f32 %v1017, %v981
        %v1028 = vmul.f32 %v1019, %v981
        %v1029 = vmul.f32 %v1021, %v981
        %v1030 = vadd.f32 %v1022, 1e-05
        %v1031 = vadd.f32 %v1023, 1e-05
        %v1032 = vadd.f32 %v1024, 1e-05
        %v1033 = vadd.f32 %v1025, 1e-05
        %v1034 = vadd.f32 %v1026, 1e-05
        %v1035 = vadd.f32 %v1027, 1e-05
        %v1036 = vadd.f32 %v1028, 1e-05
        %v1037 = vadd.f32 %v1029, 1e-05
        %v1038 = vrsqrt.pop %v1030
        %v1039 = vmul.f32 %v1038, %v1030
        %v1040 = vmul.f32 %v1039, %v1038
        %v1041 = vmul.f32 0.5, %v1040
        %v1042 = vsub.f32 1.5, %v1041
        %v1043 = vmul.f32 %v1038, %v1042
        %vm1044 = vweird.f32 %v1030
        %vm1045 = vweird.f32 %v1038
        %vm1046 = vmor %vm1044, %vm1045
        %v1047 = vsel %vm1046, %v1038, %v1043
        %v1048 = vrsqrt.pop %v1031
        %v1049 = vmul.f32 %v1048, %v1031
        %v1050 = vmul.f32 %v1049, %v1048
        %v1051 = vmul.f32 0.5, %v1050
        %v1052 = vsub.f32 1.5, %v1051
        %v1053 = vmul.f32 %v1048, %v1052
        %vm1054 = vweird.f32 %v1031
        %vm1055 = vweird.f32 %v1048
        %vm1056 = vmor %vm1054, %vm1055
        %v1057 = vsel %vm1056, %v1048, %v1053
        %v1058 = vrsqrt.pop %v1032
        %v1059 = vmul.f32 %v1058, %v1032
        %v1060 = vmul.f32 %v1059, %v1058
        %v1061 = vmul.f32 0.5, %v1060
        %v1062 = vsub.f32 1.5, %v1061
        %v1063 = vmul.f32 %v1058, %v1062
        %vm1064 = vweird.f32 %v1032
        %vm1065 = vweird.f32 %v1058
        %vm1066 = vmor %vm1064, %vm1065
        %v1067 = vsel %vm1066, %v1058, %v1063
        %v1068 = vrsqrt.pop %v1033
        %v1069 = vmul.f32 %v1068, %v1033
        %v1070 = vmul.f32 %v1069, %v1068
        %v1071 = vmul.f32 0.5, %v1070
        %v1072 = vsub.f32 1.5, %v1071
        %v1073 = vmul.f32 %v1068, %v1072
        %vm1074 = vweird.f32 %v1033
        %vm1075 = vweird.f32 %v1068
        %vm1076 = vmor %vm1074, %vm1075
        %v1077 = vsel %vm1076, %v1068, %v1073
        %v1078 = vrsqrt.pop %v1034
        %v1079 = vmul.f32 %v1078, %v1034
        %v1080 = vmul.f32 %v1079, %v1078
        %v1081 = vmul.f32 0.5, %v1080
        %v1082 = vsub.f32 1.5, %v1081
        %v1083 = vmul.f32 %v1078, %v1082
        %vm1084 = vweird.f32 %v1034
        %vm1085 = vweird.f32 %v1078
        %vm1086 = vmor %vm1084, %vm1085
        %v1087 = vsel %vm1086, %v1078, %v1083
        %v1088 = vrsqrt.pop %v1035
        %v1089 = vmul.f32 %v1088, %v1035
        %v1090 = vmul.f32 %v1089, %v1088
        %v1091 = vmul.f32 0.5, %v1090
        %v1092 = vsub.f32 1.5, %v1091
        %v1093 = vmul.f32 %v1088, %v1092
        %vm1094 = vweird.f32 %v1035
        %vm1095 = vweird.f32 %v1088
        %vm1096 = vmor %vm1094, %vm1095
        %v1097 = vsel %vm1096, %v1088, %v1093
        %v1098 = vrsqrt.pop %v1036
        %v1099 = vmul.f32 %v1098, %v1036
        %v1100 = vmul.f32 %v1099, %v1098
        %v1101 = vmul.f32 0.5, %v1100
        %v1102 = vsub.f32 1.5, %v1101
        %v1103 = vmul.f32 %v1098, %v1102
        %vm1104 = vweird.f32 %v1036
        %vm1105 = vweird.f32 %v1098
        %vm1106 = vmor %vm1104, %vm1105
        %v1107 = vsel %vm1106, %v1098, %v1103
        %v1108 = vrsqrt.pop %v1037
        %v1109 = vmul.f32 %v1108, %v1037
        %v1110 = vmul.f32 %v1109, %v1108
        %v1111 = vmul.f32 0.5, %v1110
        %v1112 = vsub.f32 1.5, %v1111
        %v1113 = vmul.f32 %v1108, %v1112
        %vm1114 = vweird.f32 %v1037
        %vm1115 = vweird.f32 %v1108
        %vm1116 = vmor %vm1114, %vm1115
        %v1117 = vsel %vm1116, %v1108, %v1113
        %v1118 = vmul.f32 %v990, %v1047
        %v1119 = vmul.f32 %v991, %v1057
        %v1120 = vmul.f32 %v992, %v1067
        %v1121 = vmul.f32 %v993, %v1077
        %v1122 = vmul.f32 %v994, %v1087
        %v1123 = vmul.f32 %v995, %v1097
        %v1124 = vmul.f32 %v996, %v1107
        %v1125 = vmul.f32 %v997, %v1117
        %v1126 = vperm.slane %v483, 0
        %v1127 = vmul.f32 %v1118, %v1126
        %v1128 = vmul.f32 %v1119, %v1126
        %v1129 = vmul.f32 %v1120, %v1126
        %v1130 = vmul.f32 %v1121, %v1126
        %v1131 = vmul.f32 %v1122, %v1126
        %v1132 = vmul.f32 %v1123, %v1126
        %v1133 = vmul.f32 %v1124, %v1126
        %v1134 = vmul.f32 %v1125, %v1126
        %v1135 = vperm.slane %v484, 0
        %v1136 = vadd.f32 %v1127, %v1135
        %v1137 = vadd.f32 %v1128, %v1135
        %v1138 = vadd.f32 %v1129, %v1135
        %v1139 = vadd.f32 %v1130, %v1135
        %v1140 = vadd.f32 %v1131, %v1135
        %v1141 = vadd.f32 %v1132, %v1135
        %v1142 = vadd.f32 %v1133, %v1135
        %v1143 = vadd.f32 %v1134, %v1135
        %v1144 = vpack.c.bf16 %v1137, %v1136
        %v1145 = vpack.c.bf16 %v1139, %v1138
        %v1146 = vpack.c.bf16 %v1141, %v1140
        %v1147 = vpack.c.bf16 %v1143, %v1142
        %v1148 = vadd.f32 %v491, %v492
        %1149 = vadd.xlane.f32.xlu0 %v1148
        %v1150 = vpop.xlane.xlu0 %1149
        %v1151 = vadd.f32 %v493, %v494
        %1152 = vadd.xlane.f32.xlu0 %v1151
        %v1153 = vpop.xlane.xlu0 %1152
        %v1154 = vadd.f32 %v495, %v496
        %1155 = vadd.xlane.f32.xlu0 %v1154
        %v1156 = vpop.xlane.xlu0 %1155
        %v1157 = vadd.f32 %v497, %v498
        %1158 = vadd.xlane.f32.xlu0 %v1157
        %v1159 = vpop.xlane.xlu0 %1158
        %v1160 = vmul.f32 %v1150, %v545
        %v1161 = vmul.f32 %v1153, %v545
        %v1162 = vmul.f32 %v1156, %v545
        %v1163 = vmul.f32 %v1159, %v545
        %v1164 = vsub.f32 %v491, %v1160
        %v1165 = vsub.f32 %v492, %v1160
        %v1166 = vsub.f32 %v493, %v1161
        %v1167 = vsub.f32 %v494, %v1161
        %v1168 = vsub.f32 %v495, %v1162
        %v1169 = vsub.f32 %v496, %v1162
        %v1170 = vsub.f32 %v497, %v1163
        %v1171 = vsub.f32 %v498, %v1163
        %v1172 = vmul.f32 %v1164, %v1164
        %v1173 = vmul.f32 %v1165, %v1165
        %v1174 = vmul.f32 %v1166, %v1166
        %v1175 = vmul.f32 %v1167, %v1167
        %v1176 = vmul.f32 %v1168, %v1168
        %v1177 = vmul.f32 %v1169, %v1169
        %v1178 = vmul.f32 %v1170, %v1170
        %v1179 = vmul.f32 %v1171, %v1171
        %v1180 = vadd.f32 %v1172, %v1173
        %1181 = vadd.xlane.f32.xlu0 %v1180
        %v1182 = vpop.xlane.xlu0 %1181
        %v1183 = vadd.f32 %v1174, %v1175
        %1184 = vadd.xlane.f32.xlu0 %v1183
        %v1185 = vpop.xlane.xlu0 %1184
        %v1186 = vadd.f32 %v1176, %v1177
        %1187 = vadd.xlane.f32.xlu0 %v1186
        %v1188 = vpop.xlane.xlu0 %1187
        %v1189 = vadd.f32 %v1178, %v1179
        %1190 = vadd.xlane.f32.xlu0 %v1189
        %v1191 = vpop.xlane.xlu0 %1190
        %v1192 = vmul.f32 %v1182, %v545
        %v1193 = vmul.f32 %v1185, %v545
        %v1194 = vmul.f32 %v1188, %v545
        %v1195 = vmul.f32 %v1191, %v545
        %v1196 = vadd.f32 %v1192, 1e-05
        %v1197 = vadd.f32 %v1193, 1e-05
        %v1198 = vadd.f32 %v1194, 1e-05
        %v1199 = vadd.f32 %v1195, 1e-05
        %v1200 = vrsqrt.pop %v1196
        %v1201 = vmul.f32 %v1200, %v1196
        %v1202 = vmul.f32 %v1201, %v1200
        %v1203 = vmul.f32 0.5, %v1202
        %v1204 = vsub.f32 1.5, %v1203
        %v1205 = vmul.f32 %v1200, %v1204
        %vm1206 = vweird.f32 %v1196
        %vm1207 = vweird.f32 %v1200
        %vm1208 = vmor %vm1206, %vm1207
        %v1209 = vsel %vm1208, %v1200, %v1205
        %v1210 = vrsqrt.pop %v1197
        %v1211 = vmul.f32 %v1210, %v1197
        %v1212 = vmul.f32 %v1211, %v1210
        %v1213 = vmul.f32 0.5, %v1212
        %v1214 = vsub.f32 1.5, %v1213
        %v1215 = vmul.f32 %v1210, %v1214
        %vm1216 = vweird.f32 %v1197
        %vm1217 = vweird.f32 %v1210
        %vm1218 = vmor %vm1216, %vm1217
        %v1219 = vsel %vm1218, %v1210, %v1215
        %v1220 = vrsqrt.pop %v1198
        %v1221 = vmul.f32 %v1220, %v1198
        %v1222 = vmul.f32 %v1221, %v1220
        %v1223 = vmul.f32 0.5, %v1222
        %v1224 = vsub.f32 1.5, %v1223
        %v1225 = vmul.f32 %v1220, %v1224
        %vm1226 = vweird.f32 %v1198
        %vm1227 = vweird.f32 %v1220
        %vm1228 = vmor %vm1226, %vm1227
        %v1229 = vsel %vm1228, %v1220, %v1225
        %v1230 = vrsqrt.pop %v1199
        %v1231 = vmul.f32 %v1230, %v1199
        %v1232 = vmul.f32 %v1231, %v1230
        %v1233 = vmul.f32 0.5, %v1232
        %v1234 = vsub.f32 1.5, %v1233
        %v1235 = vmul.f32 %v1230, %v1234
        %vm1236 = vweird.f32 %v1199
        %vm1237 = vweird.f32 %v1230
        %vm1238 = vmor %vm1236, %vm1237
        %v1239 = vsel %vm1238, %v1230, %v1235
        %v1240 = vmul.f32 %v1164, %v1209
        %v1241 = vmul.f32 %v1165, %v1209
        %v1242 = vmul.f32 %v1166, %v1219
        %v1243 = vmul.f32 %v1167, %v1219
        %v1244 = vmul.f32 %v1168, %v1229
        %v1245 = vmul.f32 %v1169, %v1229
        %v1246 = vmul.f32 %v1170, %v1239
        %v1247 = vmul.f32 %v1171, %v1239
        %v1249 = vperm.slane %v475, 0
        %v1250 = vperm.slane %v475, 1
        %v1253 = vmul.f32 %v1240, %v1249
        %v1254 = vmul.f32 %v1241, %v1250
        %v1255 = vmul.f32 %v1242, %v1249
        %v1256 = vmul.f32 %v1243, %v1250
        %v1257 = vmul.f32 %v1244, %v1249
        %v1258 = vmul.f32 %v1245, %v1250
        %v1259 = vmul.f32 %v1246, %v1249
        %v1260 = vmul.f32 %v1247, %v1250
        %v1262 = vperm.slane %v477, 0
        %v1263 = vperm.slane %v477, 1
        %v1266 = vadd.f32 %v1253, %v1262
        %v1267 = vadd.f32 %v1254, %v1263
        %v1268 = vadd.f32 %v1255, %v1262
        %v1269 = vadd.f32 %v1256, %v1263
        %v1270 = vadd.f32 %v1257, %v1262
        %v1271 = vadd.f32 %v1258, %v1263
        %v1272 = vadd.f32 %v1259, %v1262
        %v1273 = vadd.f32 %v1260, %v1263
        %v1274 = vpack.c.bf16 %v1268, %v1266
        %v1275 = vpack.c.bf16 %v1269, %v1267
        %v1276 = vpack.c.bf16 %v1272, %v1270
        %v1277 = vpack.c.bf16 %v1273, %v1271
        %s1278 = scalar_lea.vmem [#allocation11], 128
        %v1279 = vld [vmem:[%s1278] sm:$0xf]
        %v1280 = vld [vmem:[%s1278 + $0x4] sm:$0xf]
        %v1281 = vld [vmem:[%s1278 + $0x8] sm:$0xf]
        %v1282 = vld [vmem:[%s1278 + $0xc] sm:$0xf]
        %v1283 = vld [vmem:[%s1278 + $0x10] sm:$0xf]
        %v1284 = vld [vmem:[%s1278 + $0x14] sm:$0xf]
        %v1285 = vld [vmem:[%s1278 + $0x18] sm:$0xf]
        %v1286 = vld [vmem:[%s1278 + $0x1c] sm:$0xf]
        %v1287 = vld [vmem:[%s1278 + $0x20] sm:$0xf]
        %v1288 = vld [vmem:[%s1278 + $0x24] sm:$0xf]
        %v1289 = vld [vmem:[%s1278 + $0x28] sm:$0xf]
        %v1290 = vld [vmem:[%s1278 + $0x2c] sm:$0xf]
        %v1291 = vld [vmem:[%s1278 + $0x30] sm:$0xf]
        %v1292 = vld [vmem:[%s1278 + $0x34] sm:$0xf]
        %v1293 = vld [vmem:[%s1278 + $0x38] sm:$0xf]
        %v1294 = vld [vmem:[%s1278 + $0x3c] sm:$0xf]
        %v1295 = vld [vmem:[%s1278 + $0x40] sm:$0xf]
        %v1296 = vld [vmem:[%s1278 + $0x44] sm:$0xf]
        %v1297 = vld [vmem:[%s1278 + $0x48] sm:$0xf]
        %v1298 = vld [vmem:[%s1278 + $0x4c] sm:$0xf]
        %v1299 = vld [vmem:[%s1278 + $0x50] sm:$0xf]
        %v1300 = vld [vmem:[%s1278 + $0x54] sm:$0xf]
        %v1301 = vld [vmem:[%s1278 + $0x58] sm:$0xf]
        %v1302 = vld [vmem:[%s1278 + $0x5c] sm:$0xf]
        %v1303 = vld [vmem:[%s1278 + $0x60] sm:$0xf]
        %v1304 = vld [vmem:[%s1278 + $0x64] sm:$0xf]
        %v1305 = vld [vmem:[%s1278 + $0x68] sm:$0xf]
        %v1306 = vld [vmem:[%s1278 + $0x6c] sm:$0xf]
        %v1307 = vld [vmem:[%s1278 + $0x70] sm:$0xf]
        %v1308 = vld [vmem:[%s1278 + $0x74] sm:$0xf]
        %v1309 = vld [vmem:[%s1278 + $0x78] sm:$0xf]
        %v1310 = vld [vmem:[%s1278 + $0x7c] sm:$0xf]
        %v1311 = vperm.slane %v485, 0
        %v1344 = vunpack.c.l.b16 %v1279
        %v1345 = vunpack.c.l.b16 %v1280
        %v1346 = vunpack.c.l.b16 %v1281
        %v1347 = vunpack.c.l.b16 %v1282
        %v1348 = vunpack.c.l.b16 %v1283
        %v1349 = vunpack.c.l.b16 %v1284
        %v1350 = vunpack.c.l.b16 %v1285
        %v1351 = vunpack.c.l.b16 %v1286
        %v1352 = vunpack.c.l.b16 %v1287
        %v1353 = vunpack.c.l.b16 %v1288
        %v1354 = vunpack.c.l.b16 %v1289
        %v1355 = vunpack.c.l.b16 %v1290
        %v1356 = vunpack.c.l.b16 %v1291
        %v1357 = vunpack.c.l.b16 %v1292
        %v1358 = vunpack.c.l.b16 %v1293
        %v1359 = vunpack.c.l.b16 %v1294
        %v1360 = vunpack.c.l.b16 %v1295
        %v1361 = vunpack.c.l.b16 %v1296
        %v1362 = vunpack.c.l.b16 %v1297
        %v1363 = vunpack.c.l.b16 %v1298
        %v1364 = vunpack.c.l.b16 %v1299
        %v1365 = vunpack.c.l.b16 %v1300
        %v1366 = vunpack.c.l.b16 %v1301
        %v1367 = vunpack.c.l.b16 %v1302
        %v1368 = vunpack.c.l.b16 %v1303
        %v1369 = vunpack.c.l.b16 %v1304
        %v1370 = vunpack.c.l.b16 %v1305
        %v1371 = vunpack.c.l.b16 %v1306
        %v1372 = vunpack.c.l.b16 %v1307
        %v1373 = vunpack.c.l.b16 %v1308
        %v1374 = vunpack.c.l.b16 %v1309
        %v1375 = vunpack.c.l.b16 %v1310
        %v1376 = vpack.c.b16 %v1345, %v1344
        %v1377 = vpack.c.b16 %v1347, %v1346
        %v1378 = vpack.c.b16 %v1349, %v1348
        %v1379 = vpack.c.b16 %v1351, %v1350
        %v1380 = vpack.c.b16 %v1353, %v1352
        %v1381 = vpack.c.b16 %v1355, %v1354
        %v1382 = vpack.c.b16 %v1357, %v1356
        %v1383 = vpack.c.b16 %v1359, %v1358
        %v1384 = vpack.c.b16 %v1361, %v1360
        %v1385 = vpack.c.b16 %v1363, %v1362
        %v1386 = vpack.c.b16 %v1365, %v1364
        %v1387 = vpack.c.b16 %v1367, %v1366
        %v1388 = vpack.c.b16 %v1369, %v1368
        %v1389 = vpack.c.b16 %v1371, %v1370
        %v1390 = vpack.c.b16 %v1373, %v1372
        %v1391 = vpack.c.b16 %v1375, %v1374
        %1408 = vmatpush.bf16.msra.mxu0 %v1383
        %1409 = vmatpush.bf16.msra.mxu0 %v1382
        %1410 = vmatpush.bf16.msra.mxu0 %v1381
        %1411 = vmatpush.bf16.msra.mxu0 %v1380
        %1412 = vmatpush.bf16.msra.mxu0 %v1379
        %1413 = vmatpush.bf16.msra.mxu0 %v1378
        %1414 = vmatpush.bf16.msra.mxu0 %v1377
        %1415 = vmatpush.bf16.msra.mxu0 %v1376
        %1416 = vmatmul.bf16.gmra.mxu0 %v1274
        %v1417 = vpop.f32.mrf.mxu0
        %v1418 = vadd.f32 %v1311, %v1417
        %v1419 = vpop.f32.mrf.mxu0
        %v1420 = vadd.f32 %v1311, %v1419
        %1421 = vmatmul.bf16.gmra.mxu0 %v1276
        %v1422 = vpop.f32.mrf.mxu0
        %v1423 = vadd.f32 %v1311, %v1422
        %v1424 = vpop.f32.mrf.mxu0
        %v1425 = vadd.f32 %v1311, %v1424
        %1426 = vdwg.mxu0
        %1427 = vmatpush.bf16.msra.mxu0 %v1391
        %1428 = vmatpush.bf16.msra.mxu0 %v1390
        %1429 = vmatpush.bf16.msra.mxu0 %v1389
        %1430 = vmatpush.bf16.msra.mxu0 %v1388
        %1431 = vmatpush.bf16.msra.mxu0 %v1387
        %1432 = vmatpush.bf16.msra.mxu0 %v1386
        %1433 = vmatpush.bf16.msra.mxu0 %v1385
        %1434 = vmatpush.bf16.msra.mxu0 %v1384
        %1435 = vmatmul.bf16.gmra.mxu0 %v1275
        %v1436 = vpop.f32.mrf.mxu0
        %v1437 = vadd.f32 %v1418, %v1436
        %v1438 = vpop.f32.mrf.mxu0
        %v1439 = vadd.f32 %v1420, %v1438
        %1440 = vmatmul.bf16.gmra.mxu0 %v1277
        %v1441 = vpop.f32.mrf.mxu0
        %v1442 = vadd.f32 %v1423, %v1441
        %v1443 = vpop.f32.mrf.mxu0
        %v1444 = vadd.f32 %v1425, %v1443
        %1445 = vdwg.mxu0
        %v1446 = vld [vmem:[#allocation12] sm:$0xff]
        %v1447 = vld [vmem:[#allocation12 + $0x8] sm:$0xff]
        %v1448 = vld [vmem:[#allocation12 + $0x10] sm:$0xff]
        %v1449 = vld [vmem:[#allocation12 + $0x18] sm:$0xff]
        %v1450 = vld [vmem:[#allocation12 + $0x20] sm:$0xff]
        %v1451 = vld [vmem:[#allocation12 + $0x28] sm:$0xff]
        %v1452 = vld [vmem:[#allocation12 + $0x30] sm:$0xff]
        %v1453 = vld [vmem:[#allocation12 + $0x38] sm:$0xff]
        %v1454 = vld [vmem:[#allocation12 + $0x40] sm:$0xff]
        %v1455 = vld [vmem:[#allocation12 + $0x48] sm:$0xff]
        %v1456 = vld [vmem:[#allocation12 + $0x50] sm:$0xff]
        %v1457 = vld [vmem:[#allocation12 + $0x58] sm:$0xff]
        %v1458 = vld [vmem:[#allocation12 + $0x60] sm:$0xff]
        %v1459 = vld [vmem:[#allocation12 + $0x68] sm:$0xff]
        %v1460 = vld [vmem:[#allocation12 + $0x70] sm:$0xff]
        %v1461 = vld [vmem:[#allocation12 + $0x78] sm:$0xff]
        %v1478 = vunpack.c.l.b16 %v1446
        %v1479 = vunpack.c.h.b16 %v1446
        %v1480 = vunpack.c.l.b16 %v1447
        %v1481 = vunpack.c.h.b16 %v1447
        %v1482 = vunpack.c.l.b16 %v1448
        %v1483 = vunpack.c.h.b16 %v1448
        %v1484 = vunpack.c.l.b16 %v1449
        %v1485 = vunpack.c.h.b16 %v1449
        %v1486 = vunpack.c.l.b16 %v1450
        %v1487 = vunpack.c.h.b16 %v1450
        %v1488 = vunpack.c.l.b16 %v1451
        %v1489 = vunpack.c.h.b16 %v1451
        %v1490 = vunpack.c.l.b16 %v1452
        %v1491 = vunpack.c.h.b16 %v1452
        %v1492 = vunpack.c.l.b16 %v1453
        %v1493 = vunpack.c.h.b16 %v1453
        %v1494 = vunpack.c.l.b16 %v1454
        %v1495 = vunpack.c.h.b16 %v1454
        %v1496 = vunpack.c.l.b16 %v1455
        %v1497 = vunpack.c.h.b16 %v1455
        %v1498 = vunpack.c.l.b16 %v1456
        %v1499 = vunpack.c.h.b16 %v1456
        %v1500 = vunpack.c.l.b16 %v1457
        %v1501 = vunpack.c.h.b16 %v1457
        %v1502 = vunpack.c.l.b16 %v1458
        %v1503 = vunpack.c.h.b16 %v1458
        %v1504 = vunpack.c.l.b16 %v1459
        %v1505 = vunpack.c.h.b16 %v1459
        %v1506 = vunpack.c.l.b16 %v1460
        %v1507 = vunpack.c.h.b16 %v1460
        %v1508 = vunpack.c.l.b16 %v1461
        %v1509 = vunpack.c.h.b16 %v1461
        %v1510 = vpack.c.b16 %v1480, %v1478
        %v1511 = vpack.c.b16 %v1481, %v1479
        %v1512 = vpack.c.b16 %v1484, %v1482
        %v1513 = vpack.c.b16 %v1485, %v1483
        %v1514 = vpack.c.b16 %v1488, %v1486
        %v1515 = vpack.c.b16 %v1489, %v1487
        %v1516 = vpack.c.b16 %v1492, %v1490
        %v1517 = vpack.c.b16 %v1493, %v1491
        %v1518 = vpack.c.b16 %v1496, %v1494
        %v1519 = vpack.c.b16 %v1497, %v1495
        %v1520 = vpack.c.b16 %v1500, %v1498
        %v1521 = vpack.c.b16 %v1501, %v1499
        %v1522 = vpack.c.b16 %v1504, %v1502
        %v1523 = vpack.c.b16 %v1505, %v1503
        %v1524 = vpack.c.b16 %v1508, %v1506
        %v1525 = vpack.c.b16 %v1509, %v1507
        %1542 = vmatpush.bf16.msra.mxu0 %v1524
        %1543 = vmatpush.bf16.msra.mxu0 %v1522
        %1544 = vmatpush.bf16.msra.mxu0 %v1520
        %1545 = vmatpush.bf16.msra.mxu0 %v1518
        %1546 = vmatpush.bf16.msra.mxu0 %v1516
        %1547 = vmatpush.bf16.msra.mxu0 %v1514
        %1548 = vmatpush.bf16.msra.mxu0 %v1512
        %1549 = vmatpush.bf16.msra.mxu0 %v1510
        %1550 = vmatmul.bf16.gmra.mxu0 %v1144
        %v1551 = vpop.f32.mrf.mxu0
        %v1552 = vadd.f32 0.0, %v1551
        %v1553 = vpop.f32.mrf.mxu0
        %v1554 = vadd.f32 0.0, %v1553
        %1555 = vmatmul.bf16.gmra.mxu0 %v1145
        %v1556 = vpop.f32.mrf.mxu0
        %v1557 = vadd.f32 0.0, %v1556
        %v1558 = vpop.f32.mrf.mxu0
        %v1559 = vadd.f32 0.0, %v1558
        %1560 = vmatmul.bf16.gmra.mxu0 %v1146
        %v1561 = vpop.f32.mrf.mxu0
        %v1562 = vadd.f32 0.0, %v1561
        %v1563 = vpop.f32.mrf.mxu0
        %v1564 = vadd.f32 0.0, %v1563
        %1565 = vmatmul.bf16.gmra.mxu0 %v1147
        %v1566 = vpop.f32.mrf.mxu0
        %v1567 = vadd.f32 0.0, %v1566
        %v1568 = vpop.f32.mrf.mxu0
        %v1569 = vadd.f32 0.0, %v1568
        %1570 = vdwg.mxu0
        %1571 = vmatpush.bf16.msra.mxu0 %v1525
        %1572 = vmatpush.bf16.msra.mxu0 %v1523
        %1573 = vmatpush.bf16.msra.mxu0 %v1521
        %1574 = vmatpush.bf16.msra.mxu0 %v1519
        %1575 = vmatpush.bf16.msra.mxu0 %v1517
        %1576 = vmatpush.bf16.msra.mxu0 %v1515
        %1577 = vmatpush.bf16.msra.mxu0 %v1513
        %1578 = vmatpush.bf16.msra.mxu0 %v1511
        %1579 = vmatmul.bf16.gmra.mxu0 %v1144
        %v1580 = vpop.f32.mrf.mxu0
        %v1581 = vadd.f32 0.0, %v1580
        %v1582 = vpop.f32.mrf.mxu0
        %v1583 = vadd.f32 0.0, %v1582
        %1584 = vmatmul.bf16.gmra.mxu0 %v1145
        %v1585 = vpop.f32.mrf.mxu0
        %v1586 = vadd.f32 0.0, %v1585
        %v1587 = vpop.f32.mrf.mxu0
        %v1588 = vadd.f32 0.0, %v1587
        %1589 = vmatmul.bf16.gmra.mxu0 %v1146
        %v1590 = vpop.f32.mrf.mxu0
        %v1591 = vadd.f32 0.0, %v1590
        %v1592 = vpop.f32.mrf.mxu0
        %v1593 = vadd.f32 0.0, %v1592
        %1594 = vmatmul.bf16.gmra.mxu0 %v1147
        %v1595 = vpop.f32.mrf.mxu0
        %v1596 = vadd.f32 0.0, %v1595
        %v1597 = vpop.f32.mrf.mxu0
        %v1598 = vadd.f32 0.0, %v1597
        %1599 = vdwg.mxu0
        %v1600 = vperm.slane %v486, 0
        %v1601 = vadd.f32 %v1552, %v1600
        %v1602 = vadd.f32 %v1554, %v1600
        %v1603 = vadd.f32 %v1557, %v1600
        %v1604 = vadd.f32 %v1559, %v1600
        %v1605 = vadd.f32 %v1562, %v1600
        %v1606 = vadd.f32 %v1564, %v1600
        %v1607 = vadd.f32 %v1567, %v1600
        %v1608 = vadd.f32 %v1569, %v1600
        %v1609 = vperm.slane %v487, 0
        %v1610 = vadd.f32 %v1581, %v1609
        %v1611 = vadd.f32 %v1583, %v1609
        %v1612 = vadd.f32 %v1586, %v1609
        %v1613 = vadd.f32 %v1588, %v1609
        %v1614 = vadd.f32 %v1591, %v1609
        %v1615 = vadd.f32 %v1593, %v1609
        %v1616 = vadd.f32 %v1596, %v1609
        %v1617 = vadd.f32 %v1598, %v1609
        %v1618 = vpack.c.bf16 %v1437, %v1437
        %v1619 = vpack.c.bf16 %v1439, %v1439
        %v1620 = vpack.c.bf16 %v1442, %v1442
        %v1621 = vpack.c.bf16 %v1444, %v1444
        %v1622 = vpack.c.bf16 %v1601, %v1601
        %v1623 = vpack.c.bf16 %v1602, %v1602
        %v1624 = vpack.c.bf16 %v1603, %v1603
        %v1625 = vpack.c.bf16 %v1604, %v1604
        %v1626 = vpack.c.bf16 %v1605, %v1605
        %v1627 = vpack.c.bf16 %v1606, %v1606
        %v1628 = vpack.c.bf16 %v1607, %v1607
        %v1629 = vpack.c.bf16 %v1608, %v1608
        %v1630 = vpack.c.bf16 %v1610, %v1610
        %v1631 = vpack.c.bf16 %v1611, %v1611
        %v1632 = vpack.c.bf16 %v1612, %v1612
        %v1633 = vpack.c.bf16 %v1613, %v1613
        %v1634 = vpack.c.bf16 %v1614, %v1614
        %v1635 = vpack.c.bf16 %v1615, %v1615
        %v1636 = vpack.c.bf16 %v1616, %v1616
        %v1637 = vpack.c.bf16 %v1617, %v1617
        %v1640 = vunpack.c.l.b16 %v1618
        %v1641 = vunpack.c.l.b16 %v1619
        %v1642 = vpack.c.b16 %v1641, %v1640
        %v1647 = vunpack.c.l.b16 %v1622
        %v1648 = vunpack.c.l.b16 %v1623
        %v1649 = vunpack.c.l.b16 %v1624
        %v1650 = vunpack.c.l.b16 %v1625
        %v1651 = vpack.c.b16 %v1648, %v1647
        %v1652 = vpack.c.b16 %v1650, %v1649
        %vm1653 = vcmask 130048
        %v1655 = vsel %vm1653, %v1642, 0
        %v1658 = vsel %vm1653, %v1651, 0
        %v1661 = vsel %vm1653, %v1652, 0
        %1663 = vmatpush.bf16.xpose.msra.mxu0 0
        %1664 = vmatpush.bf16.xpose.msra.mxu0 0
        %1665 = vmatpush.bf16.xpose.msra.mxu0 0
        %1666 = vmatpush.bf16.xpose.msra.mxu0 0
        %1667 = vmatpush.bf16.xpose.msra.mxu0 0
        %1668 = vmatpush.bf16.xpose.msra.mxu0 0
        %1669 = vmatpush.bf16.xpose.msra.mxu0 %v1661
        %1670 = vmatpush.bf16.xpose.msra.mxu0 %v1658
        %1671 = vmatmul.bf16.gmra.mxu0 %v1655
        %v1672 = vpop.f32.mrf.mxu0
        %v1673 = vadd.f32 0.0, %v1672
        %v1674 = vpop.f32.mrf.mxu0
        %v1675 = vadd.f32 0.0, %v1674
        %1676 = vdwg.mxu0
        %v1679 = vunpack.c.l.b16 %v1620
        %v1680 = vunpack.c.l.b16 %v1621
        %v1681 = vpack.c.b16 %v1680, %v1679
        %v1686 = vunpack.c.l.b16 %v1626
        %v1687 = vunpack.c.l.b16 %v1627
        %v1688 = vunpack.c.l.b16 %v1628
        %v1689 = vunpack.c.l.b16 %v1629
        %v1690 = vpack.c.b16 %v1687, %v1686
        %v1691 = vpack.c.b16 %v1689, %v1688
        %v1693 = vsel %vm1653, %v1681, 0
        %v1696 = vsel %vm1653, %v1690, 0
        %v1699 = vsel %vm1653, %v1691, 0
        %1701 = vmatpush.bf16.xpose.msra.mxu0 0
        %1702 = vmatpush.bf16.xpose.msra.mxu0 0
        %1703 = vmatpush.bf16.xpose.msra.mxu0 0
        %1704 = vmatpush.bf16.xpose.msra.mxu0 0
        %1705 = vmatpush.bf16.xpose.msra.mxu0 0
        %1706 = vmatpush.bf16.xpose.msra.mxu0 0
        %1707 = vmatpush.bf16.xpose.msra.mxu0 %v1699
        %1708 = vmatpush.bf16.xpose.msra.mxu0 %v1696
        %1709 = vmatmul.bf16.gmra.mxu0 %v1693
        %v1710 = vpop.f32.mrf.mxu0
        %v1711 = vadd.f32 0.0, %v1710
        %v1712 = vpop.f32.mrf.mxu0
        %v1713 = vadd.f32 0.0, %v1712
        %1714 = vdwg.mxu0
        %vm1715 = vcmask 261120
        %v1716 = vsel %vm1715, %v1673, -inf
        %1717 = vmax.xlane.f32.xlu0 %v1716
        %v1718 = vpop.xlane.xlu0 %1717
        %v1719 = vsel %vm1715, %v1675, -inf
        %1720 = vmax.xlane.f32.xlu0 %v1719
        %v1721 = vpop.xlane.xlu0 %1720
        %v1722 = vsel %vm1715, %v1711, -inf
        %1723 = vmax.xlane.f32.xlu0 %v1722
        %v1724 = vpop.xlane.xlu0 %1723
        %v1725 = vsel %vm1715, %v1713, -inf
        %1726 = vmax.xlane.f32.xlu0 %v1725
        %v1727 = vpop.xlane.xlu0 %1726
        %v1728 = vsub.f32 %v1673, %v1718
        %v1729 = vsub.f32 %v1675, %v1721
        %v1730 = vsub.f32 %v1711, %v1724
        %v1731 = vsub.f32 %v1713, %v1727
        %v1732 = vmul.f32 %v1728, 1.442695
        %v1733 = vpow.pop %v1732
        %v1734 = vmul.f32 %v1729, 1.442695
        %v1735 = vpow.pop %v1734
        %v1736 = vmul.f32 %v1730, 1.442695
        %v1737 = vpow.pop %v1736
        %v1738 = vmul.f32 %v1731, 1.442695
        %v1739 = vpow.pop %v1738
        %v1740 = vsel %vm1715, %v1733, 0.0
        %1741 = vadd.xlane.f32.xlu0 %v1740
        %v1742 = vpop.xlane.xlu0 %1741
        %v1743 = vsel %vm1715, %v1735, 0.0
        %1744 = vadd.xlane.f32.xlu0 %v1743
        %v1745 = vpop.xlane.xlu0 %1744
        %v1746 = vsel %vm1715, %v1737, 0.0
        %1747 = vadd.xlane.f32.xlu0 %v1746
        %v1748 = vpop.xlane.xlu0 %1747
        %v1749 = vsel %vm1715, %v1739, 0.0
        %1750 = vadd.xlane.f32.xlu0 %v1749
        %v1751 = vpop.xlane.xlu0 %1750
        %v1752 = vrcp.pop %v1742
        %v1753 = vrcp.pop %v1745
        %v1754 = vrcp.pop %v1748
        %v1755 = vrcp.pop %v1751
        %v1756 = vmul.f32 %v1733, %v1752
        %v1757 = vmul.f32 %v1735, %v1753
        %v1758 = vmul.f32 %v1737, %v1754
        %v1759 = vmul.f32 %v1739, %v1755
        %v1760 = vpack.c.bf16 %v1756, %v1756
        %v1761 = vpack.c.bf16 %v1757, %v1757
        %v1762 = vpack.c.bf16 %v1758, %v1758
        %v1763 = vpack.c.bf16 %v1759, %v1759
        %v1766 = vunpack.c.l.b16 %v1760
        %v1767 = vunpack.c.l.b16 %v1761
        %v1768 = vpack.c.b16 %v1767, %v1766
        %v1773 = vunpack.c.l.b16 %v1630
        %v1774 = vunpack.c.l.b16 %v1631
        %v1775 = vunpack.c.l.b16 %v1632
        %v1776 = vunpack.c.l.b16 %v1633
        %v1777 = vpack.c.b16 %v1774, %v1773
        %v1778 = vpack.c.b16 %v1776, %v1775
        %v1782 = vsel %vm1715, %v1768, 0
        %1784 = vmatpush.bf16.msra.mxu0 0
        %1785 = vmatpush.bf16.msra.mxu0 0
        %1786 = vmatpush.bf16.msra.mxu0 0
        %1787 = vmatpush.bf16.msra.mxu0 0
        %1788 = vmatpush.bf16.msra.mxu0 0
        %1789 = vmatpush.bf16.msra.mxu0 0
        %1790 = vmatpush.bf16.msra.mxu0 %v1778
        %1791 = vmatpush.bf16.msra.mxu0 %v1777
        %1792 = vmatmul.bf16.gmra.mxu0 %v1782
        %v1793 = vpop.f32.mrf.mxu0
        %v1794 = vadd.f32 0.0, %v1793
        %v1795 = vpop.f32.mrf.mxu0
        %v1796 = vadd.f32 0.0, %v1795
        %1797 = vdwg.mxu0
        %v1800 = vunpack.c.l.b16 %v1762
        %v1801 = vunpack.c.l.b16 %v1763
        %v1802 = vpack.c.b16 %v1801, %v1800
        %v1807 = vunpack.c.l.b16 %v1634
        %v1808 = vunpack.c.l.b16 %v1635
        %v1809 = vunpack.c.l.b16 %v1636
        %v1810 = vunpack.c.l.b16 %v1637
        %v1811 = vpack.c.b16 %v1808, %v1807
        %v1812 = vpack.c.b16 %v1810, %v1809
        %v1816 = vsel %vm1715, %v1802, 0
        %1818 = vmatpush.bf16.msra.mxu0 0
        %1819 = vmatpush.bf16.msra.mxu0 0
        %1820 = vmatpush.bf16.msra.mxu0 0
        %1821 = vmatpush.bf16.msra.mxu0 0
        %1822 = vmatpush.bf16.msra.mxu0 0
        %1823 = vmatpush.bf16.msra.mxu0 0
        %1824 = vmatpush.bf16.msra.mxu0 %v1812
        %1825 = vmatpush.bf16.msra.mxu0 %v1811
        %1826 = vmatmul.bf16.gmra.mxu0 %v1816
        %v1827 = vpop.f32.mrf.mxu0
        %v1828 = vadd.f32 0.0, %v1827
        %v1829 = vpop.f32.mrf.mxu0
        %v1830 = vadd.f32 0.0, %v1829
        %1831 = vdwg.mxu0
        %1832 = vst.msk [vmem:[#allocation2] sm:$0xff] %vm1653, %v1794
        %1833 = vst.msk [vmem:[#allocation2 + $0x8] sm:$0xff] %vm1653, %v1796
        %1834 = vst.msk [vmem:[#allocation2 + $0x10] sm:$0xff] %vm1653, %v1828
        %1835 = vst.msk [vmem:[#allocation2 + $0x18] sm:$0xff] %vm1653, %v1830
        %1836 = vrot.lane.b32.xlu0 %v1642, 112
        %v1837 = vpop.permute.xlu0 %1836
        %1838 = vrot.lane.b32.xlu0 %v1651, 112
        %v1839 = vpop.permute.xlu0 %1838
        %1840 = vrot.lane.b32.xlu0 %v1652, 112
        %v1841 = vpop.permute.xlu0 %1840
        %v1843 = vsel %vm1653, %v1837, 0
        %v1846 = vsel %vm1653, %v1839, 0
        %v1849 = vsel %vm1653, %v1841, 0
        %1851 = vmatpush.bf16.xpose.msra.mxu0 0
        %1852 = vmatpush.bf16.xpose.msra.mxu0 0
        %1853 = vmatpush.bf16.xpose.msra.mxu0 0
        %1854 = vmatpush.bf16.xpose.msra.mxu0 0
        %1855 = vmatpush.bf16.xpose.msra.mxu0 0
        %1856 = vmatpush.bf16.xpose.msra.mxu0 0
        %1857 = vmatpush.bf16.xpose.msra.mxu0 %v1849
        %1858 = vmatpush.bf16.xpose.msra.mxu0 %v1846
        %1859 = vmatmul.bf16.gmra.mxu0 %v1843
        %v1860 = vpop.f32.mrf.mxu0
        %v1861 = vadd.f32 0.0, %v1860
        %v1862 = vpop.f32.mrf.mxu0
        %v1863 = vadd.f32 0.0, %v1862
        %1864 = vdwg.mxu0
        %1865 = vrot.lane.b32.xlu0 %v1681, 112
        %v1866 = vpop.permute.xlu0 %1865
        %1867 = vrot.lane.b32.xlu0 %v1690, 112
        %v1868 = vpop.permute.xlu0 %1867
        %1869 = vrot.lane.b32.xlu0 %v1691, 112
        %v1870 = vpop.permute.xlu0 %1869
        %v1872 = vsel %vm1653, %v1866, 0
        %v1875 = vsel %vm1653, %v1868, 0
        %v1878 = vsel %vm1653, %v1870, 0
        %1880 = vmatpush.bf16.xpose.msra.mxu0 0
        %1881 = vmatpush.bf16.xpose.msra.mxu0 0
        %1882 = vmatpush.bf16.xpose.msra.mxu0 0
        %1883 = vmatpush.bf16.xpose.msra.mxu0 0
        %1884 = vmatpush.bf16.xpose.msra.mxu0 0
        %1885 = vmatpush.bf16.xpose.msra.mxu0 0
        %1886 = vmatpush.bf16.xpose.msra.mxu0 %v1878
        %1887 = vmatpush.bf16.xpose.msra.mxu0 %v1875
        %1888 = vmatmul.bf16.gmra.mxu0 %v1872
        %v1889 = vpop.f32.mrf.mxu0
        %v1890 = vadd.f32 0.0, %v1889
        %v1891 = vpop.f32.mrf.mxu0
        %v1892 = vadd.f32 0.0, %v1891
        %1893 = vdwg.mxu0
        %v1894 = vsel %vm1715, %v1861, -inf
        %1895 = vmax.xlane.f32.xlu0 %v1894
        %v1896 = vpop.xlane.xlu0 %1895
        %v1897 = vsel %vm1715, %v1863, -inf
        %1898 = vmax.xlane.f32.xlu0 %v1897
        %v1899 = vpop.xlane.xlu0 %1898
        %v1900 = vsel %vm1715, %v1890, -inf
        %1901 = vmax.xlane.f32.xlu0 %v1900
        %v1902 = vpop.xlane.xlu0 %1901
        %v1903 = vsel %vm1715, %v1892, -inf
        %1904 = vmax.xlane.f32.xlu0 %v1903
        %v1905 = vpop.xlane.xlu0 %1904
        %v1906 = vsub.f32 %v1861, %v1896
        %v1907 = vsub.f32 %v1863, %v1899
        %v1908 = vsub.f32 %v1890, %v1902
        %v1909 = vsub.f32 %v1892, %v1905
        %v1910 = vmul.f32 %v1906, 1.442695
        %v1911 = vpow.pop %v1910
        %v1912 = vmul.f32 %v1907, 1.442695
        %v1913 = vpow.pop %v1912
        %v1914 = vmul.f32 %v1908, 1.442695
        %v1915 = vpow.pop %v1914
        %v1916 = vmul.f32 %v1909, 1.442695
        %v1917 = vpow.pop %v1916
        %v1918 = vsel %vm1715, %v1911, 0.0
        %1919 = vadd.xlane.f32.xlu0 %v1918
        %v1920 = vpop.xlane.xlu0 %1919
        %v1921 = vsel %vm1715, %v1913, 0.0
        %1922 = vadd.xlane.f32.xlu0 %v1921
        %v1923 = vpop.xlane.xlu0 %1922
        %v1924 = vsel %vm1715, %v1915, 0.0
        %1925 = vadd.xlane.f32.xlu0 %v1924
        %v1926 = vpop.xlane.xlu0 %1925
        %v1927 = vsel %vm1715, %v1917, 0.0
        %1928 = vadd.xlane.f32.xlu0 %v1927
        %v1929 = vpop.xlane.xlu0 %1928
        %v1930 = vrcp.pop %v1920
        %v1931 = vrcp.pop %v1923
        %v1932 = vrcp.pop %v1926
        %v1933 = vrcp.pop %v1929
        %v1934 = vmul.f32 %v1911, %v1930
        %v1935 = vmul.f32 %v1913, %v1931
        %v1936 = vmul.f32 %v1915, %v1932
        %v1937 = vmul.f32 %v1917, %v1933
        %v1938 = vpack.c.bf16 %v1934, %v1934
        %v1939 = vpack.c.bf16 %v1935, %v1935
        %v1940 = vpack.c.bf16 %v1936, %v1936
        %v1941 = vpack.c.bf16 %v1937, %v1937
        %v1944 = vunpack.c.l.b16 %v1938
        %v1945 = vunpack.c.l.b16 %v1939
        %v1946 = vpack.c.b16 %v1945, %v1944
        %1947 = vrot.lane.b32.xlu0 %v1777, 112
        %v1948 = vpop.permute.xlu0 %1947
        %1949 = vrot.lane.b32.xlu0 %v1778, 112
        %v1950 = vpop.permute.xlu0 %1949
        %v1954 = vsel %vm1715, %v1946, 0
        %1956 = vmatpush.bf16.msra.mxu0 0
        %1957 = vmatpush.bf16.msra.mxu0 0
        %1958 = vmatpush.bf16.msra.mxu0 0
        %1959 = vmatpush.bf16.msra.mxu0 0
        %1960 = vmatpush.bf16.msra.mxu0 0
        %1961 = vmatpush.bf16.msra.mxu0 0
        %1962 = vmatpush.bf16.msra.mxu0 %v1950
        %1963 = vmatpush.bf16.msra.mxu0 %v1948
        %1964 = vmatmul.bf16.gmra.mxu0 %v1954
        %v1965 = vpop.f32.mrf.mxu0
        %v1966 = vadd.f32 0.0, %v1965
        %v1967 = vpop.f32.mrf.mxu0
        %v1968 = vadd.f32 0.0, %v1967
        %1969 = vdwg.mxu0
        %v1972 = vunpack.c.l.b16 %v1940
        %v1973 = vunpack.c.l.b16 %v1941
        %v1974 = vpack.c.b16 %v1973, %v1972
        %1975 = vrot.lane.b32.xlu0 %v1811, 112
        %v1976 = vpop.permute.xlu0 %1975
        %1977 = vrot.lane.b32.xlu0 %v1812, 112
        %v1978 = vpop.permute.xlu0 %1977
        %v1982 = vsel %vm1715, %v1974, 0
        %1984 = vmatpush.bf16.msra.mxu0 0
        %1985 = vmatpush.bf16.msra.mxu0 0
        %1986 = vmatpush.bf16.msra.mxu0 0
        %1987 = vmatpush.bf16.msra.mxu0 0
        %1988 = vmatpush.bf16.msra.mxu0 0
        %1989 = vmatpush.bf16.msra.mxu0 0
        %1990 = vmatpush.bf16.msra.mxu0 %v1978
        %1991 = vmatpush.bf16.msra.mxu0 %v1976
        %1992 = vmatmul.bf16.gmra.mxu0 %v1982
        %v1993 = vpop.f32.mrf.mxu0
        %v1994 = vadd.f32 0.0, %v1993
        %v1995 = vpop.f32.mrf.mxu0
        %v1996 = vadd.f32 0.0, %v1995
        %1997 = vdwg.mxu0
        %2002 = vrot.lane.b32.xlu0 %v1966, 16
        %v2003 = vpop.permute.xlu0 %2002
        %2004 = vrot.lane.b32.xlu0 %v1968, 16
        %v2005 = vpop.permute.xlu0 %2004
        %2006 = vrot.lane.b32.xlu0 %v1994, 16
        %v2007 = vpop.permute.xlu0 %2006
        %2008 = vrot.lane.b32.xlu0 %v1996, 16
        %v2009 = vpop.permute.xlu0 %2008
        %vm2014 = vcmask 261248
        %2015 = vst.msk [vmem:[#allocation2] sm:$0xff] %vm2014, %v2003
        %2016 = vst.msk [vmem:[#allocation2 + $0x8] sm:$0xff] %vm2014, %v2005
        %2017 = vst.msk [vmem:[#allocation2 + $0x10] sm:$0xff] %vm2014, %v2007
        %2018 = vst.msk [vmem:[#allocation2 + $0x18] sm:$0xff] %vm2014, %v2009
        %2019 = vrot.lane.b32.xlu0 %v1642, 96
        %v2020 = vpop.permute.xlu0 %2019
        %2021 = vrot.lane.b32.xlu0 %v1651, 96
        %v2022 = vpop.permute.xlu0 %2021
        %2023 = vrot.lane.b32.xlu0 %v1652, 96
        %v2024 = vpop.permute.xlu0 %2023
        %v2026 = vsel %vm1653, %v2020, 0
        %v2029 = vsel %vm1653, %v2022, 0
        %v2032 = vsel %vm1653, %v2024, 0
        %2034 = vmatpush.bf16.xpose.msra.mxu0 0
        %2035 = vmatpush.bf16.xpose.msra.mxu0 0
        %2036 = vmatpush.bf16.xpose.msra.mxu0 0
        %2037 = vmatpush.bf16.xpose.msra.mxu0 0
        %2038 = vmatpush.bf16.xpose.msra.mxu0 0
        %2039 = vmatpush.bf16.xpose.msra.mxu0 0
        %2040 = vmatpush.bf16.xpose.msra.mxu0 %v2032
        %2041 = vmatpush.bf16.xpose.msra.mxu0 %v2029
        %2042 = vmatmul.bf16.gmra.mxu0 %v2026
        %v2043 = vpop.f32.mrf.mxu0
        %v2044 = vadd.f32 0.0, %v2043
        %v2045 = vpop.f32.mrf.mxu0
        %v2046 = vadd.f32 0.0, %v2045
        %2047 = vdwg.mxu0
        %2048 = vrot.lane.b32.xlu0 %v1681, 96
        %v2049 = vpop.permute.xlu0 %2048
        %2050 = vrot.lane.b32.xlu0 %v1690, 96
        %v2051 = vpop.permute.xlu0 %2050
        %2052 = vrot.lane.b32.xlu0 %v1691, 96
        %v2053 = vpop.permute.xlu0 %2052
        %v2055 = vsel %vm1653, %v2049, 0
        %v2058 = vsel %vm1653, %v2051, 0
        %v2061 = vsel %vm1653, %v2053, 0
        %2063 = vmatpush.bf16.xpose.msra.mxu0 0
        %2064 = vmatpush.bf16.xpose.msra.mxu0 0
        %2065 = vmatpush.bf16.xpose.msra.mxu0 0
        %2066 = vmatpush.bf16.xpose.msra.mxu0 0
        %2067 = vmatpush.bf16.xpose.msra.mxu0 0
        %2068 = vmatpush.bf16.xpose.msra.mxu0 0
        %2069 = vmatpush.bf16.xpose.msra.mxu0 %v2061
        %2070 = vmatpush.bf16.xpose.msra.mxu0 %v2058
        %2071 = vmatmul.bf16.gmra.mxu0 %v2055
        %v2072 = vpop.f32.mrf.mxu0
        %v2073 = vadd.f32 0.0, %v2072
        %v2074 = vpop.f32.mrf.mxu0
        %v2075 = vadd.f32 0.0, %v2074
        %2076 = vdwg.mxu0
        %v2077 = vsel %vm1715, %v2044, -inf
        %2078 = vmax.xlane.f32.xlu0 %v2077
        %v2079 = vpop.xlane.xlu0 %2078
        %v2080 = vsel %vm1715, %v2046, -inf
        %2081 = vmax.xlane.f32.xlu0 %v2080
        %v2082 = vpop.xlane.xlu0 %2081
        %v2083 = vsel %vm1715, %v2073, -inf
        %2084 = vmax.xlane.f32.xlu0 %v2083
        %v2085 = vpop.xlane.xlu0 %2084
        %v2086 = vsel %vm1715, %v2075, -inf
        %2087 = vmax.xlane.f32.xlu0 %v2086
        %v2088 = vpop.xlane.xlu0 %2087
        %v2089 = vsub.f32 %v2044, %v2079
        %v2090 = vsub.f32 %v2046, %v2082
        %v2091 = vsub.f32 %v2073, %v2085
        %v2092 = vsub.f32 %v2075, %v2088
        %v2093 = vmul.f32 %v2089, 1.442695
        %v2094 = vpow.pop %v2093
        %v2095 = vmul.f32 %v2090, 1.442695
        %v2096 = vpow.pop %v2095
        %v2097 = vmul.f32 %v2091, 1.442695
        %v2098 = vpow.pop %v2097
        %v2099 = vmul.f32 %v2092, 1.442695
        %v2100 = vpow.pop %v2099
        %v2101 = vsel %vm1715, %v2094, 0.0
        %2102 = vadd.xlane.f32.xlu0 %v2101
        %v2103 = vpop.xlane.xlu0 %2102
        %v2104 = vsel %vm1715, %v2096, 0.0
        %2105 = vadd.xlane.f32.xlu0 %v2104
        %v2106 = vpop.xlane.xlu0 %2105
        %v2107 = vsel %vm1715, %v2098, 0.0
        %2108 = vadd.xlane.f32.xlu0 %v2107
        %v2109 = vpop.xlane.xlu0 %2108
        %v2110 = vsel %vm1715, %v2100, 0.0
        %2111 = vadd.xlane.f32.xlu0 %v2110
        %v2112 = vpop.xlane.xlu0 %2111
        %v2113 = vrcp.pop %v2103
        %v2114 = vrcp.pop %v2106
        %v2115 = vrcp.pop %v2109
        %v2116 = vrcp.pop %v2112
        %v2117 = vmul.f32 %v2094, %v2113
        %v2118 = vmul.f32 %v2096, %v2114
        %v2119 = vmul.f32 %v2098, %v2115
        %v2120 = vmul.f32 %v2100, %v2116
        %v2121 = vpack.c.bf16 %v2117, %v2117
        %v2122 = vpack.c.bf16 %v2118, %v2118
        %v2123 = vpack.c.bf16 %v2119, %v2119
        %v2124 = vpack.c.bf16 %v2120, %v2120
        %v2127 = vunpack.c.l.b16 %v2121
        %v2128 = vunpack.c.l.b16 %v2122
        %v2129 = vpack.c.b16 %v2128, %v2127
        %2130 = vrot.lane.b32.xlu0 %v1777, 96
        %v2131 = vpop.permute.xlu0 %2130
        %2132 = vrot.lane.b32.xlu0 %v1778, 96
        %v2133 = vpop.permute.xlu0 %2132
        %v2137 = vsel %vm1715, %v2129, 0
        %2139 = vmatpush.bf16.msra.mxu0 0
        %2140 = vmatpush.bf16.msra.mxu0 0
        %2141 = vmatpush.bf16.msra.mxu0 0
        %2142 = vmatpush.bf16.msra.mxu0 0
        %2143 = vmatpush.bf16.msra.mxu0 0
        %2144 = vmatpush.bf16.msra.mxu0 0
        %2145 = vmatpush.bf16.msra.mxu0 %v2133
        %2146 = vmatpush.bf16.msra.mxu0 %v2131
        %2147 = vmatmul.bf16.gmra.mxu0 %v2137
        %v2148 = vpop.f32.mrf.mxu0
        %v2149 = vadd.f32 0.0, %v2148
        %v2150 = vpop.f32.mrf.mxu0
        %v2151 = vadd.f32 0.0, %v2150
        %2152 = vdwg.mxu0
        %v2155 = vunpack.c.l.b16 %v2123
        %v2156 = vunpack.c.l.b16 %v2124
        %v2157 = vpack.c.b16 %v2156, %v2155
        %2158 = vrot.lane.b32.xlu0 %v1811, 96
        %v2159 = vpop.permute.xlu0 %2158
        %2160 = vrot.lane.b32.xlu0 %v1812, 96
        %v2161 = vpop.permute.xlu0 %2160
        %v2165 = vsel %vm1715, %v2157, 0
        %2167 = vmatpush.bf16.msra.mxu0 0
        %2168 = vmatpush.bf16.msra.mxu0 0
        %2169 = vmatpush.bf16.msra.mxu0 0
        %2170 = vmatpush.bf16.msra.mxu0 0
        %2171 = vmatpush.bf16.msra.mxu0 0
        %2172 = vmatpush.bf16.msra.mxu0 0
        %2173 = vmatpush.bf16.msra.mxu0 %v2161
        %2174 = vmatpush.bf16.msra.mxu0 %v2159
        %2175 = vmatmul.bf16.gmra.mxu0 %v2165
        %v2176 = vpop.f32.mrf.mxu0
        %v2177 = vadd.f32 0.0, %v2176
        %v2178 = vpop.f32.mrf.mxu0
        %v2179 = vadd.f32 0.0, %v2178
        %2180 = vdwg.mxu0
        %2185 = vrot.lane.b32.xlu0 %v2149, 32
        %v2186 = vpop.permute.xlu0 %2185
        %2187 = vrot.lane.b32.xlu0 %v2151, 32
        %v2188 = vpop.permute.xlu0 %2187
        %2189 = vrot.lane.b32.xlu0 %v2177, 32
        %v2190 = vpop.permute.xlu0 %2189
        %2191 = vrot.lane.b32.xlu0 %v2179, 32
        %v2192 = vpop.permute.xlu0 %2191
        %vm2197 = vcmask 392448
        %2198 = vst.msk [vmem:[#allocation2] sm:$0xff] %vm2197, %v2186
        %2199 = vst.msk [vmem:[#allocation2 + $0x8] sm:$0xff] %vm2197, %v2188
        %2200 = vst.msk [vmem:[#allocation2 + $0x10] sm:$0xff] %vm2197, %v2190
        %2201 = vst.msk [vmem:[#allocation2 + $0x18] sm:$0xff] %vm2197, %v2192
        %2202 = vrot.lane.b32.xlu0 %v1642, 80
        %v2203 = vpop.permute.xlu0 %2202
        %2204 = vrot.lane.b32.xlu0 %v1651, 80
        %v2205 = vpop.permute.xlu0 %2204
        %2206 = vrot.lane.b32.xlu0 %v1652, 80
        %v2207 = vpop.permute.xlu0 %2206
        %v2209 = vsel %vm1653, %v2203, 0
        %v2212 = vsel %vm1653, %v2205, 0
        %v2215 = vsel %vm1653, %v2207, 0
        %2217 = vmatpush.bf16.xpose.msra.mxu0 0
        %2218 = vmatpush.bf16.xpose.msra.mxu0 0
        %2219 = vmatpush.bf16.xpose.msra.mxu0 0
        %2220 = vmatpush.bf16.xpose.msra.mxu0 0
        %2221 = vmatpush.bf16.xpose.msra.mxu0 0
        %2222 = vmatpush.bf16.xpose.msra.mxu0 0
        %2223 = vmatpush.bf16.xpose.msra.mxu0 %v2215
        %2224 = vmatpush.bf16.xpose.msra.mxu0 %v2212
        %2225 = vmatmul.bf16.gmra.mxu0 %v2209
        %v2226 = vpop.f32.mrf.mxu0
        %v2227 = vadd.f32 0.0, %v2226
        %v2228 = vpop.f32.mrf.mxu0
        %v2229 = vadd.f32 0.0, %v2228
        %2230 = vdwg.mxu0
        %2231 = vrot.lane.b32.xlu0 %v1681, 80
        %v2232 = vpop.permute.xlu0 %2231
        %2233 = vrot.lane.b32.xlu0 %v1690, 80
        %v2234 = vpop.permute.xlu0 %2233
        %2235 = vrot.lane.b32.xlu0 %v1691, 80
        %v2236 = vpop.permute.xlu0 %2235
        %v2238 = vsel %vm1653, %v2232, 0
        %v2241 = vsel %vm1653, %v2234, 0
        %v2244 = vsel %vm1653, %v2236, 0
        %2246 = vmatpush.bf16.xpose.msra.mxu0 0
        %2247 = vmatpush.bf16.xpose.msra.mxu0 0
        %2248 = vmatpush.bf16.xpose.msra.mxu0 0
        %2249 = vmatpush.bf16.xpose.msra.mxu0 0
        %2250 = vmatpush.bf16.xpose.msra.mxu0 0
        %2251 = vmatpush.bf16.xpose.msra.mxu0 0
        %2252 = vmatpush.bf16.xpose.msra.mxu0 %v2244
        %2253 = vmatpush.bf16.xpose.msra.mxu0 %v2241
        %2254 = vmatmul.bf16.gmra.mxu0 %v2238
        %v2255 = vpop.f32.mrf.mxu0
        %v2256 = vadd.f32 0.0, %v2255
        %v2257 = vpop.f32.mrf.mxu0
        %v2258 = vadd.f32 0.0, %v2257
        %2259 = vdwg.mxu0
        %v2260 = vsel %vm1715, %v2227, -inf
        %2261 = vmax.xlane.f32.xlu0 %v2260
        %v2262 = vpop.xlane.xlu0 %2261
        %v2263 = vsel %vm1715, %v2229, -inf
        %2264 = vmax.xlane.f32.xlu0 %v2263
        %v2265 = vpop.xlane.xlu0 %2264
        %v2266 = vsel %vm1715, %v2256, -inf
        %2267 = vmax.xlane.f32.xlu0 %v2266
        %v2268 = vpop.xlane.xlu0 %2267
        %v2269 = vsel %vm1715, %v2258, -inf
        %2270 = vmax.xlane.f32.xlu0 %v2269
        %v2271 = vpop.xlane.xlu0 %2270
        %v2272 = vsub.f32 %v2227, %v2262
        %v2273 = vsub.f32 %v2229, %v2265
        %v2274 = vsub.f32 %v2256, %v2268
        %v2275 = vsub.f32 %v2258, %v2271
        %v2276 = vmul.f32 %v2272, 1.442695
        %v2277 = vpow.pop %v2276
        %v2278 = vmul.f32 %v2273, 1.442695
        %v2279 = vpow.pop %v2278
        %v2280 = vmul.f32 %v2274, 1.442695
        %v2281 = vpow.pop %v2280
        %v2282 = vmul.f32 %v2275, 1.442695
        %v2283 = vpow.pop %v2282
        %v2284 = vsel %vm1715, %v2277, 0.0
        %2285 = vadd.xlane.f32.xlu0 %v2284
        %v2286 = vpop.xlane.xlu0 %2285
        %v2287 = vsel %vm1715, %v2279, 0.0
        %2288 = vadd.xlane.f32.xlu0 %v2287
        %v2289 = vpop.xlane.xlu0 %2288
        %v2290 = vsel %vm1715, %v2281, 0.0
        %2291 = vadd.xlane.f32.xlu0 %v2290
        %v2292 = vpop.xlane.xlu0 %2291
        %v2293 = vsel %vm1715, %v2283, 0.0
        %2294 = vadd.xlane.f32.xlu0 %v2293
        %v2295 = vpop.xlane.xlu0 %2294
        %v2296 = vrcp.pop %v2286
        %v2297 = vrcp.pop %v2289
        %v2298 = vrcp.pop %v2292
        %v2299 = vrcp.pop %v2295
        %v2300 = vmul.f32 %v2277, %v2296
        %v2301 = vmul.f32 %v2279, %v2297
        %v2302 = vmul.f32 %v2281, %v2298
        %v2303 = vmul.f32 %v2283, %v2299
        %v2304 = vpack.c.bf16 %v2300, %v2300
        %v2305 = vpack.c.bf16 %v2301, %v2301
        %v2306 = vpack.c.bf16 %v2302, %v2302
        %v2307 = vpack.c.bf16 %v2303, %v2303
        %v2310 = vunpack.c.l.b16 %v2304
        %v2311 = vunpack.c.l.b16 %v2305
        %v2312 = vpack.c.b16 %v2311, %v2310
        %2313 = vrot.lane.b32.xlu0 %v1777, 80
        %v2314 = vpop.permute.xlu0 %2313
        %2315 = vrot.lane.b32.xlu0 %v1778, 80
        %v2316 = vpop.permute.xlu0 %2315
        %v2320 = vsel %vm1715, %v2312, 0
        %2322 = vmatpush.bf16.msra.mxu0 0
        %2323 = vmatpush.bf16.msra.mxu0 0
        %2324 = vmatpush.bf16.msra.mxu0 0
        %2325 = vmatpush.bf16.msra.mxu0 0
        %2326 = vmatpush.bf16.msra.mxu0 0
        %2327 = vmatpush.bf16.msra.mxu0 0
        %2328 = vmatpush.bf16.msra.mxu0 %v2316
        %2329 = vmatpush.bf16.msra.mxu0 %v2314
        %2330 = vmatmul.bf16.gmra.mxu0 %v2320
        %v2331 = vpop.f32.mrf.mxu0
        %v2332 = vadd.f32 0.0, %v2331
        %v2333 = vpop.f32.mrf.mxu0
        %v2334 = vadd.f32 0.0, %v2333
        %2335 = vdwg.mxu0
        %v2338 = vunpack.c.l.b16 %v2306
        %v2339 = vunpack.c.l.b16 %v2307
        %v2340 = vpack.c.b16 %v2339, %v2338
        %2341 = vrot.lane.b32.xlu0 %v1811, 80
        %v2342 = vpop.permute.xlu0 %2341
        %2343 = vrot.lane.b32.xlu0 %v1812, 80
        %v2344 = vpop.permute.xlu0 %2343
        %v2348 = vsel %vm1715, %v2340, 0
        %2350 = vmatpush.bf16.msra.mxu0 0
        %2351 = vmatpush.bf16.msra.mxu0 0
        %2352 = vmatpush.bf16.msra.mxu0 0
        %2353 = vmatpush.bf16.msra.mxu0 0
        %2354 = vmatpush.bf16.msra.mxu0 0
        %2355 = vmatpush.bf16.msra.mxu0 0
        %2356 = vmatpush.bf16.msra.mxu0 %v2344
        %2357 = vmatpush.bf16.msra.mxu0 %v2342
        %2358 = vmatmul.bf16.gmra.mxu0 %v2348
        %v2359 = vpop.f32.mrf.mxu0
        %v2360 = vadd.f32 0.0, %v2359
        %v2361 = vpop.f32.mrf.mxu0
        %v2362 = vadd.f32 0.0, %v2361
        %2363 = vdwg.mxu0
        %2368 = vrot.lane.b32.xlu0 %v2332, 48
        %v2369 = vpop.permute.xlu0 %2368
        %2370 = vrot.lane.b32.xlu0 %v2334, 48
        %v2371 = vpop.permute.xlu0 %2370
        %2372 = vrot.lane.b32.xlu0 %v2360, 48
        %v2373 = vpop.permute.xlu0 %2372
        %2374 = vrot.lane.b32.xlu0 %v2362, 48
        %v2375 = vpop.permute.xlu0 %2374
        %vm2380 = vcmask 523648
        %2381 = vst.msk [vmem:[#allocation2] sm:$0xff] %vm2380, %v2369
        %2382 = vst.msk [vmem:[#allocation2 + $0x8] sm:$0xff] %vm2380, %v2371
        %2383 = vst.msk [vmem:[#allocation2 + $0x10] sm:$0xff] %vm2380, %v2373
        %2384 = vst.msk [vmem:[#allocation2 + $0x18] sm:$0xff] %vm2380, %v2375
        %2385 = vrot.lane.b32.xlu0 %v1642, 64
        %v2386 = vpop.permute.xlu0 %2385
        %2387 = vrot.lane.b32.xlu0 %v1651, 64
        %v2388 = vpop.permute.xlu0 %2387
        %2389 = vrot.lane.b32.xlu0 %v1652, 64
        %v2390 = vpop.permute.xlu0 %2389
        %v2392 = vsel %vm1653, %v2386, 0
        %v2395 = vsel %vm1653, %v2388, 0
        %v2398 = vsel %vm1653, %v2390, 0
        %2400 = vmatpush.bf16.xpose.msra.mxu0 0
        %2401 = vmatpush.bf16.xpose.msra.mxu0 0
        %2402 = vmatpush.bf16.xpose.msra.mxu0 0
        %2403 = vmatpush.bf16.xpose.msra.mxu0 0
        %2404 = vmatpush.bf16.xpose.msra.mxu0 0
        %2405 = vmatpush.bf16.xpose.msra.mxu0 0
        %2406 = vmatpush.bf16.xpose.msra.mxu0 %v2398
        %2407 = vmatpush.bf16.xpose.msra.mxu0 %v2395
        %2408 = vmatmul.bf16.gmra.mxu0 %v2392
        %v2409 = vpop.f32.mrf.mxu0
        %v2410 = vadd.f32 0.0, %v2409
        %v2411 = vpop.f32.mrf.mxu0
        %v2412 = vadd.f32 0.0, %v2411
        %2413 = vdwg.mxu0
        %2414 = vrot.lane.b32.xlu0 %v1681, 64
        %v2415 = vpop.permute.xlu0 %2414
        %2416 = vrot.lane.b32.xlu0 %v1690, 64
        %v2417 = vpop.permute.xlu0 %2416
        %2418 = vrot.lane.b32.xlu0 %v1691, 64
        %v2419 = vpop.permute.xlu0 %2418
        %v2421 = vsel %vm1653, %v2415, 0
        %v2424 = vsel %vm1653, %v2417, 0
        %v2427 = vsel %vm1653, %v2419, 0
        %2429 = vmatpush.bf16.xpose.msra.mxu0 0
        %2430 = vmatpush.bf16.xpose.msra.mxu0 0
        %2431 = vmatpush.bf16.xpose.msra.mxu0 0
        %2432 = vmatpush.bf16.xpose.msra.mxu0 0
        %2433 = vmatpush.bf16.xpose.msra.mxu0 0
        %2434 = vmatpush.bf16.xpose.msra.mxu0 0
        %2435 = vmatpush.bf16.xpose.msra.mxu0 %v2427
        %2436 = vmatpush.bf16.xpose.msra.mxu0 %v2424
        %2437 = vmatmul.bf16.gmra.mxu0 %v2421
        %v2438 = vpop.f32.mrf.mxu0
        %v2439 = vadd.f32 0.0, %v2438
        %v2440 = vpop.f32.mrf.mxu0
        %v2441 = vadd.f32 0.0, %v2440
        %2442 = vdwg.mxu0
        %v2443 = vsel %vm1715, %v2410, -inf
        %2444 = vmax.xlane.f32.xlu0 %v2443
        %v2445 = vpop.xlane.xlu0 %2444
        %v2446 = vsel %vm1715, %v2412, -inf
        %2447 = vmax.xlane.f32.xlu0 %v2446
        %v2448 = vpop.xlane.xlu0 %2447
        %v2449 = vsel %vm1715, %v2439, -inf
        %2450 = vmax.xlane.f32.xlu0 %v2449
        %v2451 = vpop.xlane.xlu0 %2450
        %v2452 = vsel %vm1715, %v2441, -inf
        %2453 = vmax.xlane.f32.xlu0 %v2452
        %v2454 = vpop.xlane.xlu0 %2453
        %v2455 = vsub.f32 %v2410, %v2445
        %v2456 = vsub.f32 %v2412, %v2448
        %v2457 = vsub.f32 %v2439, %v2451
        %v2458 = vsub.f32 %v2441, %v2454
        %v2459 = vmul.f32 %v2455, 1.442695
        %v2460 = vpow.pop %v2459
        %v2461 = vmul.f32 %v2456, 1.442695
        %v2462 = vpow.pop %v2461
        %v2463 = vmul.f32 %v2457, 1.442695
        %v2464 = vpow.pop %v2463
        %v2465 = vmul.f32 %v2458, 1.442695
        %v2466 = vpow.pop %v2465
        %v2467 = vsel %vm1715, %v2460, 0.0
        %2468 = vadd.xlane.f32.xlu0 %v2467
        %v2469 = vpop.xlane.xlu0 %2468
        %v2470 = vsel %vm1715, %v2462, 0.0
        %2471 = vadd.xlane.f32.xlu0 %v2470
        %v2472 = vpop.xlane.xlu0 %2471
        %v2473 = vsel %vm1715, %v2464, 0.0
        %2474 = vadd.xlane.f32.xlu0 %v2473
        %v2475 = vpop.xlane.xlu0 %2474
        %v2476 = vsel %vm1715, %v2466, 0.0
        %2477 = vadd.xlane.f32.xlu0 %v2476
        %v2478 = vpop.xlane.xlu0 %2477
        %v2479 = vrcp.pop %v2469
        %v2480 = vrcp.pop %v2472
        %v2481 = vrcp.pop %v2475
        %v2482 = vrcp.pop %v2478
        %v2483 = vmul.f32 %v2460, %v2479
        %v2484 = vmul.f32 %v2462, %v2480
        %v2485 = vmul.f32 %v2464, %v2481
        %v2486 = vmul.f32 %v2466, %v2482
        %v2487 = vpack.c.bf16 %v2483, %v2483
        %v2488 = vpack.c.bf16 %v2484, %v2484
        %v2489 = vpack.c.bf16 %v2485, %v2485
        %v2490 = vpack.c.bf16 %v2486, %v2486
        %v2493 = vunpack.c.l.b16 %v2487
        %v2494 = vunpack.c.l.b16 %v2488
        %v2495 = vpack.c.b16 %v2494, %v2493
        %2496 = vrot.lane.b32.xlu0 %v1777, 64
        %v2497 = vpop.permute.xlu0 %2496
        %2498 = vrot.lane.b32.xlu0 %v1778, 64
        %v2499 = vpop.permute.xlu0 %2498
        %v2503 = vsel %vm1715, %v2495, 0
        %2505 = vmatpush.bf16.msra.mxu0 0
        %2506 = vmatpush.bf16.msra.mxu0 0
        %2507 = vmatpush.bf16.msra.mxu0 0
        %2508 = vmatpush.bf16.msra.mxu0 0
        %2509 = vmatpush.bf16.msra.mxu0 0
        %2510 = vmatpush.bf16.msra.mxu0 0
        %2511 = vmatpush.bf16.msra.mxu0 %v2499
        %2512 = vmatpush.bf16.msra.mxu0 %v2497
        %2513 = vmatmul.bf16.gmra.mxu0 %v2503
        %v2514 = vpop.f32.mrf.mxu0
        %v2515 = vadd.f32 0.0, %v2514
        %v2516 = vpop.f32.mrf.mxu0
        %v2517 = vadd.f32 0.0, %v2516
        %2518 = vdwg.mxu0
        %v2521 = vunpack.c.l.b16 %v2489
        %v2522 = vunpack.c.l.b16 %v2490
        %v2523 = vpack.c.b16 %v2522, %v2521
        %2524 = vrot.lane.b32.xlu0 %v1811, 64
        %v2525 = vpop.permute.xlu0 %2524
        %2526 = vrot.lane.b32.xlu0 %v1812, 64
        %v2527 = vpop.permute.xlu0 %2526
        %v2531 = vsel %vm1715, %v2523, 0
        %2533 = vmatpush.bf16.msra.mxu0 0
        %2534 = vmatpush.bf16.msra.mxu0 0
        %2535 = vmatpush.bf16.msra.mxu0 0
        %2536 = vmatpush.bf16.msra.mxu0 0
        %2537 = vmatpush.bf16.msra.mxu0 0
        %2538 = vmatpush.bf16.msra.mxu0 0
        %2539 = vmatpush.bf16.msra.mxu0 %v2527
        %2540 = vmatpush.bf16.msra.mxu0 %v2525
        %2541 = vmatmul.bf16.gmra.mxu0 %v2531
        %v2542 = vpop.f32.mrf.mxu0
        %v2543 = vadd.f32 0.0, %v2542
        %v2544 = vpop.f32.mrf.mxu0
        %v2545 = vadd.f32 0.0, %v2544
        %2546 = vdwg.mxu0
        %2551 = vrot.lane.b32.xlu0 %v2515, 64
        %v2552 = vpop.permute.xlu0 %2551
        %2553 = vrot.lane.b32.xlu0 %v2517, 64
        %v2554 = vpop.permute.xlu0 %2553
        %2555 = vrot.lane.b32.xlu0 %v2543, 64
        %v2556 = vpop.permute.xlu0 %2555
        %2557 = vrot.lane.b32.xlu0 %v2545, 64
        %v2558 = vpop.permute.xlu0 %2557
        %vm2563 = vcmask 654848
        %2564 = vst.msk [vmem:[#allocation2] sm:$0xff] %vm2563, %v2552
        %2565 = vst.msk [vmem:[#allocation2 + $0x8] sm:$0xff] %vm2563, %v2554
        %2566 = vst.msk [vmem:[#allocation2 + $0x10] sm:$0xff] %vm2563, %v2556
        %2567 = vst.msk [vmem:[#allocation2 + $0x18] sm:$0xff] %vm2563, %v2558
        %2568 = vrot.lane.b32.xlu0 %v1642, 48
        %v2569 = vpop.permute.xlu0 %2568
        %2570 = vrot.lane.b32.xlu0 %v1651, 48
        %v2571 = vpop.permute.xlu0 %2570
        %2572 = vrot.lane.b32.xlu0 %v1652, 48
        %v2573 = vpop.permute.xlu0 %2572
        %v2575 = vsel %vm1653, %v2569, 0
        %v2578 = vsel %vm1653, %v2571, 0
        %v2581 = vsel %vm1653, %v2573, 0
        %2583 = vmatpush.bf16.xpose.msra.mxu0 0
        %2584 = vmatpush.bf16.xpose.msra.mxu0 0
        %2585 = vmatpush.bf16.xpose.msra.mxu0 0
        %2586 = vmatpush.bf16.xpose.msra.mxu0 0
        %2587 = vmatpush.bf16.xpose.msra.mxu0 0
        %2588 = vmatpush.bf16.xpose.msra.mxu0 0
        %2589 = vmatpush.bf16.xpose.msra.mxu0 %v2581
        %2590 = vmatpush.bf16.xpose.msra.mxu0 %v2578
        %2591 = vmatmul.bf16.gmra.mxu0 %v2575
        %v2592 = vpop.f32.mrf.mxu0
        %v2593 = vadd.f32 0.0, %v2592
        %v2594 = vpop.f32.mrf.mxu0
        %v2595 = vadd.f32 0.0, %v2594
        %2596 = vdwg.mxu0
        %2597 = vrot.lane.b32.xlu0 %v1681, 48
        %v2598 = vpop.permute.xlu0 %2597
        %2599 = vrot.lane.b32.xlu0 %v1690, 48
        %v2600 = vpop.permute.xlu0 %2599
        %2601 = vrot.lane.b32.xlu0 %v1691, 48
        %v2602 = vpop.permute.xlu0 %2601
        %v2604 = vsel %vm1653, %v2598, 0
        %v2607 = vsel %vm1653, %v2600, 0
        %v2610 = vsel %vm1653, %v2602, 0
        %2612 = vmatpush.bf16.xpose.msra.mxu0 0
        %2613 = vmatpush.bf16.xpose.msra.mxu0 0
        %2614 = vmatpush.bf16.xpose.msra.mxu0 0
        %2615 = vmatpush.bf16.xpose.msra.mxu0 0
        %2616 = vmatpush.bf16.xpose.msra.mxu0 0
        %2617 = vmatpush.bf16.xpose.msra.mxu0 0
        %2618 = vmatpush.bf16.xpose.msra.mxu0 %v2610
        %2619 = vmatpush.bf16.xpose.msra.mxu0 %v2607
        %2620 = vmatmul.bf16.gmra.mxu0 %v2604
        %v2621 = vpop.f32.mrf.mxu0
        %v2622 = vadd.f32 0.0, %v2621
        %v2623 = vpop.f32.mrf.mxu0
        %v2624 = vadd.f32 0.0, %v2623
        %2625 = vdwg.mxu0
        %v2626 = vsel %vm1715, %v2593, -inf
        %2627 = vmax.xlane.f32.xlu0 %v2626
        %v2628 = vpop.xlane.xlu0 %2627
        %v2629 = vsel %vm1715, %v2595, -inf
        %2630 = vmax.xlane.f32.xlu0 %v2629
        %v2631 = vpop.xlane.xlu0 %2630
        %v2632 = vsel %vm1715, %v2622, -inf
        %2633 = vmax.xlane.f32.xlu0 %v2632
        %v2634 = vpop.xlane.xlu0 %2633
        %v2635 = vsel %vm1715, %v2624, -inf
        %2636 = vmax.xlane.f32.xlu0 %v2635
        %v2637 = vpop.xlane.xlu0 %2636
        %v2638 = vsub.f32 %v2593, %v2628
        %v2639 = vsub.f32 %v2595, %v2631
        %v2640 = vsub.f32 %v2622, %v2634
        %v2641 = vsub.f32 %v2624, %v2637
        %v2642 = vmul.f32 %v2638, 1.442695
        %v2643 = vpow.pop %v2642
        %v2644 = vmul.f32 %v2639, 1.442695
        %v2645 = vpow.pop %v2644
        %v2646 = vmul.f32 %v2640, 1.442695
        %v2647 = vpow.pop %v2646
        %v2648 = vmul.f32 %v2641, 1.442695
        %v2649 = vpow.pop %v2648
        %v2650 = vsel %vm1715, %v2643, 0.0
        %2651 = vadd.xlane.f32.xlu0 %v2650
        %v2652 = vpop.xlane.xlu0 %2651
        %v2653 = vsel %vm1715, %v2645, 0.0
        %2654 = vadd.xlane.f32.xlu0 %v2653
        %v2655 = vpop.xlane.xlu0 %2654
        %v2656 = vsel %vm1715, %v2647, 0.0
        %2657 = vadd.xlane.f32.xlu0 %v2656
        %v2658 = vpop.xlane.xlu0 %2657
        %v2659 = vsel %vm1715, %v2649, 0.0
        %2660 = vadd.xlane.f32.xlu0 %v2659
        %v2661 = vpop.xlane.xlu0 %2660
        %v2662 = vrcp.pop %v2652
        %v2663 = vrcp.pop %v2655
        %v2664 = vrcp.pop %v2658
        %v2665 = vrcp.pop %v2661
        %v2666 = vmul.f32 %v2643, %v2662
        %v2667 = vmul.f32 %v2645, %v2663
        %v2668 = vmul.f32 %v2647, %v2664
        %v2669 = vmul.f32 %v2649, %v2665
        %v2670 = vpack.c.bf16 %v2666, %v2666
        %v2671 = vpack.c.bf16 %v2667, %v2667
        %v2672 = vpack.c.bf16 %v2668, %v2668
        %v2673 = vpack.c.bf16 %v2669, %v2669
        %v2676 = vunpack.c.l.b16 %v2670
        %v2677 = vunpack.c.l.b16 %v2671
        %v2678 = vpack.c.b16 %v2677, %v2676
        %2679 = vrot.lane.b32.xlu0 %v1777, 48
        %v2680 = vpop.permute.xlu0 %2679
        %2681 = vrot.lane.b32.xlu0 %v1778, 48
        %v2682 = vpop.permute.xlu0 %2681
        %v2686 = vsel %vm1715, %v2678, 0
        %2688 = vmatpush.bf16.msra.mxu0 0
        %2689 = vmatpush.bf16.msra.mxu0 0
        %2690 = vmatpush.bf16.msra.mxu0 0
        %2691 = vmatpush.bf16.msra.mxu0 0
        %2692 = vmatpush.bf16.msra.mxu0 0
        %2693 = vmatpush.bf16.msra.mxu0 0
        %2694 = vmatpush.bf16.msra.mxu0 %v2682
        %2695 = vmatpush.bf16.msra.mxu0 %v2680
        %2696 = vmatmul.bf16.gmra.mxu0 %v2686
        %v2697 = vpop.f32.mrf.mxu0
        %v2698 = vadd.f32 0.0, %v2697
        %v2699 = vpop.f32.mrf.mxu0
        %v2700 = vadd.f32 0.0, %v2699
        %2701 = vdwg.mxu0
        %v2704 = vunpack.c.l.b16 %v2672
        %v2705 = vunpack.c.l.b16 %v2673
        %v2706 = vpack.c.b16 %v2705, %v2704
        %2707 = vrot.lane.b32.xlu0 %v1811, 48
        %v2708 = vpop.permute.xlu0 %2707
        %2709 = vrot.lane.b32.xlu0 %v1812, 48
        %v2710 = vpop.permute.xlu0 %2709
        %v2714 = vsel %vm1715, %v2706, 0
        %2716 = vmatpush.bf16.msra.mxu0 0
        %2717 = vmatpush.bf16.msra.mxu0 0
        %2718 = vmatpush.bf16.msra.mxu0 0
        %2719 = vmatpush.bf16.msra.mxu0 0
        %2720 = vmatpush.bf16.msra.mxu0 0
        %2721 = vmatpush.bf16.msra.mxu0 0
        %2722 = vmatpush.bf16.msra.mxu0 %v2710
        %2723 = vmatpush.bf16.msra.mxu0 %v2708
        %2724 = vmatmul.bf16.gmra.mxu0 %v2714
        %v2725 = vpop.f32.mrf.mxu0
        %v2726 = vadd.f32 0.0, %v2725
        %v2727 = vpop.f32.mrf.mxu0
        %v2728 = vadd.f32 0.0, %v2727
        %2729 = vdwg.mxu0
        %2734 = vrot.lane.b32.xlu0 %v2698, 80
        %v2735 = vpop.permute.xlu0 %2734
        %2736 = vrot.lane.b32.xlu0 %v2700, 80
        %v2737 = vpop.permute.xlu0 %2736
        %2738 = vrot.lane.b32.xlu0 %v2726, 80
        %v2739 = vpop.permute.xlu0 %2738
        %2740 = vrot.lane.b32.xlu0 %v2728, 80
        %v2741 = vpop.permute.xlu0 %2740
        %vm2746 = vcmask 786048
        %2747 = vst.msk [vmem:[#allocation2] sm:$0xff] %vm2746, %v2735
        %2748 = vst.msk [vmem:[#allocation2 + $0x8] sm:$0xff] %vm2746, %v2737
        %2749 = vst.msk [vmem:[#allocation2 + $0x10] sm:$0xff] %vm2746, %v2739
        %2750 = vst.msk [vmem:[#allocation2 + $0x18] sm:$0xff] %vm2746, %v2741
        %2751 = vrot.lane.b32.xlu0 %v1642, 32
        %v2752 = vpop.permute.xlu0 %2751
        %2753 = vrot.lane.b32.xlu0 %v1651, 32
        %v2754 = vpop.permute.xlu0 %2753
        %2755 = vrot.lane.b32.xlu0 %v1652, 32
        %v2756 = vpop.permute.xlu0 %2755
        %v2758 = vsel %vm1653, %v2752, 0
        %v2761 = vsel %vm1653, %v2754, 0
        %v2764 = vsel %vm1653, %v2756, 0
        %2766 = vmatpush.bf16.xpose.msra.mxu0 0
        %2767 = vmatpush.bf16.xpose.msra.mxu0 0
        %2768 = vmatpush.bf16.xpose.msra.mxu0 0
        %2769 = vmatpush.bf16.xpose.msra.mxu0 0
        %2770 = vmatpush.bf16.xpose.msra.mxu0 0
        %2771 = vmatpush.bf16.xpose.msra.mxu0 0
        %2772 = vmatpush.bf16.xpose.msra.mxu0 %v2764
        %2773 = vmatpush.bf16.xpose.msra.mxu0 %v2761
        %2774 = vmatmul.bf16.gmra.mxu0 %v2758
        %v2775 = vpop.f32.mrf.mxu0
        %v2776 = vadd.f32 0.0, %v2775
        %v2777 = vpop.f32.mrf.mxu0
        %v2778 = vadd.f32 0.0, %v2777
        %2779 = vdwg.mxu0
        %2780 = vrot.lane.b32.xlu0 %v1681, 32
        %v2781 = vpop.permute.xlu0 %2780
        %2782 = vrot.lane.b32.xlu0 %v1690, 32
        %v2783 = vpop.permute.xlu0 %2782
        %2784 = vrot.lane.b32.xlu0 %v1691, 32
        %v2785 = vpop.permute.xlu0 %2784
        %v2787 = vsel %vm1653, %v2781, 0
        %v2790 = vsel %vm1653, %v2783, 0
        %v2793 = vsel %vm1653, %v2785, 0
        %2795 = vmatpush.bf16.xpose.msra.mxu0 0
        %2796 = vmatpush.bf16.xpose.msra.mxu0 0
        %2797 = vmatpush.bf16.xpose.msra.mxu0 0
        %2798 = vmatpush.bf16.xpose.msra.mxu0 0
        %2799 = vmatpush.bf16.xpose.msra.mxu0 0
        %2800 = vmatpush.bf16.xpose.msra.mxu0 0
        %2801 = vmatpush.bf16.xpose.msra.mxu0 %v2793
        %2802 = vmatpush.bf16.xpose.msra.mxu0 %v2790
        %2803 = vmatmul.bf16.gmra.mxu0 %v2787
        %v2804 = vpop.f32.mrf.mxu0
        %v2805 = vadd.f32 0.0, %v2804
        %v2806 = vpop.f32.mrf.mxu0
        %v2807 = vadd.f32 0.0, %v2806
        %2808 = vdwg.mxu0
        %v2809 = vsel %vm1715, %v2776, -inf
        %2810 = vmax.xlane.f32.xlu0 %v2809
        %v2811 = vpop.xlane.xlu0 %2810
        %v2812 = vsel %vm1715, %v2778, -inf
        %2813 = vmax.xlane.f32.xlu0 %v2812
        %v2814 = vpop.xlane.xlu0 %2813
        %v2815 = vsel %vm1715, %v2805, -inf
        %2816 = vmax.xlane.f32.xlu0 %v2815
        %v2817 = vpop.xlane.xlu0 %2816
        %v2818 = vsel %vm1715, %v2807, -inf
        %2819 = vmax.xlane.f32.xlu0 %v2818
        %v2820 = vpop.xlane.xlu0 %2819
        %v2821 = vsub.f32 %v2776, %v2811
        %v2822 = vsub.f32 %v2778, %v2814
        %v2823 = vsub.f32 %v2805, %v2817
        %v2824 = vsub.f32 %v2807, %v2820
        %v2825 = vmul.f32 %v2821, 1.442695
        %v2826 = vpow.pop %v2825
        %v2827 = vmul.f32 %v2822, 1.442695
        %v2828 = vpow.pop %v2827
        %v2829 = vmul.f32 %v2823, 1.442695
        %v2830 = vpow.pop %v2829
        %v2831 = vmul.f32 %v2824, 1.442695
        %v2832 = vpow.pop %v2831
        %v2833 = vsel %vm1715, %v2826, 0.0
        %2834 = vadd.xlane.f32.xlu0 %v2833
        %v2835 = vpop.xlane.xlu0 %2834
        %v2836 = vsel %vm1715, %v2828, 0.0
        %2837 = vadd.xlane.f32.xlu0 %v2836
        %v2838 = vpop.xlane.xlu0 %2837
        %v2839 = vsel %vm1715, %v2830, 0.0
        %2840 = vadd.xlane.f32.xlu0 %v2839
        %v2841 = vpop.xlane.xlu0 %2840
        %v2842 = vsel %vm1715, %v2832, 0.0
        %2843 = vadd.xlane.f32.xlu0 %v2842
        %v2844 = vpop.xlane.xlu0 %2843
        %v2845 = vrcp.pop %v2835
        %v2846 = vrcp.pop %v2838
        %v2847 = vrcp.pop %v2841
        %v2848 = vrcp.pop %v2844
        %v2849 = vmul.f32 %v2826, %v2845
        %v2850 = vmul.f32 %v2828, %v2846
        %v2851 = vmul.f32 %v2830, %v2847
        %v2852 = vmul.f32 %v2832, %v2848
        %v2853 = vpack.c.bf16 %v2849, %v2849
        %v2854 = vpack.c.bf16 %v2850, %v2850
        %v2855 = vpack.c.bf16 %v2851, %v2851
        %v2856 = vpack.c.bf16 %v2852, %v2852
        %v2859 = vunpack.c.l.b16 %v2853
        %v2860 = vunpack.c.l.b16 %v2854
        %v2861 = vpack.c.b16 %v2860, %v2859
        %2862 = vrot.lane.b32.xlu0 %v1777, 32
        %v2863 = vpop.permute.xlu0 %2862
        %2864 = vrot.lane.b32.xlu0 %v1778, 32
        %v2865 = vpop.permute.xlu0 %2864
        %v2869 = vsel %vm1715, %v2861, 0
        %2871 = vmatpush.bf16.msra.mxu0 0
        %2872 = vmatpush.bf16.msra.mxu0 0
        %2873 = vmatpush.bf16.msra.mxu0 0
        %2874 = vmatpush.bf16.msra.mxu0 0
        %2875 = vmatpush.bf16.msra.mxu0 0
        %2876 = vmatpush.bf16.msra.mxu0 0
        %2877 = vmatpush.bf16.msra.mxu0 %v2865
        %2878 = vmatpush.bf16.msra.mxu0 %v2863
        %2879 = vmatmul.bf16.gmra.mxu0 %v2869
        %v2880 = vpop.f32.mrf.mxu0
        %v2881 = vadd.f32 0.0, %v2880
        %v2882 = vpop.f32.mrf.mxu0
        %v2883 = vadd.f32 0.0, %v2882
        %2884 = vdwg.mxu0
        %v2887 = vunpack.c.l.b16 %v2855
        %v2888 = vunpack.c.l.b16 %v2856
        %v2889 = vpack.c.b16 %v2888, %v2887
        %2890 = vrot.lane.b32.xlu0 %v1811, 32
        %v2891 = vpop.permute.xlu0 %2890
        %2892 = vrot.lane.b32.xlu0 %v1812, 32
        %v2893 = vpop.permute.xlu0 %2892
        %v2897 = vsel %vm1715, %v2889, 0
        %2899 = vmatpush.bf16.msra.mxu0 0
        %2900 = vmatpush.bf16.msra.mxu0 0
        %2901 = vmatpush.bf16.msra.mxu0 0
        %2902 = vmatpush.bf16.msra.mxu0 0
        %2903 = vmatpush.bf16.msra.mxu0 0
        %2904 = vmatpush.bf16.msra.mxu0 0
        %2905 = vmatpush.bf16.msra.mxu0 %v2893
        %2906 = vmatpush.bf16.msra.mxu0 %v2891
        %2907 = vmatmul.bf16.gmra.mxu0 %v2897
        %v2908 = vpop.f32.mrf.mxu0
        %v2909 = vadd.f32 0.0, %v2908
        %v2910 = vpop.f32.mrf.mxu0
        %v2911 = vadd.f32 0.0, %v2910
        %2912 = vdwg.mxu0
        %2917 = vrot.lane.b32.xlu0 %v2881, 96
        %v2918 = vpop.permute.xlu0 %2917
        %2919 = vrot.lane.b32.xlu0 %v2883, 96
        %v2920 = vpop.permute.xlu0 %2919
        %2921 = vrot.lane.b32.xlu0 %v2909, 96
        %v2922 = vpop.permute.xlu0 %2921
        %2923 = vrot.lane.b32.xlu0 %v2911, 96
        %v2924 = vpop.permute.xlu0 %2923
        %vm2929 = vcmask 917248
        %2930 = vst.msk [vmem:[#allocation2] sm:$0xff] %vm2929, %v2918
        %2931 = vst.msk [vmem:[#allocation2 + $0x8] sm:$0xff] %vm2929, %v2920
        %2932 = vst.msk [vmem:[#allocation2 + $0x10] sm:$0xff] %vm2929, %v2922
        %2933 = vst.msk [vmem:[#allocation2 + $0x18] sm:$0xff] %vm2929, %v2924
        %2934 = vrot.lane.b32.xlu0 %v1642, 16
        %v2935 = vpop.permute.xlu0 %2934
        %2936 = vrot.lane.b32.xlu0 %v1651, 16
        %v2937 = vpop.permute.xlu0 %2936
        %2938 = vrot.lane.b32.xlu0 %v1652, 16
        %v2939 = vpop.permute.xlu0 %2938
        %v2941 = vsel %vm1653, %v2935, 0
        %v2944 = vsel %vm1653, %v2937, 0
        %v2947 = vsel %vm1653, %v2939, 0
        %2949 = vmatpush.bf16.xpose.msra.mxu0 0
        %2950 = vmatpush.bf16.xpose.msra.mxu0 0
        %2951 = vmatpush.bf16.xpose.msra.mxu0 0
        %2952 = vmatpush.bf16.xpose.msra.mxu0 0
        %2953 = vmatpush.bf16.xpose.msra.mxu0 0
        %2954 = vmatpush.bf16.xpose.msra.mxu0 0
        %2955 = vmatpush.bf16.xpose.msra.mxu0 %v2947
        %2956 = vmatpush.bf16.xpose.msra.mxu0 %v2944
        %2957 = vmatmul.bf16.gmra.mxu0 %v2941
        %v2958 = vpop.f32.mrf.mxu0
        %v2959 = vadd.f32 0.0, %v2958
        %v2960 = vpop.f32.mrf.mxu0
        %v2961 = vadd.f32 0.0, %v2960
        %2962 = vdwg.mxu0
        %2963 = vrot.lane.b32.xlu0 %v1681, 16
        %v2964 = vpop.permute.xlu0 %2963
        %2965 = vrot.lane.b32.xlu0 %v1690, 16
        %v2966 = vpop.permute.xlu0 %2965
        %2967 = vrot.lane.b32.xlu0 %v1691, 16
        %v2968 = vpop.permute.xlu0 %2967
        %v2970 = vsel %vm1653, %v2964, 0
        %v2973 = vsel %vm1653, %v2966, 0
        %v2976 = vsel %vm1653, %v2968, 0
        %2978 = vmatpush.bf16.xpose.msra.mxu0 0
        %2979 = vmatpush.bf16.xpose.msra.mxu0 0
        %2980 = vmatpush.bf16.xpose.msra.mxu0 0
        %2981 = vmatpush.bf16.xpose.msra.mxu0 0
        %2982 = vmatpush.bf16.xpose.msra.mxu0 0
        %2983 = vmatpush.bf16.xpose.msra.mxu0 0
        %2984 = vmatpush.bf16.xpose.msra.mxu0 %v2976
        %2985 = vmatpush.bf16.xpose.msra.mxu0 %v2973
        %2986 = vmatmul.bf16.gmra.mxu0 %v2970
        %v2987 = vpop.f32.mrf.mxu0
        %v2988 = vadd.f32 0.0, %v2987
        %v2989 = vpop.f32.mrf.mxu0
        %v2990 = vadd.f32 0.0, %v2989
        %2991 = vdwg.mxu0
        %v2992 = vsel %vm1715, %v2959, -inf
        %2993 = vmax.xlane.f32.xlu0 %v2992
        %v2994 = vpop.xlane.xlu0 %2993
        %v2995 = vsel %vm1715, %v2961, -inf
        %2996 = vmax.xlane.f32.xlu0 %v2995
        %v2997 = vpop.xlane.xlu0 %2996
        %v2998 = vsel %vm1715, %v2988, -inf
        %2999 = vmax.xlane.f32.xlu0 %v2998
        %v3000 = vpop.xlane.xlu0 %2999
        %v3001 = vsel %vm1715, %v2990, -inf
        %3002 = vmax.xlane.f32.xlu0 %v3001
        %v3003 = vpop.xlane.xlu0 %3002
        %v3004 = vsub.f32 %v2959, %v2994
        %v3005 = vsub.f32 %v2961, %v2997
        %v3006 = vsub.f32 %v2988, %v3000
        %v3007 = vsub.f32 %v2990, %v3003
        %v3008 = vmul.f32 %v3004, 1.442695
        %v3009 = vpow.pop %v3008
        %v3010 = vmul.f32 %v3005, 1.442695
        %v3011 = vpow.pop %v3010
        %v3012 = vmul.f32 %v3006, 1.442695
        %v3013 = vpow.pop %v3012
        %v3014 = vmul.f32 %v3007, 1.442695
        %v3015 = vpow.pop %v3014
        %v3016 = vsel %vm1715, %v3009, 0.0
        %3017 = vadd.xlane.f32.xlu0 %v3016
        %v3018 = vpop.xlane.xlu0 %3017
        %v3019 = vsel %vm1715, %v3011, 0.0
        %3020 = vadd.xlane.f32.xlu0 %v3019
        %v3021 = vpop.xlane.xlu0 %3020
        %v3022 = vsel %vm1715, %v3013, 0.0
        %3023 = vadd.xlane.f32.xlu0 %v3022
        %v3024 = vpop.xlane.xlu0 %3023
        %v3025 = vsel %vm1715, %v3015, 0.0
        %3026 = vadd.xlane.f32.xlu0 %v3025
        %v3027 = vpop.xlane.xlu0 %3026
        %v3028 = vrcp.pop %v3018
        %v3029 = vrcp.pop %v3021
        %v3030 = vrcp.pop %v3024
        %v3031 = vrcp.pop %v3027
        %v3032 = vmul.f32 %v3009, %v3028
        %v3033 = vmul.f32 %v3011, %v3029
        %v3034 = vmul.f32 %v3013, %v3030
        %v3035 = vmul.f32 %v3015, %v3031
        %v3036 = vpack.c.bf16 %v3032, %v3032
        %v3037 = vpack.c.bf16 %v3033, %v3033
        %v3038 = vpack.c.bf16 %v3034, %v3034
        %v3039 = vpack.c.bf16 %v3035, %v3035
        %v3042 = vunpack.c.l.b16 %v3036
        %v3043 = vunpack.c.l.b16 %v3037
        %v3044 = vpack.c.b16 %v3043, %v3042
        %3045 = vrot.lane.b32.xlu0 %v1777, 16
        %v3046 = vpop.permute.xlu0 %3045
        %3047 = vrot.lane.b32.xlu0 %v1778, 16
        %v3048 = vpop.permute.xlu0 %3047
        %v3052 = vsel %vm1715, %v3044, 0
        %3054 = vmatpush.bf16.msra.mxu0 0
        %3055 = vmatpush.bf16.msra.mxu0 0
        %3056 = vmatpush.bf16.msra.mxu0 0
        %3057 = vmatpush.bf16.msra.mxu0 0
        %3058 = vmatpush.bf16.msra.mxu0 0
        %3059 = vmatpush.bf16.msra.mxu0 0
        %3060 = vmatpush.bf16.msra.mxu0 %v3048
        %3061 = vmatpush.bf16.msra.mxu0 %v3046
        %3062 = vmatmul.bf16.gmra.mxu0 %v3052
        %v3063 = vpop.f32.mrf.mxu0
        %v3064 = vadd.f32 0.0, %v3063
        %v3065 = vpop.f32.mrf.mxu0
        %v3066 = vadd.f32 0.0, %v3065
        %3067 = vdwg.mxu0
        %v3070 = vunpack.c.l.b16 %v3038
        %v3071 = vunpack.c.l.b16 %v3039
        %v3072 = vpack.c.b16 %v3071, %v3070
        %3073 = vrot.lane.b32.xlu0 %v1811, 16
        %v3074 = vpop.permute.xlu0 %3073
        %3075 = vrot.lane.b32.xlu0 %v1812, 16
        %v3076 = vpop.permute.xlu0 %3075
        %v3080 = vsel %vm1715, %v3072, 0
        %3082 = vmatpush.bf16.msra.mxu0 0
        %3083 = vmatpush.bf16.msra.mxu0 0
        %3084 = vmatpush.bf16.msra.mxu0 0
        %3085 = vmatpush.bf16.msra.mxu0 0
        %3086 = vmatpush.bf16.msra.mxu0 0
        %3087 = vmatpush.bf16.msra.mxu0 0
        %3088 = vmatpush.bf16.msra.mxu0 %v3076
        %3089 = vmatpush.bf16.msra.mxu0 %v3074
        %3090 = vmatmul.bf16.gmra.mxu0 %v3080
        %v3091 = vpop.f32.mrf.mxu0
        %v3092 = vadd.f32 0.0, %v3091
        %v3093 = vpop.f32.mrf.mxu0
        %v3094 = vadd.f32 0.0, %v3093
        %3095 = vdwg.mxu0
        %3100 = vrot.lane.b32.xlu0 %v3064, 112
        %v3101 = vpop.permute.xlu0 %3100
        %3102 = vrot.lane.b32.xlu0 %v3066, 112
        %v3103 = vpop.permute.xlu0 %3102
        %3104 = vrot.lane.b32.xlu0 %v3092, 112
        %v3105 = vpop.permute.xlu0 %3104
        %3106 = vrot.lane.b32.xlu0 %v3094, 112
        %v3107 = vpop.permute.xlu0 %3106
        %vm3112 = vcmask 1048448
        %3113 = vst.msk [vmem:[#allocation2] sm:$0xff] %vm3112, %v3101
        %3114 = vst.msk [vmem:[#allocation2 + $0x8] sm:$0xff] %vm3112, %v3103
        %3115 = vst.msk [vmem:[#allocation2 + $0x10] sm:$0xff] %vm3112, %v3105
        %3116 = vst.msk [vmem:[#allocation2 + $0x18] sm:$0xff] %vm3112, %v3107
        %v3117 = vld [vmem:[#allocation2] sm:$0xff]
        %v3118 = vld [vmem:[#allocation2 + $0x8] sm:$0xff]
        %v3119 = vld [vmem:[#allocation2 + $0x10] sm:$0xff]
        %v3120 = vld [vmem:[#allocation2 + $0x18] sm:$0xff]
        %v3121 = vpack.c.bf16 %v3118, %v3117
        %v3122 = vpack.c.bf16 %v3120, %v3119
        %v3123 = vld [vmem:[#allocation14] sm:$0xf]
        %v3124 = vld [vmem:[#allocation14 + $0x4] sm:$0xf]
        %v3125 = vld [vmem:[#allocation14 + $0x8] sm:$0xf]
        %v3126 = vld [vmem:[#allocation14 + $0xc] sm:$0xf]
        %v3127 = vld [vmem:[#allocation14 + $0x10] sm:$0xf]
        %v3128 = vld [vmem:[#allocation14 + $0x14] sm:$0xf]
        %v3129 = vld [vmem:[#allocation14 + $0x18] sm:$0xf]
        %v3130 = vld [vmem:[#allocation14 + $0x1c] sm:$0xf]
        %v3131 = vld [vmem:[#allocation14 + $0x20] sm:$0xf]
        %v3132 = vld [vmem:[#allocation14 + $0x24] sm:$0xf]
        %v3133 = vld [vmem:[#allocation14 + $0x28] sm:$0xf]
        %v3134 = vld [vmem:[#allocation14 + $0x2c] sm:$0xf]
        %v3135 = vld [vmem:[#allocation14 + $0x30] sm:$0xf]
        %v3136 = vld [vmem:[#allocation14 + $0x34] sm:$0xf]
        %v3137 = vld [vmem:[#allocation14 + $0x38] sm:$0xf]
        %v3138 = vld [vmem:[#allocation14 + $0x3c] sm:$0xf]
        %v3139 = vperm.slane %v488, 0
        %v3156 = vunpack.c.l.b16 %v3123
        %v3157 = vunpack.c.l.b16 %v3124
        %v3158 = vunpack.c.l.b16 %v3125
        %v3159 = vunpack.c.l.b16 %v3126
        %v3160 = vunpack.c.l.b16 %v3127
        %v3161 = vunpack.c.l.b16 %v3128
        %v3162 = vunpack.c.l.b16 %v3129
        %v3163 = vunpack.c.l.b16 %v3130
        %v3164 = vunpack.c.l.b16 %v3131
        %v3165 = vunpack.c.l.b16 %v3132
        %v3166 = vunpack.c.l.b16 %v3133
        %v3167 = vunpack.c.l.b16 %v3134
        %v3168 = vunpack.c.l.b16 %v3135
        %v3169 = vunpack.c.l.b16 %v3136
        %v3170 = vunpack.c.l.b16 %v3137
        %v3171 = vunpack.c.l.b16 %v3138
        %v3172 = vpack.c.b16 %v3157, %v3156
        %v3173 = vpack.c.b16 %v3159, %v3158
        %v3174 = vpack.c.b16 %v3161, %v3160
        %v3175 = vpack.c.b16 %v3163, %v3162
        %v3176 = vpack.c.b16 %v3165, %v3164
        %v3177 = vpack.c.b16 %v3167, %v3166
        %v3178 = vpack.c.b16 %v3169, %v3168
        %v3179 = vpack.c.b16 %v3171, %v3170
        %3188 = vmatpush.bf16.msra.mxu0 %v3179
        %3189 = vmatpush.bf16.msra.mxu0 %v3178
        %3190 = vmatpush.bf16.msra.mxu0 %v3177
        %3191 = vmatpush.bf16.msra.mxu0 %v3176
        %3192 = vmatpush.bf16.msra.mxu0 %v3175
        %3193 = vmatpush.bf16.msra.mxu0 %v3174
        %3194 = vmatpush.bf16.msra.mxu0 %v3173
        %3195 = vmatpush.bf16.msra.mxu0 %v3172
        %3196 = vmatmul.bf16.gmra.mxu0 %v3121
        %v3197 = vpop.f32.mrf.mxu0
        %v3198 = vadd.f32 %v3139, %v3197
        %v3199 = vpop.f32.mrf.mxu0
        %v3200 = vadd.f32 %v3139, %v3199
        %3201 = vmatmul.bf16.gmra.mxu0 %v3122
        %v3202 = vpop.f32.mrf.mxu0
        %v3203 = vadd.f32 %v3139, %v3202
        %v3204 = vpop.f32.mrf.mxu0
        %v3205 = vadd.f32 %v3139, %v3204
        %3206 = vdwg.mxu0
        %3207 = vadd.xlane.f32.xlu0 %v3198
        %v3208 = vpop.xlane.xlu0 %3207
        %3209 = vadd.xlane.f32.xlu0 %v3200
        %v3210 = vpop.xlane.xlu0 %3209
        %3211 = vadd.xlane.f32.xlu0 %v3203
        %v3212 = vpop.xlane.xlu0 %3211
        %3213 = vadd.xlane.f32.xlu0 %v3205
        %v3214 = vpop.xlane.xlu0 %3213
        %v3215 = vmul.f32 %v3208, %v981
        %v3216 = vmul.f32 %v3210, %v981
        %v3217 = vmul.f32 %v3212, %v981
        %v3218 = vmul.f32 %v3214, %v981
        %v3219 = vsub.f32 %v3198, %v3215
        %v3220 = vsub.f32 %v3200, %v3216
        %v3221 = vsub.f32 %v3203, %v3217
        %v3222 = vsub.f32 %v3205, %v3218
        %v3223 = vmul.f32 %v3219, %v3219
        %v3224 = vmul.f32 %v3220, %v3220
        %v3225 = vmul.f32 %v3221, %v3221
        %v3226 = vmul.f32 %v3222, %v3222
        %3227 = vadd.xlane.f32.xlu0 %v3223
        %v3228 = vpop.xlane.xlu0 %3227
        %3229 = vadd.xlane.f32.xlu0 %v3224
        %v3230 = vpop.xlane.xlu0 %3229
        %3231 = vadd.xlane.f32.xlu0 %v3225
        %v3232 = vpop.xlane.xlu0 %3231
        %3233 = vadd.xlane.f32.xlu0 %v3226
        %v3234 = vpop.xlane.xlu0 %3233
        %v3235 = vmul.f32 %v3228, %v981
        %v3236 = vmul.f32 %v3230, %v981
        %v3237 = vmul.f32 %v3232, %v981
        %v3238 = vmul.f32 %v3234, %v981
        %v3239 = vadd.f32 %v3235, 1e-05
        %v3240 = vadd.f32 %v3236, 1e-05
        %v3241 = vadd.f32 %v3237, 1e-05
        %v3242 = vadd.f32 %v3238, 1e-05
        %v3243 = vrsqrt.pop %v3239
        %v3244 = vmul.f32 %v3243, %v3239
        %v3245 = vmul.f32 %v3244, %v3243
        %v3246 = vmul.f32 0.5, %v3245
        %v3247 = vsub.f32 1.5, %v3246
        %v3248 = vmul.f32 %v3243, %v3247
        %vm3249 = vweird.f32 %v3239
        %vm3250 = vweird.f32 %v3243
        %vm3251 = vmor %vm3249, %vm3250
        %v3252 = vsel %vm3251, %v3243, %v3248
        %v3253 = vrsqrt.pop %v3240
        %v3254 = vmul.f32 %v3253, %v3240
        %v3255 = vmul.f32 %v3254, %v3253
        %v3256 = vmul.f32 0.5, %v3255
        %v3257 = vsub.f32 1.5, %v3256
        %v3258 = vmul.f32 %v3253, %v3257
        %vm3259 = vweird.f32 %v3240
        %vm3260 = vweird.f32 %v3253
        %vm3261 = vmor %vm3259, %vm3260
        %v3262 = vsel %vm3261, %v3253, %v3258
        %v3263 = vrsqrt.pop %v3241
        %v3264 = vmul.f32 %v3263, %v3241
        %v3265 = vmul.f32 %v3264, %v3263
        %v3266 = vmul.f32 0.5, %v3265
        %v3267 = vsub.f32 1.5, %v3266
        %v3268 = vmul.f32 %v3263, %v3267
        %vm3269 = vweird.f32 %v3241
        %vm3270 = vweird.f32 %v3263
        %vm3271 = vmor %vm3269, %vm3270
        %v3272 = vsel %vm3271, %v3263, %v3268
        %v3273 = vrsqrt.pop %v3242
        %v3274 = vmul.f32 %v3273, %v3242
        %v3275 = vmul.f32 %v3274, %v3273
        %v3276 = vmul.f32 0.5, %v3275
        %v3277 = vsub.f32 1.5, %v3276
        %v3278 = vmul.f32 %v3273, %v3277
        %vm3279 = vweird.f32 %v3242
        %vm3280 = vweird.f32 %v3273
        %vm3281 = vmor %vm3279, %vm3280
        %v3282 = vsel %vm3281, %v3273, %v3278
        %v3283 = vmul.f32 %v3219, %v3252
        %v3284 = vmul.f32 %v3220, %v3262
        %v3285 = vmul.f32 %v3221, %v3272
        %v3286 = vmul.f32 %v3222, %v3282
        %v3287 = vperm.slane %v489, 0
        %v3288 = vmul.f32 %v3283, %v3287
        %v3289 = vmul.f32 %v3284, %v3287
        %v3290 = vmul.f32 %v3285, %v3287
        %v3291 = vmul.f32 %v3286, %v3287
        %v3292 = vperm.slane %v490, 0
        %v3293 = vadd.f32 %v3288, %v3292
        %v3294 = vadd.f32 %v3289, %v3292
        %v3295 = vadd.f32 %v3290, %v3292
        %v3296 = vadd.f32 %v3291, %v3292
        %v3297 = vpack.c.bf16 %v3294, %v3293
        %v3298 = vpack.c.bf16 %v3296, %v3295
        %v3299 = vld [vmem:[#allocation15] sm:$0xff]
        %v3300 = vld [vmem:[#allocation15 + $0x8] sm:$0xff]
        %v3301 = vld [vmem:[#allocation15 + $0x10] sm:$0xff]
        %v3302 = vld [vmem:[#allocation15 + $0x18] sm:$0xff]
        %v3303 = vld [vmem:[#allocation15 + $0x20] sm:$0xff]
        %v3304 = vld [vmem:[#allocation15 + $0x28] sm:$0xff]
        %v3305 = vld [vmem:[#allocation15 + $0x30] sm:$0xff]
        %v3306 = vld [vmem:[#allocation15 + $0x38] sm:$0xff]
        %v3307 = vld [vmem:[#allocation15 + $0x40] sm:$0xff]
        %v3308 = vld [vmem:[#allocation15 + $0x48] sm:$0xff]
        %v3309 = vld [vmem:[#allocation15 + $0x50] sm:$0xff]
        %v3310 = vld [vmem:[#allocation15 + $0x58] sm:$0xff]
        %v3311 = vld [vmem:[#allocation15 + $0x60] sm:$0xff]
        %v3312 = vld [vmem:[#allocation15 + $0x68] sm:$0xff]
        %v3313 = vld [vmem:[#allocation15 + $0x70] sm:$0xff]
        %v3314 = vld [vmem:[#allocation15 + $0x78] sm:$0xff]
        %v3316 = vperm.slane %v479, 0
        %v3317 = vperm.slane %v479, 1
        %v3336 = vunpack.c.l.b16 %v3299
        %v3337 = vunpack.c.h.b16 %v3299
        %v3338 = vunpack.c.l.b16 %v3300
        %v3339 = vunpack.c.h.b16 %v3300
        %v3340 = vunpack.c.l.b16 %v3301
        %v3341 = vunpack.c.h.b16 %v3301
        %v3342 = vunpack.c.l.b16 %v3302
        %v3343 = vunpack.c.h.b16 %v3302
        %v3344 = vunpack.c.l.b16 %v3303
        %v3345 = vunpack.c.h.b16 %v3303
        %v3346 = vunpack.c.l.b16 %v3304
        %v3347 = vunpack.c.h.b16 %v3304
        %v3348 = vunpack.c.l.b16 %v3305
        %v3349 = vunpack.c.h.b16 %v3305
        %v3350 = vunpack.c.l.b16 %v3306
        %v3351 = vunpack.c.h.b16 %v3306
        %v3352 = vunpack.c.l.b16 %v3307
        %v3353 = vunpack.c.h.b16 %v3307
        %v3354 = vunpack.c.l.b16 %v3308
        %v3355 = vunpack.c.h.b16 %v3308
        %v3356 = vunpack.c.l.b16 %v3309
        %v3357 = vunpack.c.h.b16 %v3309
        %v3358 = vunpack.c.l.b16 %v3310
        %v3359 = vunpack.c.h.b16 %v3310
        %v3360 = vunpack.c.l.b16 %v3311
        %v3361 = vunpack.c.h.b16 %v3311
        %v3362 = vunpack.c.l.b16 %v3312
        %v3363 = vunpack.c.h.b16 %v3312
        %v3364 = vunpack.c.l.b16 %v3313
        %v3365 = vunpack.c.h.b16 %v3313
        %v3366 = vunpack.c.l.b16 %v3314
        %v3367 = vunpack.c.h.b16 %v3314
        %v3368 = vpack.c.b16 %v3338, %v3336
        %v3369 = vpack.c.b16 %v3339, %v3337
        %v3370 = vpack.c.b16 %v3342, %v3340
        %v3371 = vpack.c.b16 %v3343, %v3341
        %v3372 = vpack.c.b16 %v3346, %v3344
        %v3373 = vpack.c.b16 %v3347, %v3345
        %v3374 = vpack.c.b16 %v3350, %v3348
        %v3375 = vpack.c.b16 %v3351, %v3349
        %v3376 = vpack.c.b16 %v3354, %v3352
        %v3377 = vpack.c.b16 %v3355, %v3353
        %v3378 = vpack.c.b16 %v3358, %v3356
        %v3379 = vpack.c.b16 %v3359, %v3357
        %v3380 = vpack.c.b16 %v3362, %v3360
        %v3381 = vpack.c.b16 %v3363, %v3361
        %v3382 = vpack.c.b16 %v3366, %v3364
        %v3383 = vpack.c.b16 %v3367, %v3365
        %3400 = vmatpush.bf16.msra.mxu0 %v3382
        %3401 = vmatpush.bf16.msra.mxu0 %v3380
        %3402 = vmatpush.bf16.msra.mxu0 %v3378
        %3403 = vmatpush.bf16.msra.mxu0 %v3376
        %3404 = vmatpush.bf16.msra.mxu0 %v3374
        %3405 = vmatpush.bf16.msra.mxu0 %v3372
        %3406 = vmatpush.bf16.msra.mxu0 %v3370
        %3407 = vmatpush.bf16.msra.mxu0 %v3368
        %3408 = vmatmul.bf16.gmra.mxu0 %v3297
        %v3409 = vpop.f32.mrf.mxu0
        %v3410 = vadd.f32 %v3316, %v3409
        %v3411 = vpop.f32.mrf.mxu0
        %v3412 = vadd.f32 %v3316, %v3411
        %3413 = vmatmul.bf16.gmra.mxu0 %v3298
        %v3414 = vpop.f32.mrf.mxu0
        %v3415 = vadd.f32 %v3316, %v3414
        %v3416 = vpop.f32.mrf.mxu0
        %v3417 = vadd.f32 %v3316, %v3416
        %3418 = vdwg.mxu0
        %3419 = vmatpush.bf16.msra.mxu0 %v3383
        %3420 = vmatpush.bf16.msra.mxu0 %v3381
        %3421 = vmatpush.bf16.msra.mxu0 %v3379
        %3422 = vmatpush.bf16.msra.mxu0 %v3377
        %3423 = vmatpush.bf16.msra.mxu0 %v3375
        %3424 = vmatpush.bf16.msra.mxu0 %v3373
        %3425 = vmatpush.bf16.msra.mxu0 %v3371
        %3426 = vmatpush.bf16.msra.mxu0 %v3369
        %3427 = vmatmul.bf16.gmra.mxu0 %v3297
        %v3428 = vpop.f32.mrf.mxu0
        %v3429 = vadd.f32 %v3317, %v3428
        %v3430 = vpop.f32.mrf.mxu0
        %v3431 = vadd.f32 %v3317, %v3430
        %3432 = vmatmul.bf16.gmra.mxu0 %v3298
        %v3433 = vpop.f32.mrf.mxu0
        %v3434 = vadd.f32 %v3317, %v3433
        %v3435 = vpop.f32.mrf.mxu0
        %v3436 = vadd.f32 %v3317, %v3435
        %3437 = vdwg.mxu0
        %v3439 = vperm.slane %v481, 0
        %v3440 = vperm.slane %v481, 1
        %v3443 = vmul.f32 %v3439, %v3410
        %v3444 = vmul.f32 %v3440, %v3429
        %v3445 = vmul.f32 %v3439, %v3412
        %v3446 = vmul.f32 %v3440, %v3431
        %v3447 = vmul.f32 %v3439, %v3415
        %v3448 = vmul.f32 %v3440, %v3434
        %v3449 = vmul.f32 %v3439, %v3417
        %v3450 = vmul.f32 %v3440, %v3436
        %v3451 = vadd.f32 %v491, %v3443
        %v3452 = vadd.f32 %v492, %v3444
        %v3453 = vadd.f32 %v493, %v3445
        %v3454 = vadd.f32 %v494, %v3446
        %v3455 = vadd.f32 %v495, %v3447
        %v3456 = vadd.f32 %v496, %v3448
        %v3457 = vadd.f32 %v497, %v3449
        %v3458 = vadd.f32 %v498, %v3450
        %3459 = vst [vmem:[%s466] sm:$0xff] %v3451
        %3460 = vst [vmem:[%s466 + $0x8] sm:$0xff] %v3452
        %3461 = vst [vmem:[%s466 + $0x10] sm:$0xff] %v3453
        %3462 = vst [vmem:[%s466 + $0x18] sm:$0xff] %v3454
        %3463 = vst [vmem:[%s466 + $0x20] sm:$0xff] %v3455
        %3464 = vst [vmem:[%s466 + $0x28] sm:$0xff] %v3456
        %3465 = vst [vmem:[%s466 + $0x30] sm:$0xff] %v3457
        %3466 = vst [vmem:[%s466 + $0x38] sm:$0xff] %v3458
        %s3467 = sand.u32 %s217, 1
        %s3468 = scalar_lea.sflag [#allocation5], %s3467
        %s3469 = sand.u32 %s217, 1
        %s3470 = smul.addr %s3469, 64
        %s3471 = scalar_lea.vmem [#allocation17], %s3470
        // Predicated region
        $region85: #{tpu_custom_call.1} parent=51 // pred_check
          %p3472 = pneg %p227
        $region86: #{tpu_custom_call.1} parent=51 // pred_check_branch
          %3474 = sbr.rel (%p3472) target = $region88
        $region87: #{tpu_custom_call.1} parent=51 // pred_region
          %s3475 = smul.u32 2, %s31
          %3477 = vsyncadd %s3468, 0
          %s3478 = smul.addr %s3475, 4
          %s3479 = smul.addr %s3478, 8
          %s3480 = scalar_lea.hbm %s8, %s3479
          %s3481 = sshll.u32 %s3471, 4
          %s3482 = int_to_ptr.vmem [resolvable:$true] %s3481
          %s3483 = sshll.u32 %s3480, 4
          %s3484 = int_to_ptr.hbm [resolvable:$true] %s3483
          %3489 = dma.vmem_to_hbm [thread:$0]  %s3482, 1024, %s3484, %s3468, 256, 256, 16
        $region88: #{tpu_custom_call.1} parent=51 // pred_fallthru
          _
      $region52: #{tpu_custom_call.1} parent=5 // pred_fallthru
        _
      %p3490 = scmp.le.s32.totalorder 2, %s26
      // Predicated region
      $region89: #{tpu_custom_call.1} parent=5 // pred_check
        %p3491 = pneg %p3490
      $region90: #{tpu_custom_call.1} parent=5 // pred_check_branch
        %3493 = sbr.rel (%p3491) target = $region92
      $region91: #{tpu_custom_call.1} parent=5 // pred_region
        %s3494 = ssub.s32 %s26, 2
        // Predicated region
        $region93: #{tpu_custom_call.1} parent=91 // pred_check
          %p3495 = pneg %p233
        $region94: #{tpu_custom_call.1} parent=91 // pred_check_branch
          %3497 = sbr.rel (%p3495) target = $region96
        $region95: #{tpu_custom_call.1} parent=91 // pred_region
          %s3498 = sand.u32 %s218, 1
          %s3499 = scalar_lea.sflag [#allocation5], %s3498
          %s3500 = sand.u32 %s218, 1
          %s3501 = smul.addr %s3500, 64
          %s3502 = scalar_lea.vmem [#allocation17], %s3501
          %3504 = dma.done %s3499, 1024
        $region96: #{tpu_custom_call.1} parent=91 // pred_fallthru
          _
      $region92: #{tpu_custom_call.1} parent=5 // pred_fallthru
        _
    $region6: #{tpu_custom_call.1} parent=1 // loop_footer
      %s30 = sadd.s32 1, %s26
    $region7: #{tpu_custom_call.1} parent=1 // loop_footer_branch
      %25 = sbr.rel target = $region3
    $region8: #{tpu_custom_call.1} parent=1 // loop_exit
      _
    %3505 = vsyncpa [#allocation4], 1
    %s3506 = scalar_lea.sflag [#allocation4], 1
    %3507 = vsyncpa %s3506, 1
    %3508 = vsyncpa [#allocation7], 1
    %s3509 = scalar_lea.sflag [#allocation7], 1
    %3510 = vsyncpa %s3509, 1
    %3511 = vsyncpa [#allocation10], 1
    %3512 = vsyncpa [#allocation13], 1
    %3513 = vsyncpa [#allocation16], 1
    %3514 = vsyncpa [#allocation5], 1
    %s3515 = scalar_lea.sflag [#allocation5], 1
    %3516 = vsyncpa %s3515, 1

</llo_original>
